<compile_context>
chip_gen: v5e
topology: v5e:2x2
jax: 0.10.0
libtpu: 0.0.40
codegen_flags: <defaults>
</compile_context>

<pallas_src>
import jax
import jax.numpy as jnp
from jax import lax
from jax.experimental import pallas as pl
from jax.experimental.pallas import tpu as pltpu

_CP = 8      # channel padding (sublane alignment)
_PAD = 128   # flat spatial zero-padding on each side (lane aligned)


# ---------------------------------------------------------------------------
# kernel
# ---------------------------------------------------------------------------
def _make_kernel(H, W):
  n_lo = H * W
  w_hi = 2 * W
  n_hi = 4 * H * W
  Cp, PAD = _CP, _PAD

  def _lane_mod(pos, m):
    if m & (m - 1) == 0:
      return pos & (m - 1)
    return pos % m

  def _im2col(pad_ref, n, w_dim):
    """(9*Cp, n) im2col slab for a 3x3 / pad=1 conv, read as flat shifted
    windows from a zero-padded scratch (interior starts at lane offset PAD)."""
    pos = lax.broadcasted_iota(jnp.int32, (1, n), 1)
    wpos = _lane_mod(pos, w_dim)
    not_first = wpos > 0              # valid when reading the (w-1) neighbour
    not_last = wpos < (w_dim - 1)     # valid when reading the (w+1) neighbour
    slabs = []
    for dh in (-1, 0, 1):
      for dw in (-1, 0, 1):
        d = dh * w_dim + dw
        slab = pad_ref[:, pl.ds(PAD + d, n)]
        if dw == 1:
          slab = jnp.where(not_last, slab, 0.0)
        elif dw == -1:
          slab = jnp.where(not_first, slab, 0.0)
        slabs.append(slab)
    return jnp.concatenate(slabs, axis=0)

  def _zero_borders(pad_ref, n):
    z = jnp.zeros((Cp, PAD), jnp.float32)
    pad_ref[:, :PAD] = z
    pad_ref[:, pl.ds(PAD + n, PAD)] = z

  def _mm(a, b):
    # bf16 MXU operands, f32 accumulation (per perf review).
    return jnp.dot(a.astype(jnp.bfloat16), b.astype(jnp.bfloat16),
                   preferred_element_type=jnp.float32)

  def kernel(x_ref, w1_ref, b1_ref, w2a_ref, b2a_ref, w2b_ref, b2b_ref,
             w2c_ref, b2c_ref, up_ref, o_ref, pad_lo, pad_hi):
    # Zero only the border strips; interiors are fully overwritten below.
    _zero_borders(pad_lo, n_lo)
    _zero_borders(pad_hi, n_hi)

    # conv1: 3x3, pad=1 on (H, W) -------------------------------------------
    pad_lo[:, pl.ds(PAD, n_lo)] = x_ref[0]
    x1 = _mm(w1_ref[...], _im2col(pad_lo, n_lo, W)) + b1_ref[...]

    # branch conv2[0]: 3x3, pad=1 ---------------------------------------------
    pad_lo[:, pl.ds(PAD, n_lo)] = x1
    y = _mm(w2a_ref[...], _im2col(pad_lo, n_lo, W)) + b2a_ref[...]

    # branch Interpolate: bilinear x2, align_corners=True, as one matmul -----
    y = _mm(y, up_ref[...])                                    # (Cp, n_hi)

    # branch conv2[2]: 3x3, pad=1 on (2H, 2W), then ReLU ----------------------
    pad_hi[:, pl.ds(PAD, n_hi)] = y
    z = _mm(w2b_ref[...], _im2col(pad_hi, n_hi, w_hi)) + b2b_ref[...]
    z = jnp.maximum(z, 0.0)

    # branch conv2[4]: 1x1 -> 1 channel (row-replicated weights broadcast it)
    br = _mm(w2c_ref[...], z) + b2c_ref[...]                   # (Cp, n_hi)

    # residual add (identity upsampled with the same operator) + final ReLU --
    x1_up = _mm(x1, up_ref[...])                               # (Cp, n_hi)
    o_ref[0] = jnp.maximum(x1_up + br, 0.0).astype(o_ref.dtype)

  return kernel


# ---------------------------------------------------------------------------
# wrapper glue (pure JAX, layout plumbing only)
# ---------------------------------------------------------------------------
def _interp_matrix_1d(in_size, out_size):
  """PyTorch bilinear / align_corners=True 1-D interpolation matrix."""
  src = jnp.arange(out_size, dtype=jnp.float32)
  src = src * (in_size - 1) / (out_size - 1) if out_size > 1 else src * 0.0
  i0 = jnp.clip(jnp.floor(src).astype(jnp.int32), 0, in_size - 1)
  i1 = jnp.clip(i0 + 1, 0, in_size - 1)
  frac = src - i0.astype(jnp.float32)
  rows = jnp.arange(out_size)
  mat = jnp.zeros((out_size, in_size), jnp.float32)
  mat = mat.at[rows, i0].add(1.0 - frac)
  mat = mat.at[rows, i1].add(frac)
  return mat


def _conv3x3_matrix(w):
  """OIHW (Cout, Cin, 3, 3) -> (Cp, 9*Cp), tap-major / channel-minor, padded."""
  cout, cin, kh, kw = w.shape
  wt = jnp.transpose(w, (0, 2, 3, 1))                         # (Cout, 3, 3, Cin)
  wt = jnp.pad(wt, ((0, _CP - cout), (0, 0), (0, 0), (0, _CP - cin)))
  return wt.reshape(_CP, kh * kw * _CP).astype(jnp.bfloat16)


def _pad_bias(b):
  return jnp.pad(b, (0, _CP - b.shape[0])).reshape(_CP, 1).astype(jnp.float32)


def custom_ftb_forward(x, w1, b1, w2a, b2a, w2b, b2b, w2c, b2c):
  """CustomFTB forward. x: (N, Cin, H, W) f32 -> (N, mid, 2H, 2W) f32."""
  N, Cin, H, W = x.shape
  mid = w1.shape[0]
  n_lo, n_hi = H * W, 4 * H * W
  assert Cin <= _CP and mid <= _CP

  # flatten spatial onto the lane axis, pad channels to _CP (sublane aligned)
  xf = jnp.pad(x.reshape(N, Cin, n_lo), ((0, 0), (0, _CP - Cin), (0, 0)))

  w1m, w2am, w2bm = _conv3x3_matrix(w1), _conv3x3_matrix(w2a), _conv3x3_matrix(w2b)
  b1v, b2av, b2bv = _pad_bias(b1), _pad_bias(b2a), _pad_bias(b2b)
  # 1x1 conv to one channel: replicate its row so the channel broadcast of the
  # residual add is folded into the same matmul.
  w2cm = jnp.tile(jnp.pad(w2c[:, :, 0, 0], ((0, 0), (0, _CP - mid))), (_CP, 1))
  w2cm = w2cm.astype(jnp.bfloat16)
  b2cv = jnp.full((_CP, 1), b2c[0], jnp.float32)

  # bilinear x2 (align_corners=True) as a dense (H*W, 4*H*W) operator
  up_mat = jnp.kron(_interp_matrix_1d(H, 2 * H),
                    _interp_matrix_1d(W, 2 * W)).T.astype(jnp.bfloat16)

  kernel = _make_kernel(H, W)
  full2d = lambda a: pl.BlockSpec(a.shape, lambda n: (0, 0))

  out = pl.pallas_call(
      kernel,
      out_shape=jax.ShapeDtypeStruct((N, _CP, n_hi), x.dtype),
      grid_spec=pltpu.PrefetchScalarGridSpec(
          num_scalar_prefetch=0,
          grid=(N,),
          in_specs=[
              pl.BlockSpec((1, _CP, n_lo), lambda n: (n, 0, 0)),
              full2d(w1m), full2d(b1v),
              full2d(w2am), full2d(b2av),
              full2d(w2bm), full2d(b2bv),
              full2d(w2cm), full2d(b2cv),
              full2d(up_mat),
          ],
          out_specs=pl.BlockSpec((1, _CP, n_hi), lambda n: (n, 0, 0)),
          scratch_shapes=[
              pltpu.VMEM((_CP, 2 * _PAD + n_lo), jnp.float32),
              pltpu.VMEM((_CP, 2 * _PAD + n_hi), jnp.float32),
          ],
      ),
      compiler_params=pltpu.CompilerParams(dimension_semantics=("parallel",)),
  )(xf, w1m, b1v, w2am, b2av, w2bm, b2bv, w2cm, b2cv, up_mat)

  # drop channel padding, un-flatten the lane-dense spatial axis
  return out[:, :mid, :].reshape(N, mid, 2 * H, 2 * W)


# ---------------------------------------------------------------------------
# pure-JAX reference (f32) for the same reconciled forward pass
# ---------------------------------------------------------------------------
def _reference(x, w1, b1, w2a, b2a, w2b, b2b, w2c, b2c):
  def conv(v, w, b, pad):
    o = lax.conv_general_dilated(
        v, w, (1, 1), [(pad, pad), (pad, pad)],
        dimension_numbers=("NCHW", "OIHW", "NCHW"))
    return o + b[None, :, None, None]

  def up2(v):   # bilinear x2, align_corners=True (PyTorch semantics)
    def interp(v, axis):
      size = v.shape[axis]
      out = 2 * size
      src = jnp.arange(out, dtype=jnp.float32) * (size - 1) / (out - 1)
      i0 = jnp.clip(jnp.floor(src).astype(jnp.int32), 0, size - 1)
      i1 = jnp.clip(i0 + 1, 0, size - 1)
      f = src - i0.astype(jnp.float32)
      shape = [1] * v.ndim
      shape[axis] = out
      f = f.reshape(shape)
      return jnp.take(v, i0, axis=axis) * (1.0 - f) + jnp.take(v, i1, axis=axis) * f
    return interp(interp(v, 2), 3)

  x1 = conv(x, w1, b1, 1)
  y = conv(x1, w2a, b2a, 1)
  y = up2(y)
  y = jnp.maximum(conv(y, w2b, b2b, 1), 0.0)
  br = conv(y, w2c, b2c, 0)                  # (N, 1, 2H, 2W) broadcasts over channels
  return jnp.maximum(up2(x1) + br, 0.0)


if __name__ == "__main__":
  # CustomFTB(inchannels=4): mid_channels = 2; input (N=2, 4, 16, 16).
  N, Cin, H, W = 2, 4, 16, 16
  mid = Cin // 2

  key = jax.random.PRNGKey(0)
  kx, k1, k2, k3, k4, kb = jax.random.split(key, 6)
  x = jax.random.normal(kx, (N, Cin, H, W), jnp.float32)
  w1 = 0.05 * jax.random.normal(k1, (mid, Cin, 3, 3), jnp.float32)
  w2a = 0.05 * jax.random.normal(k2, (mid, mid, 3, 3), jnp.float32)
  w2b = 0.05 * jax.random.normal(k3, (mid, mid, 3, 3), jnp.float32)
  w2c = 0.05 * jax.random.normal(k4, (1, mid, 1, 1), jnp.float32)
  biases = 0.05 * jax.random.normal(kb, (3 * mid + 1,), jnp.float32)
  b1, b2a, b2b, b2c = (biases[:mid], biases[mid:2 * mid],
                       biases[2 * mid:3 * mid], biases[3 * mid:])

  out = jax.block_until_ready(
      custom_ftb_forward(x, w1, b1, w2a, b2a, w2b, b2b, w2c, b2c))
  ref = _reference(x, w1, b1, w2a, b2a, w2b, b2b, w2c, b2c)

  assert out.shape == (N, mid, 2 * H, 2 * W), out.shape
  max_err = float(jnp.max(jnp.abs(out - ref)))
  # bf16 MXU operands (per perf review) -> tolerance looser than pure f32.
  assert jnp.allclose(out, ref, atol=2e-2, rtol=2e-2), max_err
  print("KERNEL_OK")
</pallas_src>

<mosaic_0001>
module attributes {stable_mosaic.version = 11 : i64} {
  func.func @kernel(%arg0: i32, %arg1: memref<1x8x256xf32, #tpu.memory_space<vmem>>, %arg2: memref<8x72xbf16, #tpu.memory_space<vmem>>, %arg3: memref<8x1xf32, #tpu.memory_space<vmem>>, %arg4: memref<8x72xbf16, #tpu.memory_space<vmem>>, %arg5: memref<8x1xf32, #tpu.memory_space<vmem>>, %arg6: memref<8x72xbf16, #tpu.memory_space<vmem>>, %arg7: memref<8x1xf32, #tpu.memory_space<vmem>>, %arg8: memref<8x8xbf16, #tpu.memory_space<vmem>>, %arg9: memref<8x1xf32, #tpu.memory_space<vmem>>, %arg10: memref<256x1024xbf16, #tpu.memory_space<vmem>>, %arg11: memref<1x8x1024xf32, #tpu.memory_space<vmem>>, %arg12: memref<8x512xf32, #tpu.memory_space<vmem>>, %arg13: memref<8x1280xf32, #tpu.memory_space<vmem>>) attributes {dimension_semantics = [#tpu.dimension_semantics<parallel>], iteration_bounds = array<i64: 2>, scalar_prefetch = 0 : i64, scratch_operands = 2 : i64, tpu.core_type = #tpu.core_type<tc>, window_params = [{transform_indices = @transform_0, window_bounds = array<i64: 1, 8, 256>}, {pipeline_mode = #tpu.pipeline_mode<synchronous>, transform_indices = @transform_1, window_bounds = array<i64: 8, 72>}, {pipeline_mode = #tpu.pipeline_mode<synchronous>, transform_indices = @transform_2, window_bounds = array<i64: 8, 1>}, {pipeline_mode = #tpu.pipeline_mode<synchronous>, transform_indices = @transform_3, window_bounds = array<i64: 8, 72>}, {pipeline_mode = #tpu.pipeline_mode<synchronous>, transform_indices = @transform_4, window_bounds = array<i64: 8, 1>}, {pipeline_mode = #tpu.pipeline_mode<synchronous>, transform_indices = @transform_5, window_bounds = array<i64: 8, 72>}, {pipeline_mode = #tpu.pipeline_mode<synchronous>, transform_indices = @transform_6, window_bounds = array<i64: 8, 1>}, {pipeline_mode = #tpu.pipeline_mode<synchronous>, transform_indices = @transform_7, window_bounds = array<i64: 8, 8>}, {pipeline_mode = #tpu.pipeline_mode<synchronous>, transform_indices = @transform_8, window_bounds = array<i64: 8, 1>}, {pipeline_mode = #tpu.pipeline_mode<synchronous>, transform_indices = @transform_9, window_bounds = array<i64: 256, 1024>}, {transform_indices = @transform_10, window_bounds = array<i64: 1, 8, 1024>}]} {
    %cst = arith.constant 0.000000e+00 : f32
    %0 = vector.broadcast %cst : f32 to vector<8x128xf32>
    %c0 = arith.constant 0 : index
    %c0_0 = arith.constant 0 : index
    %1 = vector.load %arg12[%c0, %c0_0] : memref<8x512xf32, #tpu.memory_space<vmem>>, vector<8x128xf32>
    tpu.vector_store %arg12[%c0, %c0_0], %0 {strides = array<i32>} : memref<8x512xf32, #tpu.memory_space<vmem>>, vector<8x128xf32>,
    %c0_1 = arith.constant 0 : index
    %c384 = arith.constant 384 : index
    %2 = vector.load %arg12[%c0_1, %c384] : memref<8x512xf32, #tpu.memory_space<vmem>>, vector<8x128xf32>
    tpu.vector_store %arg12[%c0_1, %c384], %0 {strides = array<i32>} : memref<8x512xf32, #tpu.memory_space<vmem>>, vector<8x128xf32>,
    %cst_2 = arith.constant 0.000000e+00 : f32
    %3 = vector.broadcast %cst_2 : f32 to vector<8x128xf32>
    %c0_3 = arith.constant 0 : index
    %c0_4 = arith.constant 0 : index
    %4 = vector.load %arg13[%c0_3, %c0_4] : memref<8x1280xf32, #tpu.memory_space<vmem>>, vector<8x128xf32>
    tpu.vector_store %arg13[%c0_3, %c0_4], %3 {strides = array<i32>} : memref<8x1280xf32, #tpu.memory_space<vmem>>, vector<8x128xf32>,
    %c0_5 = arith.constant 0 : index
    %c1152 = arith.constant 1152 : index
    %5 = vector.load %arg13[%c0_5, %c1152] : memref<8x1280xf32, #tpu.memory_space<vmem>>, vector<8x128xf32>
    tpu.vector_store %arg13[%c0_5, %c1152], %3 {strides = array<i32>} : memref<8x1280xf32, #tpu.memory_space<vmem>>, vector<8x128xf32>,
    %c0_6 = arith.constant 0 : index
    %c0_7 = arith.constant 0 : index
    %c0_8 = arith.constant 0 : index
    %6 = vector.load %arg1[%c0_6, %c0_7, %c0_8] : memref<1x8x256xf32, #tpu.memory_space<vmem>>, vector<1x8x256xf32>
    %7 = vector.shape_cast %6 : vector<1x8x256xf32> to vector<8x256xf32>
    %c0_9 = arith.constant 0 : index
    %c128 = arith.constant 128 : index
    %8 = vector.load %arg12[%c0_9, %c128] : memref<8x512xf32, #tpu.memory_space<vmem>>, vector<8x256xf32>
    tpu.vector_store %arg12[%c0_9, %c128], %7 {strides = array<i32>} : memref<8x512xf32, #tpu.memory_space<vmem>>, vector<8x256xf32>,
    %c0_10 = arith.constant 0 : index
    %c0_11 = arith.constant 0 : index
    %9 = vector.load %arg2[%c0_10, %c0_11] : memref<8x72xbf16, #tpu.memory_space<vmem>>, vector<8x72xbf16>
    %10 = tpu.iota {dimensions = array<i32: 1>} : vector<1x256xi32>
    %c15_i32 = arith.constant 15 : i32
    %11 = vector.broadcast %c15_i32 : i32 to vector<1x256xi32>
    %12 = arith.andi %10, %11 : vector<1x256xi32>
    %c0_i32 = arith.constant 0 : i32
    %13 = vector.broadcast %c0_i32 : i32 to vector<1x256xi32>
    %14 = arith.cmpi sgt, %12, %13 : vector<1x256xi32>
    %c15_i32_12 = arith.constant 15 : i32
    %15 = vector.broadcast %c15_i32_12 : i32 to vector<1x256xi32>
    %16 = arith.cmpi slt, %12, %15 : vector<1x256xi32>
    %c0_13 = arith.constant 0 : index
    %c111 = arith.constant 111 : index
    %17 = vector.load %arg12[%c0_13, %c111] : memref<8x512xf32, #tpu.memory_space<vmem>>, vector<8x256xf32>
    %cst_14 = arith.constant 0.000000e+00 : f32
    %18 = vector.shape_cast %14 : vector<1x256xi1> to vector<1x256xi1>
    %19 = vector.broadcast %18 : vector<1x256xi1> to vector<8x256xi1>
    %20 = vector.broadcast %cst_14 : f32 to vector<8x256xf32>
    %21 = arith.select %19, %17, %20 : vector<8x256xi1>, vector<8x256xf32>
    %c0_15 = arith.constant 0 : index
    %c112 = arith.constant 112 : index
    %22 = vector.load %arg12[%c0_15, %c112] : memref<8x512xf32, #tpu.memory_space<vmem>>, vector<8x256xf32>
    %c0_16 = arith.constant 0 : index
    %c113 = arith.constant 113 : index
    %23 = vector.load %arg12[%c0_16, %c113] : memref<8x512xf32, #tpu.memory_space<vmem>>, vector<8x256xf32>
    %cst_17 = arith.constant 0.000000e+00 : f32
    %24 = vector.shape_cast %16 : vector<1x256xi1> to vector<1x256xi1>
    %25 = vector.broadcast %24 : vector<1x256xi1> to vector<8x256xi1>
    %26 = vector.broadcast %cst_17 : f32 to vector<8x256xf32>
    %27 = arith.select %25, %23, %26 : vector<8x256xi1>, vector<8x256xf32>
    %c0_18 = arith.constant 0 : index
    %c127 = arith.constant 127 : index
    %28 = vector.load %arg12[%c0_18, %c127] : memref<8x512xf32, #tpu.memory_space<vmem>>, vector<8x256xf32>
    %cst_19 = arith.constant 0.000000e+00 : f32
    %29 = vector.shape_cast %14 : vector<1x256xi1> to vector<1x256xi1>
    %30 = vector.broadcast %29 : vector<1x256xi1> to vector<8x256xi1>
    %31 = vector.broadcast %cst_19 : f32 to vector<8x256xf32>
    %32 = arith.select %30, %28, %31 : vector<8x256xi1>, vector<8x256xf32>
    %c0_20 = arith.constant 0 : index
    %c128_21 = arith.constant 128 : index
    %33 = vector.load %arg12[%c0_20, %c128_21] : memref<8x512xf32, #tpu.memory_space<vmem>>, vector<8x256xf32>
    %c0_22 = arith.constant 0 : index
    %c129 = arith.constant 129 : index
    %34 = vector.load %arg12[%c0_22, %c129] : memref<8x512xf32, #tpu.memory_space<vmem>>, vector<8x256xf32>
    %cst_23 = arith.constant 0.000000e+00 : f32
    %35 = vector.shape_cast %16 : vector<1x256xi1> to vector<1x256xi1>
    %36 = vector.broadcast %35 : vector<1x256xi1> to vector<8x256xi1>
    %37 = vector.broadcast %cst_23 : f32 to vector<8x256xf32>
    %38 = arith.select %36, %34, %37 : vector<8x256xi1>, vector<8x256xf32>
    %c0_24 = arith.constant 0 : index
    %c143 = arith.constant 143 : index
    %39 = vector.load %arg12[%c0_24, %c143] : memref<8x512xf32, #tpu.memory_space<vmem>>, vector<8x256xf32>
    %cst_25 = arith.constant 0.000000e+00 : f32
    %40 = vector.shape_cast %14 : vector<1x256xi1> to vector<1x256xi1>
    %41 = vector.broadcast %40 : vector<1x256xi1> to vector<8x256xi1>
    %42 = vector.broadcast %cst_25 : f32 to vector<8x256xf32>
    %43 = arith.select %41, %39, %42 : vector<8x256xi1>, vector<8x256xf32>
    %c0_26 = arith.constant 0 : index
    %c144 = arith.constant 144 : index
    %44 = vector.load %arg12[%c0_26, %c144] : memref<8x512xf32, #tpu.memory_space<vmem>>, vector<8x256xf32>
    %c0_27 = arith.constant 0 : index
    %c145 = arith.constant 145 : index
    %45 = vector.load %arg12[%c0_27, %c145] : memref<8x512xf32, #tpu.memory_space<vmem>>, vector<8x256xf32>
    %cst_28 = arith.constant 0.000000e+00 : f32
    %46 = vector.shape_cast %16 : vector<1x256xi1> to vector<1x256xi1>
    %47 = vector.broadcast %46 : vector<1x256xi1> to vector<8x256xi1>
    %48 = vector.broadcast %cst_28 : f32 to vector<8x256xf32>
    %49 = arith.select %47, %45, %48 : vector<8x256xi1>, vector<8x256xf32>
    %50 = tpu.concatenate %21, %22, %27, %32, %33, %38, %43, %44, %49 in 0 : vector<8x256xf32>, vector<8x256xf32>, vector<8x256xf32>, vector<8x256xf32>, vector<8x256xf32>, vector<8x256xf32>, vector<8x256xf32>, vector<8x256xf32>, vector<8x256xf32> -> vector<72x256xf32>
    %51 = arith.truncf %50 : vector<72x256xf32> to vector<72x256xbf16>
    %cst_29 = arith.constant dense<0.000000e+00> : vector<8x256xf32>
    %52 = tpu.matmul %9, %51, %cst_29 {dimension_numbers = #tpu.dot_dimension_numbers<[1], [0], [0], [1], [0, 0, 1, 1], [], []>} : vector<8x72xbf16>, vector<72x256xbf16>, vector<8x256xf32> -> vector<8x256xf32>
    %c0_30 = arith.constant 0 : index
    %c0_31 = arith.constant 0 : index
    %53 = vector.load %arg3[%c0_30, %c0_31] : memref<8x1xf32, #tpu.memory_space<vmem>>, vector<8x1xf32>
    %54 = vector.broadcast %53 : vector<8x1xf32> to vector<8x256xf32>
    %55 = arith.addf %52, %54 : vector<8x256xf32>
    %c0_32 = arith.constant 0 : index
    %c128_33 = arith.constant 128 : index
    %56 = vector.load %arg12[%c0_32, %c128_33] : memref<8x512xf32, #tpu.memory_space<vmem>>, vector<8x256xf32>
    tpu.vector_store %arg12[%c0_32, %c128_33], %55 {strides = array<i32>} : memref<8x512xf32, #tpu.memory_space<vmem>>, vector<8x256xf32>,
    %c0_34 = arith.constant 0 : index
    %c0_35 = arith.constant 0 : index
    %57 = vector.load %arg4[%c0_34, %c0_35] : memref<8x72xbf16, #tpu.memory_space<vmem>>, vector<8x72xbf16>
    %58 = tpu.iota {dimensions = array<i32: 1>} : vector<1x256xi32>
    %c15_i32_36 = arith.constant 15 : i32
    %59 = vector.broadcast %c15_i32_36 : i32 to vector<1x256xi32>
    %60 = arith.andi %58, %59 : vector<1x256xi32>
    %c0_i32_37 = arith.constant 0 : i32
    %61 = vector.broadcast %c0_i32_37 : i32 to vector<1x256xi32>
    %62 = arith.cmpi sgt, %60, %61 : vector<1x256xi32>
    %c15_i32_38 = arith.constant 15 : i32
    %63 = vector.broadcast %c15_i32_38 : i32 to vector<1x256xi32>
    %64 = arith.cmpi slt, %60, %63 : vector<1x256xi32>
    %c0_39 = arith.constant 0 : index
    %c111_40 = arith.constant 111 : index
    %65 = vector.load %arg12[%c0_39, %c111_40] : memref<8x512xf32, #tpu.memory_space<vmem>>, vector<8x256xf32>
    %cst_41 = arith.constant 0.000000e+00 : f32
    %66 = vector.shape_cast %62 : vector<1x256xi1> to vector<1x256xi1>
    %67 = vector.broadcast %66 : vector<1x256xi1> to vector<8x256xi1>
    %68 = vector.broadcast %cst_41 : f32 to vector<8x256xf32>
    %69 = arith.select %67, %65, %68 : vector<8x256xi1>, vector<8x256xf32>
    %c0_42 = arith.constant 0 : index
    %c112_43 = arith.constant 112 : index
    %70 = vector.load %arg12[%c0_42, %c112_43] : memref<8x512xf32, #tpu.memory_space<vmem>>, vector<8x256xf32>
    %c0_44 = arith.constant 0 : index
    %c113_45 = arith.constant 113 : index
    %71 = vector.load %arg12[%c0_44, %c113_45] : memref<8x512xf32, #tpu.memory_space<vmem>>, vector<8x256xf32>
    %cst_46 = arith.constant 0.000000e+00 : f32
    %72 = vector.shape_cast %64 : vector<1x256xi1> to vector<1x256xi1>
    %73 = vector.broadcast %72 : vector<1x256xi1> to vector<8x256xi1>
    %74 = vector.broadcast %cst_46 : f32 to vector<8x256xf32>
    %75 = arith.select %73, %71, %74 : vector<8x256xi1>, vector<8x256xf32>
    %c0_47 = arith.constant 0 : index
    %c127_48 = arith.constant 127 : index
    %76 = vector.load %arg12[%c0_47, %c127_48] : memref<8x512xf32, #tpu.memory_space<vmem>>, vector<8x256xf32>
    %cst_49 = arith.constant 0.000000e+00 : f32
    %77 = vector.shape_cast %62 : vector<1x256xi1> to vector<1x256xi1>
    %78 = vector.broadcast %77 : vector<1x256xi1> to vector<8x256xi1>
    %79 = vector.broadcast %cst_49 : f32 to vector<8x256xf32>
    %80 = arith.select %78, %76, %79 : vector<8x256xi1>, vector<8x256xf32>
    %c0_50 = arith.constant 0 : index
    %c128_51 = arith.constant 128 : index
    %81 = vector.load %arg12[%c0_50, %c128_51] : memref<8x512xf32, #tpu.memory_space<vmem>>, vector<8x256xf32>
    %c0_52 = arith.constant 0 : index
    %c129_53 = arith.constant 129 : index
    %82 = vector.load %arg12[%c0_52, %c129_53] : memref<8x512xf32, #tpu.memory_space<vmem>>, vector<8x256xf32>
    %cst_54 = arith.constant 0.000000e+00 : f32
    %83 = vector.shape_cast %64 : vector<1x256xi1> to vector<1x256xi1>
    %84 = vector.broadcast %83 : vector<1x256xi1> to vector<8x256xi1>
    %85 = vector.broadcast %cst_54 : f32 to vector<8x256xf32>
    %86 = arith.select %84, %82, %85 : vector<8x256xi1>, vector<8x256xf32>
    %c0_55 = arith.constant 0 : index
    %c143_56 = arith.constant 143 : index
    %87 = vector.load %arg12[%c0_55, %c143_56] : memref<8x512xf32, #tpu.memory_space<vmem>>, vector<8x256xf32>
    %cst_57 = arith.constant 0.000000e+00 : f32
    %88 = vector.shape_cast %62 : vector<1x256xi1> to vector<1x256xi1>
    %89 = vector.broadcast %88 : vector<1x256xi1> to vector<8x256xi1>
    %90 = vector.broadcast %cst_57 : f32 to vector<8x256xf32>
    %91 = arith.select %89, %87, %90 : vector<8x256xi1>, vector<8x256xf32>
    %c0_58 = arith.constant 0 : index
    %c144_59 = arith.constant 144 : index
    %92 = vector.load %arg12[%c0_58, %c144_59] : memref<8x512xf32, #tpu.memory_space<vmem>>, vector<8x256xf32>
    %c0_60 = arith.constant 0 : index
    %c145_61 = arith.constant 145 : index
    %93 = vector.load %arg12[%c0_60, %c145_61] : memref<8x512xf32, #tpu.memory_space<vmem>>, vector<8x256xf32>
    %cst_62 = arith.constant 0.000000e+00 : f32
    %94 = vector.shape_cast %64 : vector<1x256xi1> to vector<1x256xi1>
    %95 = vector.broadcast %94 : vector<1x256xi1> to vector<8x256xi1>
    %96 = vector.broadcast %cst_62 : f32 to vector<8x256xf32>
    %97 = arith.select %95, %93, %96 : vector<8x256xi1>, vector<8x256xf32>
    %98 = tpu.concatenate %69, %70, %75, %80, %81, %86, %91, %92, %97 in 0 : vector<8x256xf32>, vector<8x256xf32>, vector<8x256xf32>, vector<8x256xf32>, vector<8x256xf32>, vector<8x256xf32>, vector<8x256xf32>, vector<8x256xf32>, vector<8x256xf32> -> vector<72x256xf32>
    %99 = arith.truncf %98 : vector<72x256xf32> to vector<72x256xbf16>
    %cst_63 = arith.constant dense<0.000000e+00> : vector<8x256xf32>
    %100 = tpu.matmul %57, %99, %cst_63 {dimension_numbers = #tpu.dot_dimension_numbers<[1], [0], [0], [1], [0, 0, 1, 1], [], []>} : vector<8x72xbf16>, vector<72x256xbf16>, vector<8x256xf32> -> vector<8x256xf32>
    %c0_64 = arith.constant 0 : index
    %c0_65 = arith.constant 0 : index
    %101 = vector.load %arg5[%c0_64, %c0_65] : memref<8x1xf32, #tpu.memory_space<vmem>>, vector<8x1xf32>
    %102 = vector.broadcast %101 : vector<8x1xf32> to vector<8x256xf32>
    %103 = arith.addf %100, %102 : vector<8x256xf32>
    %c0_66 = arith.constant 0 : index
    %c0_67 = arith.constant 0 : index
    %104 = vector.load %arg10[%c0_66, %c0_67] : memref<256x1024xbf16, #tpu.memory_space<vmem>>, vector<256x1024xbf16>
    %105 = arith.truncf %103 : vector<8x256xf32> to vector<8x256xbf16>
    %cst_68 = arith.constant dense<0.000000e+00> : vector<8x1024xf32>
    %106 = tpu.matmul %105, %104, %cst_68 {dimension_numbers = #tpu.dot_dimension_numbers<[1], [0], [0], [1], [0, 0, 1, 1], [], []>} : vector<8x256xbf16>, vector<256x1024xbf16>, vector<8x1024xf32> -> vector<8x1024xf32>
    %c0_69 = arith.constant 0 : index
    %c128_70 = arith.constant 128 : index
    %107 = vector.load %arg13[%c0_69, %c128_70] : memref<8x1280xf32, #tpu.memory_space<vmem>>, vector<8x1024xf32>
    tpu.vector_store %arg13[%c0_69, %c128_70], %106 {strides = array<i32>} : memref<8x1280xf32, #tpu.memory_space<vmem>>, vector<8x1024xf32>,
    %c0_71 = arith.constant 0 : index
    %c0_72 = arith.constant 0 : index
    %108 = vector.load %arg6[%c0_71, %c0_72] : memref<8x72xbf16, #tpu.memory_space<vmem>>, vector<8x72xbf16>
    %109 = tpu.iota {dimensions = array<i32: 1>} : vector<1x1024xi32>
    %c31_i32 = arith.constant 31 : i32
    %110 = vector.broadcast %c31_i32 : i32 to vector<1x1024xi32>
    %111 = arith.andi %109, %110 : vector<1x1024xi32>
    %c0_i32_73 = arith.constant 0 : i32
    %112 = vector.broadcast %c0_i32_73 : i32 to vector<1x1024xi32>
    %113 = arith.cmpi sgt, %111, %112 : vector<1x1024xi32>
    %c31_i32_74 = arith.constant 31 : i32
    %114 = vector.broadcast %c31_i32_74 : i32 to vector<1x1024xi32>
    %115 = arith.cmpi slt, %111, %114 : vector<1x1024xi32>
    %c0_75 = arith.constant 0 : index
    %c95 = arith.constant 95 : index
    %116 = vector.load %arg13[%c0_75, %c95] : memref<8x1280xf32, #tpu.memory_space<vmem>>, vector<8x1024xf32>
    %cst_76 = arith.constant 0.000000e+00 : f32
    %117 = vector.shape_cast %113 : vector<1x1024xi1> to vector<1x1024xi1>
    %118 = vector.broadcast %117 : vector<1x1024xi1> to vector<8x1024xi1>
    %119 = vector.broadcast %cst_76 : f32 to vector<8x1024xf32>
    %120 = arith.select %118, %116, %119 : vector<8x1024xi1>, vector<8x1024xf32>
    %c0_77 = arith.constant 0 : index
    %c96 = arith.constant 96 : index
    %121 = vector.load %arg13[%c0_77, %c96] : memref<8x1280xf32, #tpu.memory_space<vmem>>, vector<8x1024xf32>
    %c0_78 = arith.constant 0 : index
    %c97 = arith.constant 97 : index
    %122 = vector.load %arg13[%c0_78, %c97] : memref<8x1280xf32, #tpu.memory_space<vmem>>, vector<8x1024xf32>
    %cst_79 = arith.constant 0.000000e+00 : f32
    %123 = vector.shape_cast %115 : vector<1x1024xi1> to vector<1x1024xi1>
    %124 = vector.broadcast %123 : vector<1x1024xi1> to vector<8x1024xi1>
    %125 = vector.broadcast %cst_79 : f32 to vector<8x1024xf32>
    %126 = arith.select %124, %122, %125 : vector<8x1024xi1>, vector<8x1024xf32>
    %c0_80 = arith.constant 0 : index
    %c127_81 = arith.constant 127 : index
    %127 = vector.load %arg13[%c0_80, %c127_81] : memref<8x1280xf32, #tpu.memory_space<vmem>>, vector<8x1024xf32>
    %cst_82 = arith.constant 0.000000e+00 : f32
    %128 = vector.shape_cast %113 : vector<1x1024xi1> to vector<1x1024xi1>
    %129 = vector.broadcast %128 : vector<1x1024xi1> to vector<8x1024xi1>
    %130 = vector.broadcast %cst_82 : f32 to vector<8x1024xf32>
    %131 = arith.select %129, %127, %130 : vector<8x1024xi1>, vector<8x1024xf32>
    %c0_83 = arith.constant 0 : index
    %c128_84 = arith.constant 128 : index
    %132 = vector.load %arg13[%c0_83, %c128_84] : memref<8x1280xf32, #tpu.memory_space<vmem>>, vector<8x1024xf32>
    %c0_85 = arith.constant 0 : index
    %c129_86 = arith.constant 129 : index
    %133 = vector.load %arg13[%c0_85, %c129_86] : memref<8x1280xf32, #tpu.memory_space<vmem>>, vector<8x1024xf32>
    %cst_87 = arith.constant 0.000000e+00 : f32
    %134 = vector.shape_cast %115 : vector<1x1024xi1> to vector<1x1024xi1>
    %135 = vector.broadcast %134 : vector<1x1024xi1> to vector<8x1024xi1>
    %136 = vector.broadcast %cst_87 : f32 to vector<8x1024xf32>
    %137 = arith.select %135, %133, %136 : vector<8x1024xi1>, vector<8x1024xf32>
    %c0_88 = arith.constant 0 : index
    %c159 = arith.constant 159 : index
    %138 = vector.load %arg13[%c0_88, %c159] : memref<8x1280xf32, #tpu.memory_space<vmem>>, vector<8x1024xf32>
    %cst_89 = arith.constant 0.000000e+00 : f32
    %139 = vector.shape_cast %113 : vector<1x1024xi1> to vector<1x1024xi1>
    %140 = vector.broadcast %139 : vector<1x1024xi1> to vector<8x1024xi1>
    %141 = vector.broadcast %cst_89 : f32 to vector<8x1024xf32>
    %142 = arith.select %140, %138, %141 : vector<8x1024xi1>, vector<8x1024xf32>
    %c0_90 = arith.constant 0 : index
    %c160 = arith.constant 160 : index
    %143 = vector.load %arg13[%c0_90, %c160] : memref<8x1280xf32, #tpu.memory_space<vmem>>, vector<8x1024xf32>
    %c0_91 = arith.constant 0 : index
    %c161 = arith.constant 161 : index
    %144 = vector.load %arg13[%c0_91, %c161] : memref<8x1280xf32, #tpu.memory_space<vmem>>, vector<8x1024xf32>
    %cst_92 = arith.constant 0.000000e+00 : f32
    %145 = vector.shape_cast %115 : vector<1x1024xi1> to vector<1x1024xi1>
    %146 = vector.broadcast %145 : vector<1x1024xi1> to vector<8x1024xi1>
    %147 = vector.broadcast %cst_92 : f32 to vector<8x1024xf32>
    %148 = arith.select %146, %144, %147 : vector<8x1024xi1>, vector<8x1024xf32>
    %149 = tpu.concatenate %120, %121, %126, %131, %132, %137, %142, %143, %148 in 0 : vector<8x1024xf32>, vector<8x1024xf32>, vector<8x1024xf32>, vector<8x1024xf32>, vector<8x1024xf32>, vector<8x1024xf32>, vector<8x1024xf32>, vector<8x1024xf32>, vector<8x1024xf32> -> vector<72x1024xf32>
    %150 = arith.truncf %149 : vector<72x1024xf32> to vector<72x1024xbf16>
    %cst_93 = arith.constant dense<0.000000e+00> : vector<8x1024xf32>
    %151 = tpu.matmul %108, %150, %cst_93 {dimension_numbers = #tpu.dot_dimension_numbers<[1], [0], [0], [1], [0, 0, 1, 1], [], []>} : vector<8x72xbf16>, vector<72x1024xbf16>, vector<8x1024xf32> -> vector<8x1024xf32>
    %c0_94 = arith.constant 0 : index
    %c0_95 = arith.constant 0 : index
    %152 = vector.load %arg7[%c0_94, %c0_95] : memref<8x1xf32, #tpu.memory_space<vmem>>, vector<8x1xf32>
    %153 = vector.broadcast %152 : vector<8x1xf32> to vector<8x1024xf32>
    %154 = arith.addf %151, %153 : vector<8x1024xf32>
    %cst_96 = arith.constant 0.000000e+00 : f32
    %155 = vector.broadcast %cst_96 : f32 to vector<8x1024xf32>
    %156 = arith.maximumf %154, %155 : vector<8x1024xf32>
    %c0_97 = arith.constant 0 : index
    %c0_98 = arith.constant 0 : index
    %157 = vector.load %arg8[%c0_97, %c0_98] : memref<8x8xbf16, #tpu.memory_space<vmem>>, vector<8x8xbf16>
    %158 = arith.truncf %156 : vector<8x1024xf32> to vector<8x1024xbf16>
    %cst_99 = arith.constant dense<0.000000e+00> : vector<8x1024xf32>
    %159 = tpu.matmul %157, %158, %cst_99 {dimension_numbers = #tpu.dot_dimension_numbers<[1], [0], [0], [1], [0, 0, 1, 1], [], []>} : vector<8x8xbf16>, vector<8x1024xbf16>, vector<8x1024xf32> -> vector<8x1024xf32>
    %c0_100 = arith.constant 0 : index
    %c0_101 = arith.constant 0 : index
    %160 = vector.load %arg9[%c0_100, %c0_101] : memref<8x1xf32, #tpu.memory_space<vmem>>, vector<8x1xf32>
    %161 = vector.broadcast %160 : vector<8x1xf32> to vector<8x1024xf32>
    %162 = arith.addf %159, %161 : vector<8x1024xf32>
    %c0_102 = arith.constant 0 : index
    %c0_103 = arith.constant 0 : index
    %163 = vector.load %arg10[%c0_102, %c0_103] : memref<256x1024xbf16, #tpu.memory_space<vmem>>, vector<256x1024xbf16>
    %164 = arith.truncf %55 : vector<8x256xf32> to vector<8x256xbf16>
    %cst_104 = arith.constant dense<0.000000e+00> : vector<8x1024xf32>
    %165 = tpu.matmul %164, %163, %cst_104 {dimension_numbers = #tpu.dot_dimension_numbers<[1], [0], [0], [1], [0, 0, 1, 1], [], []>} : vector<8x256xbf16>, vector<256x1024xbf16>, vector<8x1024xf32> -> vector<8x1024xf32>
    %166 = arith.addf %165, %162 : vector<8x1024xf32>
    %cst_105 = arith.constant 0.000000e+00 : f32
    %167 = vector.broadcast %cst_105 : f32 to vector<8x1024xf32>
    %168 = arith.maximumf %166, %167 : vector<8x1024xf32>
    %c0_106 = arith.constant 0 : index
    %c0_107 = arith.constant 0 : index
    %c0_108 = arith.constant 0 : index
    %169 = vector.load %arg11[%c0_106, %c0_107, %c0_108] : memref<1x8x1024xf32, #tpu.memory_space<vmem>>, vector<1x8x1024xf32>
    %170 = vector.shape_cast %169 : vector<1x8x1024xf32> to vector<8x1024xf32>
    %171 = vector.shape_cast %168 : vector<8x1024xf32> to vector<1x8x1024xf32>
    tpu.vector_store %arg11[%c0_106, %c0_107, %c0_108], %171 {strides = array<i32>} : memref<1x8x1024xf32, #tpu.memory_space<vmem>>, vector<1x8x1024xf32>,
    return
  }
  func.func @transform_0(%arg0: i32) -> (i32, i32, i32) {
    %c0_i32 = arith.constant 0 : i32
    %c0_i32_0 = arith.constant 0 : i32
    %c0_i32_1 = arith.constant 0 : i32
    return %arg0, %c0_i32, %c0_i32_0 : i32, i32, i32
  }
  func.func @transform_1(%arg0: i32) -> (i32, i32) {
    %c0_i32 = arith.constant 0 : i32
    %c0_i32_0 = arith.constant 0 : i32
    %c0_i32_1 = arith.constant 0 : i32
    return %c0_i32, %c0_i32_0 : i32, i32
  }
  func.func @transform_2(%arg0: i32) -> (i32, i32) {
    %c0_i32 = arith.constant 0 : i32
    %c0_i32_0 = arith.constant 0 : i32
    %c0_i32_1 = arith.constant 0 : i32
    return %c0_i32, %c0_i32_0 : i32, i32
  }
  func.func @transform_3(%arg0: i32) -> (i32, i32) {
    %c0_i32 = arith.constant 0 : i32
    %c0_i32_0 = arith.constant 0 : i32
    %c0_i32_1 = arith.constant 0 : i32
    return %c0_i32, %c0_i32_0 : i32, i32
  }
  func.func @transform_4(%arg0: i32) -> (i32, i32) {
    %c0_i32 = arith.constant 0 : i32
    %c0_i32_0 = arith.constant 0 : i32
    %c0_i32_1 = arith.constant 0 : i32
    return %c0_i32, %c0_i32_0 : i32, i32
  }
  func.func @transform_5(%arg0: i32) -> (i32, i32) {
    %c0_i32 = arith.constant 0 : i32
    %c0_i32_0 = arith.constant 0 : i32
    %c0_i32_1 = arith.constant 0 : i32
    return %c0_i32, %c0_i32_0 : i32, i32
  }
  func.func @transform_6(%arg0: i32) -> (i32, i32) {
    %c0_i32 = arith.constant 0 : i32
    %c0_i32_0 = arith.constant 0 : i32
    %c0_i32_1 = arith.constant 0 : i32
    return %c0_i32, %c0_i32_0 : i32, i32
  }
  func.func @transform_7(%arg0: i32) -> (i32, i32) {
    %c0_i32 = arith.constant 0 : i32
    %c0_i32_0 = arith.constant 0 : i32
    %c0_i32_1 = arith.constant 0 : i32
    return %c0_i32, %c0_i32_0 : i32, i32
  }
  func.func @transform_8(%arg0: i32) -> (i32, i32) {
    %c0_i32 = arith.constant 0 : i32
    %c0_i32_0 = arith.constant 0 : i32
    %c0_i32_1 = arith.constant 0 : i32
    return %c0_i32, %c0_i32_0 : i32, i32
  }
  func.func @transform_9(%arg0: i32) -> (i32, i32) {
    %c0_i32 = arith.constant 0 : i32
    %c0_i32_0 = arith.constant 0 : i32
    %c0_i32_1 = arith.constant 0 : i32
    return %c0_i32, %c0_i32_0 : i32, i32
  }
  func.func @transform_10(%arg0: i32) -> (i32, i32, i32) {
    %c0_i32 = arith.constant 0 : i32
    %c0_i32_0 = arith.constant 0 : i32
    %c0_i32_1 = arith.constant 0 : i32
    return %arg0, %c0_i32, %c0_i32_0 : i32, i32, i32
  }
}

</mosaic_0001>

<llo_original>
// kernel: tpu_custom_call.1
$region0: #{tpu_custom_call.1}
  #allocation0 [shape = 'u32[]', space=smem, size = 0x4, offset = 0x4, fixed_abs, tag = 'smem constant byte address 0x4 - core index']
  #allocation1 [shape = 'u32[72,128]{1,0:T(1,128)}', space=vmem, size = 0x9000, scoped, tag = 'internal scratch']
  #allocation2 [shape = 'f32[8,512]{1,0:T(8,128)}', space=vmem, size = 0x4000, scoped, tag = 'scratch operand']
  #allocation3 [shape = 'f32[8,1280]{1,0:T(8,128)}', space=vmem, size = 0xa000, scoped, tag = 'scratch operand']
  %s0 = inlined_call_operand.hbm [shape: f32[2,8,256], index: 0, kind: input, shape index: {}]
  %s1 = inlined_call_operand.vmem [shape: bf16[8,72], index: 1, kind: input, shape index: {}]
  %s2 = inlined_call_operand.vmem [shape: f32[8,1], index: 2, kind: input, shape index: {}]
  %s3 = inlined_call_operand.vmem [shape: bf16[8,72], index: 3, kind: input, shape index: {}]
  %s4 = inlined_call_operand.vmem [shape: f32[8,1], index: 4, kind: input, shape index: {}]
  %s5 = inlined_call_operand.vmem [shape: bf16[8,72], index: 5, kind: input, shape index: {}]
  %s6 = inlined_call_operand.vmem [shape: f32[8,1], index: 6, kind: input, shape index: {}]
  %s7 = inlined_call_operand.vmem [shape: bf16[8,8], index: 7, kind: input, shape index: {}]
  %s8 = inlined_call_operand.vmem [shape: f32[8,1], index: 8, kind: input, shape index: {}]
  %s9 = inlined_call_operand.hbm [shape: bf16[256,1024], index: 9, kind: input, shape index: {}]
  %s10 = inlined_call_operand.hbm [shape: f32[2,8,1024], index: 10, kind: output, shape index: {}]
  %s11 = sld [smem:[#allocation0]]
  $region81: #{tpu_custom_call.1} parent=0
    _
  %s13 = ssub.s32 1, %s11
  %s14 = scalar_select 0, %s13, %s11
  $region1: #{tpu_custom_call.1} parent=0
    #allocation4 [shape = 'u8[16384]{0}', space=vmem, size = 0x4000, scoped, tag = 'input window, operand 0']
    #allocation5 [shape = 's32[2]{0}', space=sflag, size = 0x8, scoped, tag = 'scoped memory for tpu_custom_call.1']
    #allocation6 [shape = 's32[2]{0}', space=sflag, size = 0x8, scoped, tag = 'scoped memory for tpu_custom_call.1']
    #allocation7 [shape = 'u8[524288]{0}', space=vmem, size = 0x80000, scoped, tag = 'input window, operand 9, single buffered']
    #allocation8 [shape = 's32[1]{0}', space=sflag, size = 0x4, scoped, tag = 'scoped memory for tpu_custom_call.1']
    #allocation9 [shape = 'u8[65536]{0}', space=vmem, size = 0x10000, scoped, tag = 'output window, operand 0']
    %15 = vsyncpa [#allocation5], 0
    %s16 = scalar_lea.sflag [#allocation5], 1
    %17 = vsyncpa %s16, 0
    %18 = vsyncpa [#allocation8], 0
    %19 = vsyncpa [#allocation6], 0
    %s20 = scalar_lea.sflag [#allocation6], 1
    %21 = vsyncpa %s20, 0
    loop: start=0, step=1, limit=4
    $region2: #{tpu_custom_call.1} parent=1 // loop_pre_header
      _
    $region3: #{tpu_custom_call.1} parent=1 // loop_header
      %s23 = sphi 0, %s27
      %p24 = scmp.ge.s32.totalorder %s23, 4
      %s33 = sphi 0, %s35
      %s36 = sphi 0, %s33
      %s37 = sphi 0, %s36
      %s53 = sphi 0, %s37
      %s57 = sphi 0, %s57
      %s59 = sphi 0, %s57
      %s60 = sphi 0, %s59
      %s74 = sphi 0, %s60
      %s78 = sphi 0, %s78
      %s80 = sphi 0, %s78
      %s81 = sphi 0, %s80
      %s95 = sphi 0, %s81
      %s99 = sphi 0, %s99
      %s101 = sphi 0, %s99
      %s102 = sphi 0, %s101
      %s116 = sphi 0, %s102
      %s120 = sphi 0, %s120
      %s122 = sphi 0, %s120
      %s123 = sphi 0, %s122
      %s137 = sphi 0, %s123
      %s141 = sphi 0, %s141
      %s143 = sphi 0, %s141
      %s144 = sphi 0, %s143
      %s158 = sphi 0, %s144
      %s162 = sphi 0, %s162
      %s164 = sphi 0, %s162
      %s165 = sphi 0, %s164
      %s179 = sphi 0, %s165
      %s183 = sphi 0, %s183
      %s185 = sphi 0, %s183
      %s186 = sphi 0, %s185
      %s200 = sphi 0, %s186
      %s204 = sphi 0, %s204
      %s206 = sphi 0, %s204
      %s207 = sphi 0, %s206
      %s221 = sphi 0, %s207
      %s225 = sphi 0, %s225
      %s227 = sphi 0, %s225
      %s228 = sphi 0, %s227
      %s242 = sphi 0, %s228
      %s248 = sphi 0, %s250
      %s251 = sphi 0, %s248
      %s252 = sphi 0, %s251
      %s268 = sphi 0, %s252
    $region4: #{tpu_custom_call.1} parent=1 // loop_header_branch
      %26 = sbr.rel (%p24) target = $region8
    $region5: #{tpu_custom_call.1} parent=1 // loop_body
      %s28 = ssub.s32 %s23, 1
      %s29 = ssub.s32 %s23, 2
      %s30 = sadd.s32 %s23, 1
      %s31 = ssub.s32 %s23, %s30
      %p32 = scmp.eq.s32.totalorder %s31, 0
      %s34 = sadd.s32 %s33, 1
      %s35 = scalar_select %p32, %s33, %s34
      %p38 = pneg %p32
      %p39 = scmp.eq.s32.totalorder %s23, 1
      %p40 = por %p38, %p39
      %p41 = scmp.ne.s32.totalorder %s33, %s36
      %p42 = scmp.eq.s32.totalorder %s23, 0
      %p43 = por %p41, %p42
      %p44 = scmp.ne.s32.totalorder %s33, %s36
      %p45 = scmp.eq.s32.totalorder %s28, 1
      %p46 = por %p44, %p45
      %p47 = scmp.ne.s32.totalorder %s36, %s37
      %p48 = scmp.eq.s32.totalorder %s28, 0
      %p49 = por %p47, %p48
      %p50 = scmp.ne.s32.totalorder %s36, %s37
      %p51 = scmp.eq.s32.totalorder %s29, 1
      %p52 = por %p50, %p51
      %p54 = scmp.ne.s32.totalorder %s37, %s53
      %p55 = scmp.eq.s32.totalorder %s29, 0
      %p56 = por %p54, %p55
      %s58 = sadd.s32 %s57, 1
      %p61 = scmp.eq.s32.totalorder %s23, 1
      %p62 = scmp.ne.s32.totalorder %s57, %s59
      %p63 = scmp.eq.s32.totalorder %s23, 0
      %p64 = por %p62, %p63
      %p65 = scmp.ne.s32.totalorder %s57, %s59
      %p66 = scmp.eq.s32.totalorder %s28, 1
      %p67 = por %p65, %p66
      %p68 = scmp.ne.s32.totalorder %s59, %s60
      %p69 = scmp.eq.s32.totalorder %s28, 0
      %p70 = por %p68, %p69
      %p71 = scmp.ne.s32.totalorder %s59, %s60
      %p72 = scmp.eq.s32.totalorder %s29, 1
      %p73 = por %p71, %p72
      %p75 = scmp.ne.s32.totalorder %s60, %s74
      %p76 = scmp.eq.s32.totalorder %s29, 0
      %p77 = por %p75, %p76
      %s79 = sadd.s32 %s78, 1
      %p82 = scmp.eq.s32.totalorder %s23, 1
      %p83 = scmp.ne.s32.totalorder %s78, %s80
      %p84 = scmp.eq.s32.totalorder %s23, 0
      %p85 = por %p83, %p84
      %p86 = scmp.ne.s32.totalorder %s78, %s80
      %p87 = scmp.eq.s32.totalorder %s28, 1
      %p88 = por %p86, %p87
      %p89 = scmp.ne.s32.totalorder %s80, %s81
      %p90 = scmp.eq.s32.totalorder %s28, 0
      %p91 = por %p89, %p90
      %p92 = scmp.ne.s32.totalorder %s80, %s81
      %p93 = scmp.eq.s32.totalorder %s29, 1
      %p94 = por %p92, %p93
      %p96 = scmp.ne.s32.totalorder %s81, %s95
      %p97 = scmp.eq.s32.totalorder %s29, 0
      %p98 = por %p96, %p97
      %s100 = sadd.s32 %s99, 1
      %p103 = scmp.eq.s32.totalorder %s23, 1
      %p104 = scmp.ne.s32.totalorder %s99, %s101
      %p105 = scmp.eq.s32.totalorder %s23, 0
      %p106 = por %p104, %p105
      %p107 = scmp.ne.s32.totalorder %s99, %s101
      %p108 = scmp.eq.s32.totalorder %s28, 1
      %p109 = por %p107, %p108
      %p110 = scmp.ne.s32.totalorder %s101, %s102
      %p111 = scmp.eq.s32.totalorder %s28, 0
      %p112 = por %p110, %p111
      %p113 = scmp.ne.s32.totalorder %s101, %s102
      %p114 = scmp.eq.s32.totalorder %s29, 1
      %p115 = por %p113, %p114
      %p117 = scmp.ne.s32.totalorder %s102, %s116
      %p118 = scmp.eq.s32.totalorder %s29, 0
      %p119 = por %p117, %p118
      %s121 = sadd.s32 %s120, 1
      %p124 = scmp.eq.s32.totalorder %s23, 1
      %p125 = scmp.ne.s32.totalorder %s120, %s122
      %p126 = scmp.eq.s32.totalorder %s23, 0
      %p127 = por %p125, %p126
      %p128 = scmp.ne.s32.totalorder %s120, %s122
      %p129 = scmp.eq.s32.totalorder %s28, 1
      %p130 = por %p128, %p129
      %p131 = scmp.ne.s32.totalorder %s122, %s123
      %p132 = scmp.eq.s32.totalorder %s28, 0
      %p133 = por %p131, %p132
      %p134 = scmp.ne.s32.totalorder %s122, %s123
      %p135 = scmp.eq.s32.totalorder %s29, 1
      %p136 = por %p134, %p135
      %p138 = scmp.ne.s32.totalorder %s123, %s137
      %p139 = scmp.eq.s32.totalorder %s29, 0
      %p140 = por %p138, %p139
      %s142 = sadd.s32 %s141, 1
      %p145 = scmp.eq.s32.totalorder %s23, 1
      %p146 = scmp.ne.s32.totalorder %s141, %s143
      %p147 = scmp.eq.s32.totalorder %s23, 0
      %p148 = por %p146, %p147
      %p149 = scmp.ne.s32.totalorder %s141, %s143
      %p150 = scmp.eq.s32.totalorder %s28, 1
      %p151 = por %p149, %p150
      %p152 = scmp.ne.s32.totalorder %s143, %s144
      %p153 = scmp.eq.s32.totalorder %s28, 0
      %p154 = por %p152, %p153
      %p155 = scmp.ne.s32.totalorder %s143, %s144
      %p156 = scmp.eq.s32.totalorder %s29, 1
      %p157 = por %p155, %p156
      %p159 = scmp.ne.s32.totalorder %s144, %s158
      %p160 = scmp.eq.s32.totalorder %s29, 0
      %p161 = por %p159, %p160
      %s163 = sadd.s32 %s162, 1
      %p166 = scmp.eq.s32.totalorder %s23, 1
      %p167 = scmp.ne.s32.totalorder %s162, %s164
      %p168 = scmp.eq.s32.totalorder %s23, 0
      %p169 = por %p167, %p168
      %p170 = scmp.ne.s32.totalorder %s162, %s164
      %p171 = scmp.eq.s32.totalorder %s28, 1
      %p172 = por %p170, %p171
      %p173 = scmp.ne.s32.totalorder %s164, %s165
      %p174 = scmp.eq.s32.totalorder %s28, 0
      %p175 = por %p173, %p174
      %p176 = scmp.ne.s32.totalorder %s164, %s165
      %p177 = scmp.eq.s32.totalorder %s29, 1
      %p178 = por %p176, %p177
      %p180 = scmp.ne.s32.totalorder %s165, %s179
      %p181 = scmp.eq.s32.totalorder %s29, 0
      %p182 = por %p180, %p181
      %s184 = sadd.s32 %s183, 1
      %p187 = scmp.eq.s32.totalorder %s23, 1
      %p188 = scmp.ne.s32.totalorder %s183, %s185
      %p189 = scmp.eq.s32.totalorder %s23, 0
      %p190 = por %p188, %p189
      %p191 = scmp.ne.s32.totalorder %s183, %s185
      %p192 = scmp.eq.s32.totalorder %s28, 1
      %p193 = por %p191, %p192
      %p194 = scmp.ne.s32.totalorder %s185, %s186
      %p195 = scmp.eq.s32.totalorder %s28, 0
      %p196 = por %p194, %p195
      %p197 = scmp.ne.s32.totalorder %s185, %s186
      %p198 = scmp.eq.s32.totalorder %s29, 1
      %p199 = por %p197, %p198
      %p201 = scmp.ne.s32.totalorder %s186, %s200
      %p202 = scmp.eq.s32.totalorder %s29, 0
      %p203 = por %p201, %p202
      %s205 = sadd.s32 %s204, 1
      %p208 = scmp.eq.s32.totalorder %s23, 1
      %p209 = scmp.ne.s32.totalorder %s204, %s206
      %p210 = scmp.eq.s32.totalorder %s23, 0
      %p211 = por %p209, %p210
      %p212 = scmp.ne.s32.totalorder %s204, %s206
      %p213 = scmp.eq.s32.totalorder %s28, 1
      %p214 = por %p212, %p213
      %p215 = scmp.ne.s32.totalorder %s206, %s207
      %p216 = scmp.eq.s32.totalorder %s28, 0
      %p217 = por %p215, %p216
      %p218 = scmp.ne.s32.totalorder %s206, %s207
      %p219 = scmp.eq.s32.totalorder %s29, 1
      %p220 = por %p218, %p219
      %p222 = scmp.ne.s32.totalorder %s207, %s221
      %p223 = scmp.eq.s32.totalorder %s29, 0
      %p224 = por %p222, %p223
      %s226 = sadd.s32 %s225, 1
      %p229 = scmp.eq.s32.totalorder %s23, 1
      %p230 = scmp.ne.s32.totalorder %s225, %s227
      %p231 = scmp.eq.s32.totalorder %s23, 0
      %p232 = por %p230, %p231
      %p233 = scmp.ne.s32.totalorder %s225, %s227
      %p234 = scmp.eq.s32.totalorder %s28, 1
      %p235 = por %p233, %p234
      %p236 = scmp.ne.s32.totalorder %s227, %s228
      %p237 = scmp.eq.s32.totalorder %s28, 0
      %p238 = por %p236, %p237
      %p239 = scmp.ne.s32.totalorder %s227, %s228
      %p240 = scmp.eq.s32.totalorder %s29, 1
      %p241 = por %p239, %p240
      %p243 = scmp.ne.s32.totalorder %s228, %s242
      %p244 = scmp.eq.s32.totalorder %s29, 0
      %p245 = por %p243, %p244
      %s246 = ssub.s32 %s23, %s30
      %p247 = scmp.eq.s32.totalorder %s246, 0
      %s249 = sadd.s32 %s248, 1
      %s250 = scalar_select %p247, %s248, %s249
      %p253 = pneg %p247
      %p254 = scmp.eq.s32.totalorder %s23, 1
      %p255 = por %p253, %p254
      %p256 = scmp.ne.s32.totalorder %s248, %s251
      %p257 = scmp.eq.s32.totalorder %s23, 0
      %p258 = por %p256, %p257
      %p259 = scmp.ne.s32.totalorder %s248, %s251
      %p260 = scmp.eq.s32.totalorder %s28, 1
      %p261 = por %p259, %p260
      %p262 = scmp.ne.s32.totalorder %s251, %s252
      %p263 = scmp.eq.s32.totalorder %s28, 0
      %p264 = por %p262, %p263
      %p265 = scmp.ne.s32.totalorder %s251, %s252
      %p266 = scmp.eq.s32.totalorder %s29, 1
      %p267 = por %p265, %p266
      %p269 = scmp.ne.s32.totalorder %s252, %s268
      %p270 = scmp.eq.s32.totalorder %s29, 0
      %p271 = por %p269, %p270
      %p272 = scmp.le.s32.totalorder 1, %s23
      %p273 = scmp.lt.s32.totalorder %s23, 3
      %p274 = pnand %p272, %p273
      %p275 = pneg %p274
      // Predicated region
      $region9: #{tpu_custom_call.1} parent=5 // pred_check
        _
      $region10: #{tpu_custom_call.1} parent=5 // pred_check_branch
        %277 = sbr.rel (%p274) target = $region12
      $region11: #{tpu_custom_call.1} parent=5 // pred_region
        %s278 = ssub.s32 %s23, 1
        // Predicated region
        $region13: #{tpu_custom_call.1} parent=11 // pred_check
          %p279 = pneg %p70
        $region14: #{tpu_custom_call.1} parent=11 // pred_check_branch
          %281 = sbr.rel (%p279) target = $region16
        $region15: #{tpu_custom_call.1} parent=11 // pred_region
          _
        $region16: #{tpu_custom_call.1} parent=11 // pred_fallthru
          _
        // Predicated region
        $region17: #{tpu_custom_call.1} parent=11 // pred_check
          %p282 = pneg %p91
        $region18: #{tpu_custom_call.1} parent=11 // pred_check_branch
          %284 = sbr.rel (%p282) target = $region20
        $region19: #{tpu_custom_call.1} parent=11 // pred_region
          _
        $region20: #{tpu_custom_call.1} parent=11 // pred_fallthru
          _
        // Predicated region
        $region21: #{tpu_custom_call.1} parent=11 // pred_check
          %p285 = pneg %p112
        $region22: #{tpu_custom_call.1} parent=11 // pred_check_branch
          %287 = sbr.rel (%p285) target = $region24
        $region23: #{tpu_custom_call.1} parent=11 // pred_region
          _
        $region24: #{tpu_custom_call.1} parent=11 // pred_fallthru
          _
        // Predicated region
        $region25: #{tpu_custom_call.1} parent=11 // pred_check
          %p288 = pneg %p133
        $region26: #{tpu_custom_call.1} parent=11 // pred_check_branch
          %290 = sbr.rel (%p288) target = $region28
        $region27: #{tpu_custom_call.1} parent=11 // pred_region
          _
        $region28: #{tpu_custom_call.1} parent=11 // pred_fallthru
          _
        // Predicated region
        $region29: #{tpu_custom_call.1} parent=11 // pred_check
          %p291 = pneg %p154
        $region30: #{tpu_custom_call.1} parent=11 // pred_check_branch
          %293 = sbr.rel (%p291) target = $region32
        $region31: #{tpu_custom_call.1} parent=11 // pred_region
          _
        $region32: #{tpu_custom_call.1} parent=11 // pred_fallthru
          _
        // Predicated region
        $region33: #{tpu_custom_call.1} parent=11 // pred_check
          %p294 = pneg %p175
        $region34: #{tpu_custom_call.1} parent=11 // pred_check_branch
          %296 = sbr.rel (%p294) target = $region36
        $region35: #{tpu_custom_call.1} parent=11 // pred_region
          _
        $region36: #{tpu_custom_call.1} parent=11 // pred_fallthru
          _
        // Predicated region
        $region37: #{tpu_custom_call.1} parent=11 // pred_check
          %p297 = pneg %p196
        $region38: #{tpu_custom_call.1} parent=11 // pred_check_branch
          %299 = sbr.rel (%p297) target = $region40
        $region39: #{tpu_custom_call.1} parent=11 // pred_region
          _
        $region40: #{tpu_custom_call.1} parent=11 // pred_fallthru
          _
        // Predicated region
        $region41: #{tpu_custom_call.1} parent=11 // pred_check
          %p300 = pneg %p217
        $region42: #{tpu_custom_call.1} parent=11 // pred_check_branch
          %302 = sbr.rel (%p300) target = $region44
        $region43: #{tpu_custom_call.1} parent=11 // pred_region
          _
        $region44: #{tpu_custom_call.1} parent=11 // pred_fallthru
          _
        // Predicated region
        $region45: #{tpu_custom_call.1} parent=11 // pred_check
          %p303 = pneg %p238
        $region46: #{tpu_custom_call.1} parent=11 // pred_check_branch
          %305 = sbr.rel (%p303) target = $region48
        $region47: #{tpu_custom_call.1} parent=11 // pred_region
          %307 = vsyncadd [#allocation8], 0
          %s308 = sshll.u32 %s9, 4
          %s309 = int_to_ptr.hbm [resolvable:$true] %s308
          %s310 = sshll.u32 [#allocation7], 4
          %s311 = int_to_ptr.vmem [resolvable:$true] %s310
          %316 = dma.hbm_to_vmem [thread:$0]  %s309, 16384, %s311, [#allocation8], 512, 512, 32
        $region48: #{tpu_custom_call.1} parent=11 // pred_fallthru
          _
      $region12: #{tpu_custom_call.1} parent=5 // pred_fallthru
        _
      %p317 = scmp.lt.s32.totalorder %s23, 2
      // Predicated region
      $region49: #{tpu_custom_call.1} parent=5 // pred_check
        %p318 = pneg %p317
      $region50: #{tpu_custom_call.1} parent=5 // pred_check_branch
        %320 = sbr.rel (%p318) target = $region52
      $region51: #{tpu_custom_call.1} parent=5 // pred_region
        // Predicated region
        $region53: #{tpu_custom_call.1} parent=51 // pred_check
          %p321 = pneg %p43
        $region54: #{tpu_custom_call.1} parent=51 // pred_check_branch
          %323 = sbr.rel (%p321) target = $region56
        $region55: #{tpu_custom_call.1} parent=51 // pred_region
          %s324 = sand.u32 %s33, 1
          %s325 = scalar_lea.sflag [#allocation5], %s324
          %s326 = sand.u32 %s33, 1
          %s327 = smul.addr %s326, 16
          %s328 = scalar_lea.vmem [#allocation4], %s327
          %330 = vsyncadd %s325, 0
          %s331 = smul.addr %s23, 2
          %s332 = smul.addr %s331, 8
          %s333 = scalar_lea.hbm %s0, %s332
          %s335 = sshll.u32 %s333, 4
          %s336 = int_to_ptr.hbm [resolvable:$true] %s335
          %s337 = sshll.u32 %s328, 4
          %s338 = int_to_ptr.vmem [resolvable:$true] %s337
          %340 = dma.hbm_to_vmem [thread:$0]  %s336, 256, %s338, %s325
        $region56: #{tpu_custom_call.1} parent=51 // pred_fallthru
          _
      $region52: #{tpu_custom_call.1} parent=5 // pred_fallthru
        _
      %p341 = scmp.le.s32.totalorder 1, %s23
      %p342 = scmp.lt.s32.totalorder %s23, 3
      %p343 = pnand %p341, %p342
      %p344 = pneg %p343
      // Predicated region
      $region57: #{tpu_custom_call.1} parent=5 // pred_check
        _
      $region58: #{tpu_custom_call.1} parent=5 // pred_check_branch
        %346 = sbr.rel (%p343) target = $region60
      $region59: #{tpu_custom_call.1} parent=5 // pred_region
        %s347 = ssub.s32 %s23, 1
        %s348 = sand.u32 %s36, 1
        %s349 = scalar_lea.sflag [#allocation5], %s348
        %s350 = sand.u32 %s36, 1
        %s351 = smul.addr %s350, 16
        %s352 = scalar_lea.vmem [#allocation4], %s351
        // Predicated region
        $region61: #{tpu_custom_call.1} parent=59 // pred_check
          %p353 = pneg %p49
        $region62: #{tpu_custom_call.1} parent=59 // pred_check_branch
          %355 = sbr.rel (%p353) target = $region64
        $region63: #{tpu_custom_call.1} parent=59 // pred_region
          %357 = dma.done %s349, 256
        $region64: #{tpu_custom_call.1} parent=59 // pred_fallthru
          _
        // Predicated region
        $region65: #{tpu_custom_call.1} parent=59 // pred_check
          %p358 = pneg %p238
        $region66: #{tpu_custom_call.1} parent=59 // pred_check_branch
          %360 = sbr.rel (%p358) target = $region68
        $region67: #{tpu_custom_call.1} parent=59 // pred_region
          %362 = dma.done [#allocation8], 16384
        $region68: #{tpu_custom_call.1} parent=59 // pred_fallthru
          _
        %s363 = sand.u32 %s36, 1
        %s364 = scalar_lea.sflag [#allocation5], %s363
        %s365 = sand.u32 %s36, 1
        %s366 = smul.addr %s365, 16
        %s367 = scalar_lea.vmem [#allocation4], %s366
        %p368 = pneg %p49
        %p369 = pneg %p46
        %p370 = pneg %p70
        %p371 = pneg %p67
        %p372 = pneg %p91
        %p373 = pneg %p88
        %p374 = pneg %p112
        %p375 = pneg %p109
        %p376 = pneg %p133
        %p377 = pneg %p130
        %p378 = pneg %p154
        %p379 = pneg %p151
        %p380 = pneg %p175
        %p381 = pneg %p172
        %p382 = pneg %p196
        %p383 = pneg %p193
        %p384 = pneg %p217
        %p385 = pneg %p214
        %p386 = pneg %p238
        %p387 = pneg %p235
        %p388 = pneg %p264
        %p389 = pneg %p261
        %s390 = sand.u32 %s251, 1
        %s391 = scalar_lea.sflag [#allocation6], %s390
        %s392 = sand.u32 %s251, 1
        %s393 = smul.addr %s392, 64
        %s394 = scalar_lea.vmem [#allocation9], %s393
        %396 = vst [vmem:[#allocation2] sm:$0xff] 0.0
        %397 = vst [vmem:[#allocation2 + $0x18] sm:$0xff] 0.0
        %398 = vst [vmem:[#allocation3] sm:$0xff] 0.0
        %399 = vst [vmem:[#allocation3 + $0x48] sm:$0xff] 0.0
        %v400 = vld [vmem:[%s352] sm:$0xff]
        %v401 = vld [vmem:[%s352 + $0x8] sm:$0xff]
        %402 = vst [vmem:[#allocation2 + $0x8] sm:$0xff] %v400
        %403 = vst [vmem:[#allocation2 + $0x10] sm:$0xff] %v401
        %v404 = vld [vmem:[%s1] sm:$0xf]
        %v405 = vlaneseq
        %v406 = vand.u32 %v405, 127
        %v407 = vadd.s32 %v406, 128
        %v408 = vand.u32 %v406, 15
        %v409 = vand.u32 %v407, 15
        %vm410 = vcmp.gt.s32.totalorder %v408, 0
        %vm411 = vcmp.gt.s32.totalorder %v409, 0
        %vm412 = vcmp.lt.s32.totalorder %v408, 15
        %vm413 = vcmp.lt.s32.totalorder %v409, 15
        %v414 = vld [vmem:[#allocation2] sm:$0xff]
        %v415 = vld [vmem:[#allocation2 + $0x8] sm:$0xff]
        %v416 = vld [vmem:[#allocation2 + $0x10] sm:$0xff]
        %v417 = vsel %vm410, 1, 0
        %v418 = vsel %vm411, 1, 0
        %vm419 = vcmp.eq.s32.totalorder %v417, 1
        %vm420 = vcmp.eq.s32.totalorder %v418, 1
        %424 = vrot.lane.b32.xlu0 %v414, 17
        %v425 = vpop.permute.xlu0 %424
        %426 = vrot.lane.b32.xlu0 %v415, 17
        %v427 = vpop.permute.xlu0 %426
        %428 = vrot.lane.b32.xlu0 %v416, 17
        %v429 = vpop.permute.xlu0 %428
        %vm430 = vcmask 138240
        %v431 = vsel %vm430, %v425, %v427
        %v432 = vsel %vm430, %v427, %v429
        %v435 = vsel %vm419, %v431, 0.0
        %v436 = vsel %vm420, %v432, 0.0
        %v437 = vsel %vm412, 1, 0
        %v438 = vsel %vm413, 1, 0
        %vm439 = vcmp.eq.s32.totalorder %v437, 1
        %vm440 = vcmp.eq.s32.totalorder %v438, 1
        %441 = vrot.lane.b32.xlu0 %v414, 15
        %v442 = vpop.permute.xlu0 %441
        %443 = vrot.lane.b32.xlu0 %v415, 15
        %v444 = vpop.permute.xlu0 %443
        %445 = vrot.lane.b32.xlu0 %v416, 15
        %v446 = vpop.permute.xlu0 %445
        %vm447 = vcmask 121856
        %v448 = vsel %vm447, %v442, %v444
        %v449 = vsel %vm447, %v444, %v446
        %v452 = vsel %vm439, %v448, 0.0
        %v453 = vsel %vm440, %v449, 0.0
        %454 = vrot.lane.b32.xlu0 %v414, 1
        %v455 = vpop.permute.xlu0 %454
        %456 = vrot.lane.b32.xlu0 %v415, 1
        %v457 = vpop.permute.xlu0 %456
        %458 = vrot.lane.b32.xlu0 %v416, 1
        %v459 = vpop.permute.xlu0 %458
        %vm460 = vcmask 7168
        %v461 = vsel %vm460, %v455, %v457
        %v462 = vsel %vm460, %v457, %v459
        %v465 = vsel %vm419, %v461, 0.0
        %v466 = vsel %vm420, %v462, 0.0
        %v467 = vld [vmem:[#allocation2 + $0x8] sm:$0xff]
        %v468 = vld [vmem:[#allocation2 + $0x10] sm:$0xff]
        %v469 = vld [vmem:[#allocation2 + $0x18] sm:$0xff]
        %473 = vrot.lane.b32.xlu0 %v467, 127
        %v474 = vpop.permute.xlu0 %473
        %475 = vrot.lane.b32.xlu0 %v468, 127
        %v476 = vpop.permute.xlu0 %475
        %477 = vrot.lane.b32.xlu0 %v469, 127
        %v478 = vpop.permute.xlu0 %477
        %vm479 = vcmask 1039360
        %v480 = vsel %vm479, %v474, %v476
        %v481 = vsel %vm479, %v476, %v478
        %v484 = vsel %vm439, %v480, 0.0
        %v485 = vsel %vm440, %v481, 0.0
        %486 = vrot.lane.b32.xlu0 %v467, 113
        %v487 = vpop.permute.xlu0 %486
        %488 = vrot.lane.b32.xlu0 %v468, 113
        %v489 = vpop.permute.xlu0 %488
        %490 = vrot.lane.b32.xlu0 %v469, 113
        %v491 = vpop.permute.xlu0 %490
        %vm492 = vcmask 924672
        %v493 = vsel %vm492, %v487, %v489
        %v494 = vsel %vm492, %v489, %v491
        %v497 = vsel %vm419, %v493, 0.0
        %v498 = vsel %vm420, %v494, 0.0
        %499 = vrot.lane.b32.xlu0 %v467, 111
        %v500 = vpop.permute.xlu0 %499
        %501 = vrot.lane.b32.xlu0 %v468, 111
        %v502 = vpop.permute.xlu0 %501
        %503 = vrot.lane.b32.xlu0 %v469, 111
        %v504 = vpop.permute.xlu0 %503
        %vm505 = vcmask 908288
        %v506 = vsel %vm505, %v500, %v502
        %v507 = vsel %vm505, %v502, %v504
        %v510 = vsel %vm439, %v506, 0.0
        %v511 = vsel %vm440, %v507, 0.0
        %512 = vrot.lane.b32.xlu0 %v414, 16
        %v513 = vpop.permute.xlu0 %512
        %514 = vrot.lane.b32.xlu0 %v415, 16
        %v515 = vpop.permute.xlu0 %514
        %516 = vrot.lane.b32.xlu0 %v416, 16
        %v517 = vpop.permute.xlu0 %516
        %vm518 = vcmask 130048
        %v519 = vsel %vm518, %v513, %v515
        %v520 = vsel %vm518, %v515, %v517
        %523 = vrot.lane.b32.xlu0 %v467, 112
        %v524 = vpop.permute.xlu0 %523
        %525 = vrot.lane.b32.xlu0 %v468, 112
        %v526 = vpop.permute.xlu0 %525
        %527 = vrot.lane.b32.xlu0 %v469, 112
        %v528 = vpop.permute.xlu0 %527
        %vm529 = vcmask 916480
        %v530 = vsel %vm529, %v524, %v526
        %v531 = vsel %vm529, %v526, %v528
        %v534 = vpack.c.bf16 %v519, %v435
        %v535 = vpack.c.bf16 %v520, %v436
        %v536 = vpack.c.bf16 %v465, %v452
        %v537 = vpack.c.bf16 %v466, %v453
        %v538 = vpack.c.bf16 %v484, %v415
        %v539 = vpack.c.bf16 %v485, %v416
        %v540 = vpack.c.bf16 %v530, %v497
        %v541 = vpack.c.bf16 %v531, %v498
        %v542 = vpack.c.bf16 %v510, %v510
        %v543 = vpack.c.bf16 %v511, %v511
        %v544 = vld [vmem:[%s2] sm:$0xff]
        %546 = vset.pattern.permute.xlu0 0
        %547 = vperm.xlu0 %546, %v544
        %v548 = vpop.permute.xlu0 %547
        %vm550 = vcmask 588800
        %v552 = vsel %vm550, %v404, 0
        %vm554 = vcmask 1043456
        %v556 = vsel %vm554, %v542, 0
        %v559 = vsel %vm554, %v543, 0
        %561 = vmatpush.bf16.msra.mxu0 0
        %562 = vmatpush.bf16.msra.mxu0 0
        %563 = vmatpush.bf16.msra.mxu0 0
        %564 = vmatpush.bf16.msra.mxu0 %v556
        %565 = vmatpush.bf16.msra.mxu0 %v540
        %566 = vmatpush.bf16.msra.mxu0 %v538
        %567 = vmatpush.bf16.msra.mxu0 %v536
        %568 = vmatpush.bf16.msra.mxu0 %v534
        %569 = vmatmul.bf16.gmra.mxu0 %v552
        %v570 = vpop.f32.mrf.mxu0
        %v571 = vadd.f32 %v548, %v570
        %v572 = vpop.f32.mrf.mxu0
        %573 = vdwg.mxu0
        %574 = vmatpush.bf16.msra.mxu0 0
        %575 = vmatpush.bf16.msra.mxu0 0
        %576 = vmatpush.bf16.msra.mxu0 0
        %577 = vmatpush.bf16.msra.mxu0 %v559
        %578 = vmatpush.bf16.msra.mxu0 %v541
        %579 = vmatpush.bf16.msra.mxu0 %v539
        %580 = vmatpush.bf16.msra.mxu0 %v537
        %581 = vmatpush.bf16.msra.mxu0 %v535
        %582 = vmatmul.bf16.gmra.mxu0 %v552
        %v583 = vpop.f32.mrf.mxu0
        %v584 = vadd.f32 %v548, %v583
        %v585 = vpop.f32.mrf.mxu0
        %586 = vdwg.mxu0
        %587 = vst [vmem:[#allocation2 + $0x8] sm:$0xff] %v571
        %588 = vst [vmem:[#allocation2 + $0x10] sm:$0xff] %v584
        %v589 = vld [vmem:[%s3] sm:$0xf]
        %v590 = vld [vmem:[#allocation2] sm:$0xff]
        %v591 = vld [vmem:[#allocation2 + $0x8] sm:$0xff]
        %v592 = vld [vmem:[#allocation2 + $0x10] sm:$0xff]
        %596 = vrot.lane.b32.xlu0 %v590, 17
        %v597 = vpop.permute.xlu0 %596
        %598 = vrot.lane.b32.xlu0 %v591, 17
        %v599 = vpop.permute.xlu0 %598
        %600 = vrot.lane.b32.xlu0 %v592, 17
        %v601 = vpop.permute.xlu0 %600
        %v602 = vsel %vm430, %v597, %v599
        %v603 = vsel %vm430, %v599, %v601
        %v606 = vsel %vm419, %v602, 0.0
        %v607 = vsel %vm420, %v603, 0.0
        %608 = vrot.lane.b32.xlu0 %v590, 15
        %v609 = vpop.permute.xlu0 %608
        %610 = vrot.lane.b32.xlu0 %v591, 15
        %v611 = vpop.permute.xlu0 %610
        %612 = vrot.lane.b32.xlu0 %v592, 15
        %v613 = vpop.permute.xlu0 %612
        %v614 = vsel %vm447, %v609, %v611
        %v615 = vsel %vm447, %v611, %v613
        %v618 = vsel %vm439, %v614, 0.0
        %v619 = vsel %vm440, %v615, 0.0
        %620 = vrot.lane.b32.xlu0 %v590, 1
        %v621 = vpop.permute.xlu0 %620
        %622 = vrot.lane.b32.xlu0 %v591, 1
        %v623 = vpop.permute.xlu0 %622
        %624 = vrot.lane.b32.xlu0 %v592, 1
        %v625 = vpop.permute.xlu0 %624
        %v626 = vsel %vm460, %v621, %v623
        %v627 = vsel %vm460, %v623, %v625
        %v630 = vsel %vm419, %v626, 0.0
        %v631 = vsel %vm420, %v627, 0.0
        %v632 = vld [vmem:[#allocation2 + $0x8] sm:$0xff]
        %v633 = vld [vmem:[#allocation2 + $0x10] sm:$0xff]
        %v634 = vld [vmem:[#allocation2 + $0x18] sm:$0xff]
        %638 = vrot.lane.b32.xlu0 %v632, 127
        %v639 = vpop.permute.xlu0 %638
        %640 = vrot.lane.b32.xlu0 %v633, 127
        %v641 = vpop.permute.xlu0 %640
        %642 = vrot.lane.b32.xlu0 %v634, 127
        %v643 = vpop.permute.xlu0 %642
        %v644 = vsel %vm479, %v639, %v641
        %v645 = vsel %vm479, %v641, %v643
        %v648 = vsel %vm439, %v644, 0.0
        %v649 = vsel %vm440, %v645, 0.0
        %650 = vrot.lane.b32.xlu0 %v632, 113
        %v651 = vpop.permute.xlu0 %650
        %652 = vrot.lane.b32.xlu0 %v633, 113
        %v653 = vpop.permute.xlu0 %652
        %654 = vrot.lane.b32.xlu0 %v634, 113
        %v655 = vpop.permute.xlu0 %654
        %v656 = vsel %vm492, %v651, %v653
        %v657 = vsel %vm492, %v653, %v655
        %v660 = vsel %vm419, %v656, 0.0
        %v661 = vsel %vm420, %v657, 0.0
        %662 = vrot.lane.b32.xlu0 %v632, 111
        %v663 = vpop.permute.xlu0 %662
        %664 = vrot.lane.b32.xlu0 %v633, 111
        %v665 = vpop.permute.xlu0 %664
        %666 = vrot.lane.b32.xlu0 %v634, 111
        %v667 = vpop.permute.xlu0 %666
        %v668 = vsel %vm505, %v663, %v665
        %v669 = vsel %vm505, %v665, %v667
        %v672 = vsel %vm439, %v668, 0.0
        %v673 = vsel %vm440, %v669, 0.0
        %674 = vrot.lane.b32.xlu0 %v590, 16
        %v675 = vpop.permute.xlu0 %674
        %676 = vrot.lane.b32.xlu0 %v591, 16
        %v677 = vpop.permute.xlu0 %676
        %678 = vrot.lane.b32.xlu0 %v592, 16
        %v679 = vpop.permute.xlu0 %678
        %v680 = vsel %vm518, %v675, %v677
        %v681 = vsel %vm518, %v677, %v679
        %684 = vrot.lane.b32.xlu0 %v632, 112
        %v685 = vpop.permute.xlu0 %684
        %686 = vrot.lane.b32.xlu0 %v633, 112
        %v687 = vpop.permute.xlu0 %686
        %688 = vrot.lane.b32.xlu0 %v634, 112
        %v689 = vpop.permute.xlu0 %688
        %v690 = vsel %vm529, %v685, %v687
        %v691 = vsel %vm529, %v687, %v689
        %v694 = vpack.c.bf16 %v680, %v606
        %v695 = vpack.c.bf16 %v681, %v607
        %v696 = vpack.c.bf16 %v630, %v618
        %v697 = vpack.c.bf16 %v631, %v619
        %v698 = vpack.c.bf16 %v648, %v591
        %v699 = vpack.c.bf16 %v649, %v592
        %v700 = vpack.c.bf16 %v690, %v660
        %v701 = vpack.c.bf16 %v691, %v661
        %v702 = vpack.c.bf16 %v672, %v672
        %v703 = vpack.c.bf16 %v673, %v673
        %v704 = vld [vmem:[%s4] sm:$0xff]
        %706 = vset.pattern.permute.xlu0 0
        %707 = vperm.xlu0 %706, %v704
        %v708 = vpop.permute.xlu0 %707
        %v711 = vsel %vm550, %v589, 0
        %v714 = vsel %vm554, %v702, 0
        %v717 = vsel %vm554, %v703, 0
        %719 = vmatpush.bf16.msra.mxu0 0
        %720 = vmatpush.bf16.msra.mxu0 0
        %721 = vmatpush.bf16.msra.mxu0 0
        %722 = vmatpush.bf16.msra.mxu0 %v714
        %723 = vmatpush.bf16.msra.mxu0 %v700
        %724 = vmatpush.bf16.msra.mxu0 %v698
        %725 = vmatpush.bf16.msra.mxu0 %v696
        %726 = vmatpush.bf16.msra.mxu0 %v694
        %727 = vmatmul.bf16.gmra.mxu0 %v711
        %v728 = vpop.f32.mrf.mxu0
        %v729 = vadd.f32 %v708, %v728
        %v730 = vpop.f32.mrf.mxu0
        %731 = vdwg.mxu0
        %732 = vmatpush.bf16.msra.mxu0 0
        %733 = vmatpush.bf16.msra.mxu0 0
        %734 = vmatpush.bf16.msra.mxu0 0
        %735 = vmatpush.bf16.msra.mxu0 %v717
        %736 = vmatpush.bf16.msra.mxu0 %v701
        %737 = vmatpush.bf16.msra.mxu0 %v699
        %738 = vmatpush.bf16.msra.mxu0 %v697
        %739 = vmatpush.bf16.msra.mxu0 %v695
        %740 = vmatmul.bf16.gmra.mxu0 %v711
        %v741 = vpop.f32.mrf.mxu0
        %v742 = vadd.f32 %v708, %v741
        %v743 = vpop.f32.mrf.mxu0
        %744 = vdwg.mxu0
        %v745 = vld [vmem:[#allocation7] sm:$0xff]
        %v746 = vld [vmem:[#allocation7 + $0x8] sm:$0xff]
        %v747 = vld [vmem:[#allocation7 + $0x10] sm:$0xff]
        %v748 = vld [vmem:[#allocation7 + $0x18] sm:$0xff]
        %v749 = vld [vmem:[#allocation7 + $0x20] sm:$0xff]
        %v750 = vld [vmem:[#allocation7 + $0x28] sm:$0xff]
        %v751 = vld [vmem:[#allocation7 + $0x30] sm:$0xff]
        %v752 = vld [vmem:[#allocation7 + $0x38] sm:$0xff]
        %v753 = vld [vmem:[#allocation7 + $0x40] sm:$0xff]
        %v754 = vld [vmem:[#allocation7 + $0x48] sm:$0xff]
        %v755 = vld [vmem:[#allocation7 + $0x50] sm:$0xff]
        %v756 = vld [vmem:[#allocation7 + $0x58] sm:$0xff]
        %v757 = vld [vmem:[#allocation7 + $0x60] sm:$0xff]
        %v758 = vld [vmem:[#allocation7 + $0x68] sm:$0xff]
        %v759 = vld [vmem:[#allocation7 + $0x70] sm:$0xff]
        %v760 = vld [vmem:[#allocation7 + $0x78] sm:$0xff]
        %v761 = vld [vmem:[#allocation7 + $0x80] sm:$0xff]
        %v762 = vld [vmem:[#allocation7 + $0x88] sm:$0xff]
        %v763 = vld [vmem:[#allocation7 + $0x90] sm:$0xff]
        %v764 = vld [vmem:[#allocation7 + $0x98] sm:$0xff]
        %v765 = vld [vmem:[#allocation7 + $0xa0] sm:$0xff]
        %v766 = vld [vmem:[#allocation7 + $0xa8] sm:$0xff]
        %v767 = vld [vmem:[#allocation7 + $0xb0] sm:$0xff]
        %v768 = vld [vmem:[#allocation7 + $0xb8] sm:$0xff]
        %v769 = vld [vmem:[#allocation7 + $0xc0] sm:$0xff]
        %v770 = vld [vmem:[#allocation7 + $0xc8] sm:$0xff]
        %v771 = vld [vmem:[#allocation7 + $0xd0] sm:$0xff]
        %v772 = vld [vmem:[#allocation7 + $0xd8] sm:$0xff]
        %v773 = vld [vmem:[#allocation7 + $0xe0] sm:$0xff]
        %v774 = vld [vmem:[#allocation7 + $0xe8] sm:$0xff]
        %v775 = vld [vmem:[#allocation7 + $0xf0] sm:$0xff]
        %v776 = vld [vmem:[#allocation7 + $0xf8] sm:$0xff]
        %v777 = vld [vmem:[#allocation7 + $0x100] sm:$0xff]
        %v778 = vld [vmem:[#allocation7 + $0x108] sm:$0xff]
        %v779 = vld [vmem:[#allocation7 + $0x110] sm:$0xff]
        %v780 = vld [vmem:[#allocation7 + $0x118] sm:$0xff]
        %v781 = vld [vmem:[#allocation7 + $0x120] sm:$0xff]
        %v782 = vld [vmem:[#allocation7 + $0x128] sm:$0xff]
        %v783 = vld [vmem:[#allocation7 + $0x130] sm:$0xff]
        %v784 = vld [vmem:[#allocation7 + $0x138] sm:$0xff]
        %v785 = vld [vmem:[#allocation7 + $0x140] sm:$0xff]
        %v786 = vld [vmem:[#allocation7 + $0x148] sm:$0xff]
        %v787 = vld [vmem:[#allocation7 + $0x150] sm:$0xff]
        %v788 = vld [vmem:[#allocation7 + $0x158] sm:$0xff]
        %v789 = vld [vmem:[#allocation7 + $0x160] sm:$0xff]
        %v790 = vld [vmem:[#allocation7 + $0x168] sm:$0xff]
        %v791 = vld [vmem:[#allocation7 + $0x170] sm:$0xff]
        %v792 = vld [vmem:[#allocation7 + $0x178] sm:$0xff]
        %v793 = vld [vmem:[#allocation7 + $0x180] sm:$0xff]
        %v794 = vld [vmem:[#allocation7 + $0x188] sm:$0xff]
        %v795 = vld [vmem:[#allocation7 + $0x190] sm:$0xff]
        %v796 = vld [vmem:[#allocation7 + $0x198] sm:$0xff]
        %v797 = vld [vmem:[#allocation7 + $0x1a0] sm:$0xff]
        %v798 = vld [vmem:[#allocation7 + $0x1a8] sm:$0xff]
        %v799 = vld [vmem:[#allocation7 + $0x1b0] sm:$0xff]
        %v800 = vld [vmem:[#allocation7 + $0x1b8] sm:$0xff]
        %v801 = vld [vmem:[#allocation7 + $0x1c0] sm:$0xff]
        %v802 = vld [vmem:[#allocation7 + $0x1c8] sm:$0xff]
        %v803 = vld [vmem:[#allocation7 + $0x1d0] sm:$0xff]
        %v804 = vld [vmem:[#allocation7 + $0x1d8] sm:$0xff]
        %v805 = vld [vmem:[#allocation7 + $0x1e0] sm:$0xff]
        %v806 = vld [vmem:[#allocation7 + $0x1e8] sm:$0xff]
        %v807 = vld [vmem:[#allocation7 + $0x1f0] sm:$0xff]
        %v808 = vld [vmem:[#allocation7 + $0x1f8] sm:$0xff]
        %v809 = vld [vmem:[#allocation7 + $0x200] sm:$0xff]
        %v810 = vld [vmem:[#allocation7 + $0x208] sm:$0xff]
        %v811 = vld [vmem:[#allocation7 + $0x210] sm:$0xff]
        %v812 = vld [vmem:[#allocation7 + $0x218] sm:$0xff]
        %v813 = vld [vmem:[#allocation7 + $0x220] sm:$0xff]
        %v814 = vld [vmem:[#allocation7 + $0x228] sm:$0xff]
        %v815 = vld [vmem:[#allocation7 + $0x230] sm:$0xff]
        %v816 = vld [vmem:[#allocation7 + $0x238] sm:$0xff]
        %v817 = vld [vmem:[#allocation7 + $0x240] sm:$0xff]
        %v818 = vld [vmem:[#allocation7 + $0x248] sm:$0xff]
        %v819 = vld [vmem:[#allocation7 + $0x250] sm:$0xff]
        %v820 = vld [vmem:[#allocation7 + $0x258] sm:$0xff]
        %v821 = vld [vmem:[#allocation7 + $0x260] sm:$0xff]
        %v822 = vld [vmem:[#allocation7 + $0x268] sm:$0xff]
        %v823 = vld [vmem:[#allocation7 + $0x270] sm:$0xff]
        %v824 = vld [vmem:[#allocation7 + $0x278] sm:$0xff]
        %v825 = vld [vmem:[#allocation7 + $0x280] sm:$0xff]
        %v826 = vld [vmem:[#allocation7 + $0x288] sm:$0xff]
        %v827 = vld [vmem:[#allocation7 + $0x290] sm:$0xff]
        %v828 = vld [vmem:[#allocation7 + $0x298] sm:$0xff]
        %v829 = vld [vmem:[#allocation7 + $0x2a0] sm:$0xff]
        %v830 = vld [vmem:[#allocation7 + $0x2a8] sm:$0xff]
        %v831 = vld [vmem:[#allocation7 + $0x2b0] sm:$0xff]
        %v832 = vld [vmem:[#allocation7 + $0x2b8] sm:$0xff]
        %v833 = vld [vmem:[#allocation7 + $0x2c0] sm:$0xff]
        %v834 = vld [vmem:[#allocation7 + $0x2c8] sm:$0xff]
        %v835 = vld [vmem:[#allocation7 + $0x2d0] sm:$0xff]
        %v836 = vld [vmem:[#allocation7 + $0x2d8] sm:$0xff]
        %v837 = vld [vmem:[#allocation7 + $0x2e0] sm:$0xff]
        %v838 = vld [vmem:[#allocation7 + $0x2e8] sm:$0xff]
        %v839 = vld [vmem:[#allocation7 + $0x2f0] sm:$0xff]
        %v840 = vld [vmem:[#allocation7 + $0x2f8] sm:$0xff]
        %v841 = vld [vmem:[#allocation7 + $0x300] sm:$0xff]
        %v842 = vld [vmem:[#allocation7 + $0x308] sm:$0xff]
        %v843 = vld [vmem:[#allocation7 + $0x310] sm:$0xff]
        %v844 = vld [vmem:[#allocation7 + $0x318] sm:$0xff]
        %v845 = vld [vmem:[#allocation7 + $0x320] sm:$0xff]
        %v846 = vld [vmem:[#allocation7 + $0x328] sm:$0xff]
        %v847 = vld [vmem:[#allocation7 + $0x330] sm:$0xff]
        %v848 = vld [vmem:[#allocation7 + $0x338] sm:$0xff]
        %v849 = vld [vmem:[#allocation7 + $0x340] sm:$0xff]
        %v850 = vld [vmem:[#allocation7 + $0x348] sm:$0xff]
        %v851 = vld [vmem:[#allocation7 + $0x350] sm:$0xff]
        %v852 = vld [vmem:[#allocation7 + $0x358] sm:$0xff]
        %v853 = vld [vmem:[#allocation7 + $0x360] sm:$0xff]
        %v854 = vld [vmem:[#allocation7 + $0x368] sm:$0xff]
        %v855 = vld [vmem:[#allocation7 + $0x370] sm:$0xff]
        %v856 = vld [vmem:[#allocation7 + $0x378] sm:$0xff]
        %v857 = vld [vmem:[#allocation7 + $0x380] sm:$0xff]
        %v858 = vld [vmem:[#allocation7 + $0x388] sm:$0xff]
        %v859 = vld [vmem:[#allocation7 + $0x390] sm:$0xff]
        %v860 = vld [vmem:[#allocation7 + $0x398] sm:$0xff]
        %v861 = vld [vmem:[#allocation7 + $0x3a0] sm:$0xff]
        %v862 = vld [vmem:[#allocation7 + $0x3a8] sm:$0xff]
        %v863 = vld [vmem:[#allocation7 + $0x3b0] sm:$0xff]
        %v864 = vld [vmem:[#allocation7 + $0x3b8] sm:$0xff]
        %v865 = vld [vmem:[#allocation7 + $0x3c0] sm:$0xff]
        %v866 = vld [vmem:[#allocation7 + $0x3c8] sm:$0xff]
        %v867 = vld [vmem:[#allocation7 + $0x3d0] sm:$0xff]
        %v868 = vld [vmem:[#allocation7 + $0x3d8] sm:$0xff]
        %v869 = vld [vmem:[#allocation7 + $0x3e0] sm:$0xff]
        %v870 = vld [vmem:[#allocation7 + $0x3e8] sm:$0xff]
        %v871 = vld [vmem:[#allocation7 + $0x3f0] sm:$0xff]
        %v872 = vld [vmem:[#allocation7 + $0x3f8] sm:$0xff]
        %v873 = vpack.c.bf16 %v729, %v729
        %v874 = vpack.c.bf16 %v742, %v742
        %v1003 = vunpack.c.l.b16 %v745
        %v1004 = vunpack.c.h.b16 %v745
        %v1005 = vunpack.c.l.b16 %v746
        %v1006 = vunpack.c.h.b16 %v746
        %v1007 = vunpack.c.l.b16 %v747
        %v1008 = vunpack.c.h.b16 %v747
        %v1009 = vunpack.c.l.b16 %v748
        %v1010 = vunpack.c.h.b16 %v748
        %v1011 = vunpack.c.l.b16 %v749
        %v1012 = vunpack.c.h.b16 %v749
        %v1013 = vunpack.c.l.b16 %v750
        %v1014 = vunpack.c.h.b16 %v750
        %v1015 = vunpack.c.l.b16 %v751
        %v1016 = vunpack.c.h.b16 %v751
        %v1017 = vunpack.c.l.b16 %v752
        %v1018 = vunpack.c.h.b16 %v752
        %v1019 = vunpack.c.l.b16 %v753
        %v1020 = vunpack.c.h.b16 %v753
        %v1021 = vunpack.c.l.b16 %v754
        %v1022 = vunpack.c.h.b16 %v754
        %v1023 = vunpack.c.l.b16 %v755
        %v1024 = vunpack.c.h.b16 %v755
        %v1025 = vunpack.c.l.b16 %v756
        %v1026 = vunpack.c.h.b16 %v756
        %v1027 = vunpack.c.l.b16 %v757
        %v1028 = vunpack.c.h.b16 %v757
        %v1029 = vunpack.c.l.b16 %v758
        %v1030 = vunpack.c.h.b16 %v758
        %v1031 = vunpack.c.l.b16 %v759
        %v1032 = vunpack.c.h.b16 %v759
        %v1033 = vunpack.c.l.b16 %v760
        %v1034 = vunpack.c.h.b16 %v760
        %v1035 = vunpack.c.l.b16 %v761
        %v1036 = vunpack.c.h.b16 %v761
        %v1037 = vunpack.c.l.b16 %v762
        %v1038 = vunpack.c.h.b16 %v762
        %v1039 = vunpack.c.l.b16 %v763
        %v1040 = vunpack.c.h.b16 %v763
        %v1041 = vunpack.c.l.b16 %v764
        %v1042 = vunpack.c.h.b16 %v764
        %v1043 = vunpack.c.l.b16 %v765
        %v1044 = vunpack.c.h.b16 %v765
        %v1045 = vunpack.c.l.b16 %v766
        %v1046 = vunpack.c.h.b16 %v766
        %v1047 = vunpack.c.l.b16 %v767
        %v1048 = vunpack.c.h.b16 %v767
        %v1049 = vunpack.c.l.b16 %v768
        %v1050 = vunpack.c.h.b16 %v768
        %v1051 = vunpack.c.l.b16 %v769
        %v1052 = vunpack.c.h.b16 %v769
        %v1053 = vunpack.c.l.b16 %v770
        %v1054 = vunpack.c.h.b16 %v770
        %v1055 = vunpack.c.l.b16 %v771
        %v1056 = vunpack.c.h.b16 %v771
        %v1057 = vunpack.c.l.b16 %v772
        %v1058 = vunpack.c.h.b16 %v772
        %v1059 = vunpack.c.l.b16 %v773
        %v1060 = vunpack.c.h.b16 %v773
        %v1061 = vunpack.c.l.b16 %v774
        %v1062 = vunpack.c.h.b16 %v774
        %v1063 = vunpack.c.l.b16 %v775
        %v1064 = vunpack.c.h.b16 %v775
        %v1065 = vunpack.c.l.b16 %v776
        %v1066 = vunpack.c.h.b16 %v776
        %v1067 = vunpack.c.l.b16 %v777
        %v1068 = vunpack.c.h.b16 %v777
        %v1069 = vunpack.c.l.b16 %v778
        %v1070 = vunpack.c.h.b16 %v778
        %v1071 = vunpack.c.l.b16 %v779
        %v1072 = vunpack.c.h.b16 %v779
        %v1073 = vunpack.c.l.b16 %v780
        %v1074 = vunpack.c.h.b16 %v780
        %v1075 = vunpack.c.l.b16 %v781
        %v1076 = vunpack.c.h.b16 %v781
        %v1077 = vunpack.c.l.b16 %v782
        %v1078 = vunpack.c.h.b16 %v782
        %v1079 = vunpack.c.l.b16 %v783
        %v1080 = vunpack.c.h.b16 %v783
        %v1081 = vunpack.c.l.b16 %v784
        %v1082 = vunpack.c.h.b16 %v784
        %v1083 = vunpack.c.l.b16 %v785
        %v1084 = vunpack.c.h.b16 %v785
        %v1085 = vunpack.c.l.b16 %v786
        %v1086 = vunpack.c.h.b16 %v786
        %v1087 = vunpack.c.l.b16 %v787
        %v1088 = vunpack.c.h.b16 %v787
        %v1089 = vunpack.c.l.b16 %v788
        %v1090 = vunpack.c.h.b16 %v788
        %v1091 = vunpack.c.l.b16 %v789
        %v1092 = vunpack.c.h.b16 %v789
        %v1093 = vunpack.c.l.b16 %v790
        %v1094 = vunpack.c.h.b16 %v790
        %v1095 = vunpack.c.l.b16 %v791
        %v1096 = vunpack.c.h.b16 %v791
        %v1097 = vunpack.c.l.b16 %v792
        %v1098 = vunpack.c.h.b16 %v792
        %v1099 = vunpack.c.l.b16 %v793
        %v1100 = vunpack.c.h.b16 %v793
        %v1101 = vunpack.c.l.b16 %v794
        %v1102 = vunpack.c.h.b16 %v794
        %v1103 = vunpack.c.l.b16 %v795
        %v1104 = vunpack.c.h.b16 %v795
        %v1105 = vunpack.c.l.b16 %v796
        %v1106 = vunpack.c.h.b16 %v796
        %v1107 = vunpack.c.l.b16 %v797
        %v1108 = vunpack.c.h.b16 %v797
        %v1109 = vunpack.c.l.b16 %v798
        %v1110 = vunpack.c.h.b16 %v798
        %v1111 = vunpack.c.l.b16 %v799
        %v1112 = vunpack.c.h.b16 %v799
        %v1113 = vunpack.c.l.b16 %v800
        %v1114 = vunpack.c.h.b16 %v800
        %v1115 = vunpack.c.l.b16 %v801
        %v1116 = vunpack.c.h.b16 %v801
        %v1117 = vunpack.c.l.b16 %v802
        %v1118 = vunpack.c.h.b16 %v802
        %v1119 = vunpack.c.l.b16 %v803
        %v1120 = vunpack.c.h.b16 %v803
        %v1121 = vunpack.c.l.b16 %v804
        %v1122 = vunpack.c.h.b16 %v804
        %v1123 = vunpack.c.l.b16 %v805
        %v1124 = vunpack.c.h.b16 %v805
        %v1125 = vunpack.c.l.b16 %v806
        %v1126 = vunpack.c.h.b16 %v806
        %v1127 = vunpack.c.l.b16 %v807
        %v1128 = vunpack.c.h.b16 %v807
        %v1129 = vunpack.c.l.b16 %v808
        %v1130 = vunpack.c.h.b16 %v808
        %v1131 = vunpack.c.l.b16 %v809
        %v1132 = vunpack.c.h.b16 %v809
        %v1133 = vunpack.c.l.b16 %v810
        %v1134 = vunpack.c.h.b16 %v810
        %v1135 = vunpack.c.l.b16 %v811
        %v1136 = vunpack.c.h.b16 %v811
        %v1137 = vunpack.c.l.b16 %v812
        %v1138 = vunpack.c.h.b16 %v812
        %v1139 = vunpack.c.l.b16 %v813
        %v1140 = vunpack.c.h.b16 %v813
        %v1141 = vunpack.c.l.b16 %v814
        %v1142 = vunpack.c.h.b16 %v814
        %v1143 = vunpack.c.l.b16 %v815
        %v1144 = vunpack.c.h.b16 %v815
        %v1145 = vunpack.c.l.b16 %v816
        %v1146 = vunpack.c.h.b16 %v816
        %v1147 = vunpack.c.l.b16 %v817
        %v1148 = vunpack.c.h.b16 %v817
        %v1149 = vunpack.c.l.b16 %v818
        %v1150 = vunpack.c.h.b16 %v818
        %v1151 = vunpack.c.l.b16 %v819
        %v1152 = vunpack.c.h.b16 %v819
        %v1153 = vunpack.c.l.b16 %v820
        %v1154 = vunpack.c.h.b16 %v820
        %v1155 = vunpack.c.l.b16 %v821
        %v1156 = vunpack.c.h.b16 %v821
        %v1157 = vunpack.c.l.b16 %v822
        %v1158 = vunpack.c.h.b16 %v822
        %v1159 = vunpack.c.l.b16 %v823
        %v1160 = vunpack.c.h.b16 %v823
        %v1161 = vunpack.c.l.b16 %v824
        %v1162 = vunpack.c.h.b16 %v824
        %v1163 = vunpack.c.l.b16 %v825
        %v1164 = vunpack.c.h.b16 %v825
        %v1165 = vunpack.c.l.b16 %v826
        %v1166 = vunpack.c.h.b16 %v826
        %v1167 = vunpack.c.l.b16 %v827
        %v1168 = vunpack.c.h.b16 %v827
        %v1169 = vunpack.c.l.b16 %v828
        %v1170 = vunpack.c.h.b16 %v828
        %v1171 = vunpack.c.l.b16 %v829
        %v1172 = vunpack.c.h.b16 %v829
        %v1173 = vunpack.c.l.b16 %v830
        %v1174 = vunpack.c.h.b16 %v830
        %v1175 = vunpack.c.l.b16 %v831
        %v1176 = vunpack.c.h.b16 %v831
        %v1177 = vunpack.c.l.b16 %v832
        %v1178 = vunpack.c.h.b16 %v832
        %v1179 = vunpack.c.l.b16 %v833
        %v1180 = vunpack.c.h.b16 %v833
        %v1181 = vunpack.c.l.b16 %v834
        %v1182 = vunpack.c.h.b16 %v834
        %v1183 = vunpack.c.l.b16 %v835
        %v1184 = vunpack.c.h.b16 %v835
        %v1185 = vunpack.c.l.b16 %v836
        %v1186 = vunpack.c.h.b16 %v836
        %v1187 = vunpack.c.l.b16 %v837
        %v1188 = vunpack.c.h.b16 %v837
        %v1189 = vunpack.c.l.b16 %v838
        %v1190 = vunpack.c.h.b16 %v838
        %v1191 = vunpack.c.l.b16 %v839
        %v1192 = vunpack.c.h.b16 %v839
        %v1193 = vunpack.c.l.b16 %v840
        %v1194 = vunpack.c.h.b16 %v840
        %v1195 = vunpack.c.l.b16 %v841
        %v1196 = vunpack.c.h.b16 %v841
        %v1197 = vunpack.c.l.b16 %v842
        %v1198 = vunpack.c.h.b16 %v842
        %v1199 = vunpack.c.l.b16 %v843
        %v1200 = vunpack.c.h.b16 %v843
        %v1201 = vunpack.c.l.b16 %v844
        %v1202 = vunpack.c.h.b16 %v844
        %v1203 = vunpack.c.l.b16 %v845
        %v1204 = vunpack.c.h.b16 %v845
        %v1205 = vunpack.c.l.b16 %v846
        %v1206 = vunpack.c.h.b16 %v846
        %v1207 = vunpack.c.l.b16 %v847
        %v1208 = vunpack.c.h.b16 %v847
        %v1209 = vunpack.c.l.b16 %v848
        %v1210 = vunpack.c.h.b16 %v848
        %v1211 = vunpack.c.l.b16 %v849
        %v1212 = vunpack.c.h.b16 %v849
        %v1213 = vunpack.c.l.b16 %v850
        %v1214 = vunpack.c.h.b16 %v850
        %v1215 = vunpack.c.l.b16 %v851
        %v1216 = vunpack.c.h.b16 %v851
        %v1217 = vunpack.c.l.b16 %v852
        %v1218 = vunpack.c.h.b16 %v852
        %v1219 = vunpack.c.l.b16 %v853
        %v1220 = vunpack.c.h.b16 %v853
        %v1221 = vunpack.c.l.b16 %v854
        %v1222 = vunpack.c.h.b16 %v854
        %v1223 = vunpack.c.l.b16 %v855
        %v1224 = vunpack.c.h.b16 %v855
        %v1225 = vunpack.c.l.b16 %v856
        %v1226 = vunpack.c.h.b16 %v856
        %v1227 = vunpack.c.l.b16 %v857
        %v1228 = vunpack.c.h.b16 %v857
        %v1229 = vunpack.c.l.b16 %v858
        %v1230 = vunpack.c.h.b16 %v858
        %v1231 = vunpack.c.l.b16 %v859
        %v1232 = vunpack.c.h.b16 %v859
        %v1233 = vunpack.c.l.b16 %v860
        %v1234 = vunpack.c.h.b16 %v860
        %v1235 = vunpack.c.l.b16 %v861
        %v1236 = vunpack.c.h.b16 %v861
        %v1237 = vunpack.c.l.b16 %v862
        %v1238 = vunpack.c.h.b16 %v862
        %v1239 = vunpack.c.l.b16 %v863
        %v1240 = vunpack.c.h.b16 %v863
        %v1241 = vunpack.c.l.b16 %v864
        %v1242 = vunpack.c.h.b16 %v864
        %v1243 = vunpack.c.l.b16 %v865
        %v1244 = vunpack.c.h.b16 %v865
        %v1245 = vunpack.c.l.b16 %v866
        %v1246 = vunpack.c.h.b16 %v866
        %v1247 = vunpack.c.l.b16 %v867
        %v1248 = vunpack.c.h.b16 %v867
        %v1249 = vunpack.c.l.b16 %v868
        %v1250 = vunpack.c.h.b16 %v868
        %v1251 = vunpack.c.l.b16 %v869
        %v1252 = vunpack.c.h.b16 %v869
        %v1253 = vunpack.c.l.b16 %v870
        %v1254 = vunpack.c.h.b16 %v870
        %v1255 = vunpack.c.l.b16 %v871
        %v1256 = vunpack.c.h.b16 %v871
        %v1257 = vunpack.c.l.b16 %v872
        %v1258 = vunpack.c.h.b16 %v872
        %v1259 = vpack.c.b16 %v1011, %v1003
        %v1260 = vpack.c.b16 %v1012, %v1004
        %v1261 = vpack.c.b16 %v1013, %v1005
        %v1262 = vpack.c.b16 %v1014, %v1006
        %v1263 = vpack.c.b16 %v1015, %v1007
        %v1264 = vpack.c.b16 %v1016, %v1008
        %v1265 = vpack.c.b16 %v1017, %v1009
        %v1266 = vpack.c.b16 %v1018, %v1010
        %v1267 = vpack.c.b16 %v1027, %v1019
        %v1268 = vpack.c.b16 %v1028, %v1020
        %v1269 = vpack.c.b16 %v1029, %v1021
        %v1270 = vpack.c.b16 %v1030, %v1022
        %v1271 = vpack.c.b16 %v1031, %v1023
        %v1272 = vpack.c.b16 %v1032, %v1024
        %v1273 = vpack.c.b16 %v1033, %v1025
        %v1274 = vpack.c.b16 %v1034, %v1026
        %v1275 = vpack.c.b16 %v1043, %v1035
        %v1276 = vpack.c.b16 %v1044, %v1036
        %v1277 = vpack.c.b16 %v1045, %v1037
        %v1278 = vpack.c.b16 %v1046, %v1038
        %v1279 = vpack.c.b16 %v1047, %v1039
        %v1280 = vpack.c.b16 %v1048, %v1040
        %v1281 = vpack.c.b16 %v1049, %v1041
        %v1282 = vpack.c.b16 %v1050, %v1042
        %v1283 = vpack.c.b16 %v1059, %v1051
        %v1284 = vpack.c.b16 %v1060, %v1052
        %v1285 = vpack.c.b16 %v1061, %v1053
        %v1286 = vpack.c.b16 %v1062, %v1054
        %v1287 = vpack.c.b16 %v1063, %v1055
        %v1288 = vpack.c.b16 %v1064, %v1056
        %v1289 = vpack.c.b16 %v1065, %v1057
        %v1290 = vpack.c.b16 %v1066, %v1058
        %v1291 = vpack.c.b16 %v1075, %v1067
        %v1292 = vpack.c.b16 %v1076, %v1068
        %v1293 = vpack.c.b16 %v1077, %v1069
        %v1294 = vpack.c.b16 %v1078, %v1070
        %v1295 = vpack.c.b16 %v1079, %v1071
        %v1296 = vpack.c.b16 %v1080, %v1072
        %v1297 = vpack.c.b16 %v1081, %v1073
        %v1298 = vpack.c.b16 %v1082, %v1074
        %v1299 = vpack.c.b16 %v1091, %v1083
        %v1300 = vpack.c.b16 %v1092, %v1084
        %v1301 = vpack.c.b16 %v1093, %v1085
        %v1302 = vpack.c.b16 %v1094, %v1086
        %v1303 = vpack.c.b16 %v1095, %v1087
        %v1304 = vpack.c.b16 %v1096, %v1088
        %v1305 = vpack.c.b16 %v1097, %v1089
        %v1306 = vpack.c.b16 %v1098, %v1090
        %v1307 = vpack.c.b16 %v1107, %v1099
        %v1308 = vpack.c.b16 %v1108, %v1100
        %v1309 = vpack.c.b16 %v1109, %v1101
        %v1310 = vpack.c.b16 %v1110, %v1102
        %v1311 = vpack.c.b16 %v1111, %v1103
        %v1312 = vpack.c.b16 %v1112, %v1104
        %v1313 = vpack.c.b16 %v1113, %v1105
        %v1314 = vpack.c.b16 %v1114, %v1106
        %v1315 = vpack.c.b16 %v1123, %v1115
        %v1316 = vpack.c.b16 %v1124, %v1116
        %v1317 = vpack.c.b16 %v1125, %v1117
        %v1318 = vpack.c.b16 %v1126, %v1118
        %v1319 = vpack.c.b16 %v1127, %v1119
        %v1320 = vpack.c.b16 %v1128, %v1120
        %v1321 = vpack.c.b16 %v1129, %v1121
        %v1322 = vpack.c.b16 %v1130, %v1122
        %v1323 = vpack.c.b16 %v1139, %v1131
        %v1324 = vpack.c.b16 %v1140, %v1132
        %v1325 = vpack.c.b16 %v1141, %v1133
        %v1326 = vpack.c.b16 %v1142, %v1134
        %v1327 = vpack.c.b16 %v1143, %v1135
        %v1328 = vpack.c.b16 %v1144, %v1136
        %v1329 = vpack.c.b16 %v1145, %v1137
        %v1330 = vpack.c.b16 %v1146, %v1138
        %v1331 = vpack.c.b16 %v1155, %v1147
        %v1332 = vpack.c.b16 %v1156, %v1148
        %v1333 = vpack.c.b16 %v1157, %v1149
        %v1334 = vpack.c.b16 %v1158, %v1150
        %v1335 = vpack.c.b16 %v1159, %v1151
        %v1336 = vpack.c.b16 %v1160, %v1152
        %v1337 = vpack.c.b16 %v1161, %v1153
        %v1338 = vpack.c.b16 %v1162, %v1154
        %v1339 = vpack.c.b16 %v1171, %v1163
        %v1340 = vpack.c.b16 %v1172, %v1164
        %v1341 = vpack.c.b16 %v1173, %v1165
        %v1342 = vpack.c.b16 %v1174, %v1166
        %v1343 = vpack.c.b16 %v1175, %v1167
        %v1344 = vpack.c.b16 %v1176, %v1168
        %v1345 = vpack.c.b16 %v1177, %v1169
        %v1346 = vpack.c.b16 %v1178, %v1170
        %v1347 = vpack.c.b16 %v1187, %v1179
        %v1348 = vpack.c.b16 %v1188, %v1180
        %v1349 = vpack.c.b16 %v1189, %v1181
        %v1350 = vpack.c.b16 %v1190, %v1182
        %v1351 = vpack.c.b16 %v1191, %v1183
        %v1352 = vpack.c.b16 %v1192, %v1184
        %v1353 = vpack.c.b16 %v1193, %v1185
        %v1354 = vpack.c.b16 %v1194, %v1186
        %v1355 = vpack.c.b16 %v1203, %v1195
        %v1356 = vpack.c.b16 %v1204, %v1196
        %v1357 = vpack.c.b16 %v1205, %v1197
        %v1358 = vpack.c.b16 %v1206, %v1198
        %v1359 = vpack.c.b16 %v1207, %v1199
        %v1360 = vpack.c.b16 %v1208, %v1200
        %v1361 = vpack.c.b16 %v1209, %v1201
        %v1362 = vpack.c.b16 %v1210, %v1202
        %v1363 = vpack.c.b16 %v1219, %v1211
        %v1364 = vpack.c.b16 %v1220, %v1212
        %v1365 = vpack.c.b16 %v1221, %v1213
        %v1366 = vpack.c.b16 %v1222, %v1214
        %v1367 = vpack.c.b16 %v1223, %v1215
        %v1368 = vpack.c.b16 %v1224, %v1216
        %v1369 = vpack.c.b16 %v1225, %v1217
        %v1370 = vpack.c.b16 %v1226, %v1218
        %v1371 = vpack.c.b16 %v1235, %v1227
        %v1372 = vpack.c.b16 %v1236, %v1228
        %v1373 = vpack.c.b16 %v1237, %v1229
        %v1374 = vpack.c.b16 %v1238, %v1230
        %v1375 = vpack.c.b16 %v1239, %v1231
        %v1376 = vpack.c.b16 %v1240, %v1232
        %v1377 = vpack.c.b16 %v1241, %v1233
        %v1378 = vpack.c.b16 %v1242, %v1234
        %v1379 = vpack.c.b16 %v1251, %v1243
        %v1380 = vpack.c.b16 %v1252, %v1244
        %v1381 = vpack.c.b16 %v1253, %v1245
        %v1382 = vpack.c.b16 %v1254, %v1246
        %v1383 = vpack.c.b16 %v1255, %v1247
        %v1384 = vpack.c.b16 %v1256, %v1248
        %v1385 = vpack.c.b16 %v1257, %v1249
        %v1386 = vpack.c.b16 %v1258, %v1250
        %1515 = vmatpush.bf16.msra.mxu0 %v1315
        %1516 = vmatpush.bf16.msra.mxu0 %v1307
        %1517 = vmatpush.bf16.msra.mxu0 %v1299
        %1518 = vmatpush.bf16.msra.mxu0 %v1291
        %1519 = vmatpush.bf16.msra.mxu0 %v1283
        %1520 = vmatpush.bf16.msra.mxu0 %v1275
        %1521 = vmatpush.bf16.msra.mxu0 %v1267
        %1522 = vmatpush.bf16.msra.mxu0 %v1259
        %1523 = vmatmul.bf16.gmra.mxu0 %v873
        %v1524 = vpop.f32.mrf.mxu0
        %v1525 = vadd.f32 0.0, %v1524
        %v1526 = vpop.f32.mrf.mxu0
        %1527 = vdwg.mxu0
        %1528 = vmatpush.bf16.msra.mxu0 %v1379
        %1529 = vmatpush.bf16.msra.mxu0 %v1371
        %1530 = vmatpush.bf16.msra.mxu0 %v1363
        %1531 = vmatpush.bf16.msra.mxu0 %v1355
        %1532 = vmatpush.bf16.msra.mxu0 %v1347
        %1533 = vmatpush.bf16.msra.mxu0 %v1339
        %1534 = vmatpush.bf16.msra.mxu0 %v1331
        %1535 = vmatpush.bf16.msra.mxu0 %v1323
        %1536 = vmatmul.bf16.gmra.mxu0 %v874
        %v1537 = vpop.f32.mrf.mxu0
        %v1538 = vadd.f32 %v1525, %v1537
        %v1539 = vpop.f32.mrf.mxu0
        %1540 = vdwg.mxu0
        %1541 = vmatpush.bf16.msra.mxu0 %v1316
        %1542 = vmatpush.bf16.msra.mxu0 %v1308
        %1543 = vmatpush.bf16.msra.mxu0 %v1300
        %1544 = vmatpush.bf16.msra.mxu0 %v1292
        %1545 = vmatpush.bf16.msra.mxu0 %v1284
        %1546 = vmatpush.bf16.msra.mxu0 %v1276
        %1547 = vmatpush.bf16.msra.mxu0 %v1268
        %1548 = vmatpush.bf16.msra.mxu0 %v1260
        %1549 = vmatmul.bf16.gmra.mxu0 %v873
        %v1550 = vpop.f32.mrf.mxu0
        %v1551 = vadd.f32 0.0, %v1550
        %v1552 = vpop.f32.mrf.mxu0
        %1553 = vdwg.mxu0
        %1554 = vmatpush.bf16.msra.mxu0 %v1380
        %1555 = vmatpush.bf16.msra.mxu0 %v1372
        %1556 = vmatpush.bf16.msra.mxu0 %v1364
        %1557 = vmatpush.bf16.msra.mxu0 %v1356
        %1558 = vmatpush.bf16.msra.mxu0 %v1348
        %1559 = vmatpush.bf16.msra.mxu0 %v1340
        %1560 = vmatpush.bf16.msra.mxu0 %v1332
        %1561 = vmatpush.bf16.msra.mxu0 %v1324
        %1562 = vmatmul.bf16.gmra.mxu0 %v874
        %v1563 = vpop.f32.mrf.mxu0
        %v1564 = vadd.f32 %v1551, %v1563
        %v1565 = vpop.f32.mrf.mxu0
        %1566 = vdwg.mxu0
        %1567 = vmatpush.bf16.msra.mxu0 %v1317
        %1568 = vmatpush.bf16.msra.mxu0 %v1309
        %1569 = vmatpush.bf16.msra.mxu0 %v1301
        %1570 = vmatpush.bf16.msra.mxu0 %v1293
        %1571 = vmatpush.bf16.msra.mxu0 %v1285
        %1572 = vmatpush.bf16.msra.mxu0 %v1277
        %1573 = vmatpush.bf16.msra.mxu0 %v1269
        %1574 = vmatpush.bf16.msra.mxu0 %v1261
        %1575 = vmatmul.bf16.gmra.mxu0 %v873
        %v1576 = vpop.f32.mrf.mxu0
        %v1577 = vadd.f32 0.0, %v1576
        %v1578 = vpop.f32.mrf.mxu0
        %1579 = vdwg.mxu0
        %1580 = vmatpush.bf16.msra.mxu0 %v1381
        %1581 = vmatpush.bf16.msra.mxu0 %v1373
        %1582 = vmatpush.bf16.msra.mxu0 %v1365
        %1583 = vmatpush.bf16.msra.mxu0 %v1357
        %1584 = vmatpush.bf16.msra.mxu0 %v1349
        %1585 = vmatpush.bf16.msra.mxu0 %v1341
        %1586 = vmatpush.bf16.msra.mxu0 %v1333
        %1587 = vmatpush.bf16.msra.mxu0 %v1325
        %1588 = vmatmul.bf16.gmra.mxu0 %v874
        %v1589 = vpop.f32.mrf.mxu0
        %v1590 = vadd.f32 %v1577, %v1589
        %v1591 = vpop.f32.mrf.mxu0
        %1592 = vdwg.mxu0
        %1593 = vmatpush.bf16.msra.mxu0 %v1318
        %1594 = vmatpush.bf16.msra.mxu0 %v1310
        %1595 = vmatpush.bf16.msra.mxu0 %v1302
        %1596 = vmatpush.bf16.msra.mxu0 %v1294
        %1597 = vmatpush.bf16.msra.mxu0 %v1286
        %1598 = vmatpush.bf16.msra.mxu0 %v1278
        %1599 = vmatpush.bf16.msra.mxu0 %v1270
        %1600 = vmatpush.bf16.msra.mxu0 %v1262
        %1601 = vmatmul.bf16.gmra.mxu0 %v873
        %v1602 = vpop.f32.mrf.mxu0
        %v1603 = vadd.f32 0.0, %v1602
        %v1604 = vpop.f32.mrf.mxu0
        %1605 = vdwg.mxu0
        %1606 = vmatpush.bf16.msra.mxu0 %v1382
        %1607 = vmatpush.bf16.msra.mxu0 %v1374
        %1608 = vmatpush.bf16.msra.mxu0 %v1366
        %1609 = vmatpush.bf16.msra.mxu0 %v1358
        %1610 = vmatpush.bf16.msra.mxu0 %v1350
        %1611 = vmatpush.bf16.msra.mxu0 %v1342
        %1612 = vmatpush.bf16.msra.mxu0 %v1334
        %1613 = vmatpush.bf16.msra.mxu0 %v1326
        %1614 = vmatmul.bf16.gmra.mxu0 %v874
        %v1615 = vpop.f32.mrf.mxu0
        %v1616 = vadd.f32 %v1603, %v1615
        %v1617 = vpop.f32.mrf.mxu0
        %1618 = vdwg.mxu0
        %1619 = vmatpush.bf16.msra.mxu0 %v1319
        %1620 = vmatpush.bf16.msra.mxu0 %v1311
        %1621 = vmatpush.bf16.msra.mxu0 %v1303
        %1622 = vmatpush.bf16.msra.mxu0 %v1295
        %1623 = vmatpush.bf16.msra.mxu0 %v1287
        %1624 = vmatpush.bf16.msra.mxu0 %v1279
        %1625 = vmatpush.bf16.msra.mxu0 %v1271
        %1626 = vmatpush.bf16.msra.mxu0 %v1263
        %1627 = vmatmul.bf16.gmra.mxu0 %v873
        %v1628 = vpop.f32.mrf.mxu0
        %v1629 = vadd.f32 0.0, %v1628
        %v1630 = vpop.f32.mrf.mxu0
        %1631 = vdwg.mxu0
        %1632 = vmatpush.bf16.msra.mxu0 %v1383
        %1633 = vmatpush.bf16.msra.mxu0 %v1375
        %1634 = vmatpush.bf16.msra.mxu0 %v1367
        %1635 = vmatpush.bf16.msra.mxu0 %v1359
        %1636 = vmatpush.bf16.msra.mxu0 %v1351
        %1637 = vmatpush.bf16.msra.mxu0 %v1343
        %1638 = vmatpush.bf16.msra.mxu0 %v1335
        %1639 = vmatpush.bf16.msra.mxu0 %v1327
        %1640 = vmatmul.bf16.gmra.mxu0 %v874
        %v1641 = vpop.f32.mrf.mxu0
        %v1642 = vadd.f32 %v1629, %v1641
        %v1643 = vpop.f32.mrf.mxu0
        %1644 = vdwg.mxu0
        %1645 = vmatpush.bf16.msra.mxu0 %v1320
        %1646 = vmatpush.bf16.msra.mxu0 %v1312
        %1647 = vmatpush.bf16.msra.mxu0 %v1304
        %1648 = vmatpush.bf16.msra.mxu0 %v1296
        %1649 = vmatpush.bf16.msra.mxu0 %v1288
        %1650 = vmatpush.bf16.msra.mxu0 %v1280
        %1651 = vmatpush.bf16.msra.mxu0 %v1272
        %1652 = vmatpush.bf16.msra.mxu0 %v1264
        %1653 = vmatmul.bf16.gmra.mxu0 %v873
        %v1654 = vpop.f32.mrf.mxu0
        %v1655 = vadd.f32 0.0, %v1654
        %v1656 = vpop.f32.mrf.mxu0
        %1657 = vdwg.mxu0
        %1658 = vmatpush.bf16.msra.mxu0 %v1384
        %1659 = vmatpush.bf16.msra.mxu0 %v1376
        %1660 = vmatpush.bf16.msra.mxu0 %v1368
        %1661 = vmatpush.bf16.msra.mxu0 %v1360
        %1662 = vmatpush.bf16.msra.mxu0 %v1352
        %1663 = vmatpush.bf16.msra.mxu0 %v1344
        %1664 = vmatpush.bf16.msra.mxu0 %v1336
        %1665 = vmatpush.bf16.msra.mxu0 %v1328
        %1666 = vmatmul.bf16.gmra.mxu0 %v874
        %v1667 = vpop.f32.mrf.mxu0
        %v1668 = vadd.f32 %v1655, %v1667
        %v1669 = vpop.f32.mrf.mxu0
        %1670 = vdwg.mxu0
        %1671 = vmatpush.bf16.msra.mxu0 %v1321
        %1672 = vmatpush.bf16.msra.mxu0 %v1313
        %1673 = vmatpush.bf16.msra.mxu0 %v1305
        %1674 = vmatpush.bf16.msra.mxu0 %v1297
        %1675 = vmatpush.bf16.msra.mxu0 %v1289
        %1676 = vmatpush.bf16.msra.mxu0 %v1281
        %1677 = vmatpush.bf16.msra.mxu0 %v1273
        %1678 = vmatpush.bf16.msra.mxu0 %v1265
        %1679 = vmatmul.bf16.gmra.mxu0 %v873
        %v1680 = vpop.f32.mrf.mxu0
        %v1681 = vadd.f32 0.0, %v1680
        %v1682 = vpop.f32.mrf.mxu0
        %1683 = vdwg.mxu0
        %1684 = vmatpush.bf16.msra.mxu0 %v1385
        %1685 = vmatpush.bf16.msra.mxu0 %v1377
        %1686 = vmatpush.bf16.msra.mxu0 %v1369
        %1687 = vmatpush.bf16.msra.mxu0 %v1361
        %1688 = vmatpush.bf16.msra.mxu0 %v1353
        %1689 = vmatpush.bf16.msra.mxu0 %v1345
        %1690 = vmatpush.bf16.msra.mxu0 %v1337
        %1691 = vmatpush.bf16.msra.mxu0 %v1329
        %1692 = vmatmul.bf16.gmra.mxu0 %v874
        %v1693 = vpop.f32.mrf.mxu0
        %v1694 = vadd.f32 %v1681, %v1693
        %v1695 = vpop.f32.mrf.mxu0
        %1696 = vdwg.mxu0
        %1697 = vmatpush.bf16.msra.mxu0 %v1322
        %1698 = vmatpush.bf16.msra.mxu0 %v1314
        %1699 = vmatpush.bf16.msra.mxu0 %v1306
        %1700 = vmatpush.bf16.msra.mxu0 %v1298
        %1701 = vmatpush.bf16.msra.mxu0 %v1290
        %1702 = vmatpush.bf16.msra.mxu0 %v1282
        %1703 = vmatpush.bf16.msra.mxu0 %v1274
        %1704 = vmatpush.bf16.msra.mxu0 %v1266
        %1705 = vmatmul.bf16.gmra.mxu0 %v873
        %v1706 = vpop.f32.mrf.mxu0
        %v1707 = vadd.f32 0.0, %v1706
        %v1708 = vpop.f32.mrf.mxu0
        %1709 = vdwg.mxu0
        %1710 = vmatpush.bf16.msra.mxu0 %v1386
        %1711 = vmatpush.bf16.msra.mxu0 %v1378
        %1712 = vmatpush.bf16.msra.mxu0 %v1370
        %1713 = vmatpush.bf16.msra.mxu0 %v1362
        %1714 = vmatpush.bf16.msra.mxu0 %v1354
        %1715 = vmatpush.bf16.msra.mxu0 %v1346
        %1716 = vmatpush.bf16.msra.mxu0 %v1338
        %1717 = vmatpush.bf16.msra.mxu0 %v1330
        %1718 = vmatmul.bf16.gmra.mxu0 %v874
        %v1719 = vpop.f32.mrf.mxu0
        %v1720 = vadd.f32 %v1707, %v1719
        %v1721 = vpop.f32.mrf.mxu0
        %1722 = vdwg.mxu0
        %1723 = vst [vmem:[#allocation3 + $0x8] sm:$0xff] %v1538
        %1724 = vst [vmem:[#allocation3 + $0x10] sm:$0xff] %v1564
        %1725 = vst [vmem:[#allocation3 + $0x18] sm:$0xff] %v1590
        %1726 = vst [vmem:[#allocation3 + $0x20] sm:$0xff] %v1616
        %1727 = vst [vmem:[#allocation3 + $0x28] sm:$0xff] %v1642
        %1728 = vst [vmem:[#allocation3 + $0x30] sm:$0xff] %v1668
        %1729 = vst [vmem:[#allocation3 + $0x38] sm:$0xff] %v1694
        %1730 = vst [vmem:[#allocation3 + $0x40] sm:$0xff] %v1720
        %v1731 = vld [vmem:[%s5] sm:$0xf]
        %v1732 = vadd.s32 %v406, 256
        %v1733 = vadd.s32 %v406, 384
        %v1734 = vadd.s32 %v406, 512
        %v1735 = vadd.s32 %v406, 640
        %v1736 = vadd.s32 %v406, 768
        %v1737 = vadd.s32 %v406, 896
        %v1738 = vand.u32 %v406, 31
        %v1739 = vand.u32 %v407, 31
        %v1740 = vand.u32 %v1732, 31
        %v1741 = vand.u32 %v1733, 31
        %v1742 = vand.u32 %v1734, 31
        %v1743 = vand.u32 %v1735, 31
        %v1744 = vand.u32 %v1736, 31
        %v1745 = vand.u32 %v1737, 31
        %vm1746 = vcmp.gt.s32.totalorder %v1738, 0
        %vm1747 = vcmp.gt.s32.totalorder %v1739, 0
        %vm1748 = vcmp.gt.s32.totalorder %v1740, 0
        %vm1749 = vcmp.gt.s32.totalorder %v1741, 0
        %vm1750 = vcmp.gt.s32.totalorder %v1742, 0
        %vm1751 = vcmp.gt.s32.totalorder %v1743, 0
        %vm1752 = vcmp.gt.s32.totalorder %v1744, 0
        %vm1753 = vcmp.gt.s32.totalorder %v1745, 0
        %vm1754 = vcmp.lt.s32.totalorder %v1738, 31
        %vm1755 = vcmp.lt.s32.totalorder %v1739, 31
        %vm1756 = vcmp.lt.s32.totalorder %v1740, 31
        %vm1757 = vcmp.lt.s32.totalorder %v1741, 31
        %vm1758 = vcmp.lt.s32.totalorder %v1742, 31
        %vm1759 = vcmp.lt.s32.totalorder %v1743, 31
        %vm1760 = vcmp.lt.s32.totalorder %v1744, 31
        %vm1761 = vcmp.lt.s32.totalorder %v1745, 31
        %v1762 = vld [vmem:[#allocation3] sm:$0xff]
        %v1763 = vld [vmem:[#allocation3 + $0x8] sm:$0xff]
        %v1764 = vld [vmem:[#allocation3 + $0x10] sm:$0xff]
        %v1765 = vld [vmem:[#allocation3 + $0x18] sm:$0xff]
        %v1766 = vld [vmem:[#allocation3 + $0x20] sm:$0xff]
        %v1767 = vld [vmem:[#allocation3 + $0x28] sm:$0xff]
        %v1768 = vld [vmem:[#allocation3 + $0x30] sm:$0xff]
        %v1769 = vld [vmem:[#allocation3 + $0x38] sm:$0xff]
        %v1770 = vld [vmem:[#allocation3 + $0x40] sm:$0xff]
        %v1771 = vsel %vm1746, 1, 0
        %v1772 = vsel %vm1747, 1, 0
        %v1773 = vsel %vm1748, 1, 0
        %v1774 = vsel %vm1749, 1, 0
        %v1775 = vsel %vm1750, 1, 0
        %v1776 = vsel %vm1751, 1, 0
        %v1777 = vsel %vm1752, 1, 0
        %v1778 = vsel %vm1753, 1, 0
        %vm1779 = vcmp.eq.s32.totalorder %v1771, 1
        %vm1780 = vcmp.eq.s32.totalorder %v1772, 1
        %vm1781 = vcmp.eq.s32.totalorder %v1773, 1
        %vm1782 = vcmp.eq.s32.totalorder %v1774, 1
        %vm1783 = vcmp.eq.s32.totalorder %v1775, 1
        %vm1784 = vcmp.eq.s32.totalorder %v1776, 1
        %vm1785 = vcmp.eq.s32.totalorder %v1777, 1
        %vm1786 = vcmp.eq.s32.totalorder %v1778, 1
        %1796 = vrot.lane.b32.xlu0 %v1762, 33
        %v1797 = vpop.permute.xlu0 %1796
        %1798 = vrot.lane.b32.xlu0 %v1763, 33
        %v1799 = vpop.permute.xlu0 %1798
        %1800 = vrot.lane.b32.xlu0 %v1764, 33
        %v1801 = vpop.permute.xlu0 %1800
        %1802 = vrot.lane.b32.xlu0 %v1765, 33
        %v1803 = vpop.permute.xlu0 %1802
        %1804 = vrot.lane.b32.xlu0 %v1766, 33
        %v1805 = vpop.permute.xlu0 %1804
        %1806 = vrot.lane.b32.xlu0 %v1767, 33
        %v1807 = vpop.permute.xlu0 %1806
        %1808 = vrot.lane.b32.xlu0 %v1768, 33
        %v1809 = vpop.permute.xlu0 %1808
        %1810 = vrot.lane.b32.xlu0 %v1769, 33
        %v1811 = vpop.permute.xlu0 %1810
        %1812 = vrot.lane.b32.xlu0 %v1770, 33
        %v1813 = vpop.permute.xlu0 %1812
        %vm1814 = vcmask 269312
        %v1815 = vsel %vm1814, %v1797, %v1799
        %v1816 = vsel %vm1814, %v1799, %v1801
        %v1817 = vsel %vm1814, %v1801, %v1803
        %v1818 = vsel %vm1814, %v1803, %v1805
        %v1819 = vsel %vm1814, %v1805, %v1807
        %v1820 = vsel %vm1814, %v1807, %v1809
        %v1821 = vsel %vm1814, %v1809, %v1811
        %v1822 = vsel %vm1814, %v1811, %v1813
        %v1831 = vsel %vm1779, %v1815, 0.0
        %v1832 = vsel %vm1780, %v1816, 0.0
        %v1833 = vsel %vm1781, %v1817, 0.0
        %v1834 = vsel %vm1782, %v1818, 0.0
        %v1835 = vsel %vm1783, %v1819, 0.0
        %v1836 = vsel %vm1784, %v1820, 0.0
        %v1837 = vsel %vm1785, %v1821, 0.0
        %v1838 = vsel %vm1786, %v1822, 0.0
        %v1839 = vsel %vm1754, 1, 0
        %v1840 = vsel %vm1755, 1, 0
        %v1841 = vsel %vm1756, 1, 0
        %v1842 = vsel %vm1757, 1, 0
        %v1843 = vsel %vm1758, 1, 0
        %v1844 = vsel %vm1759, 1, 0
        %v1845 = vsel %vm1760, 1, 0
        %v1846 = vsel %vm1761, 1, 0
        %vm1847 = vcmp.eq.s32.totalorder %v1839, 1
        %vm1848 = vcmp.eq.s32.totalorder %v1840, 1
        %vm1849 = vcmp.eq.s32.totalorder %v1841, 1
        %vm1850 = vcmp.eq.s32.totalorder %v1842, 1
        %vm1851 = vcmp.eq.s32.totalorder %v1843, 1
        %vm1852 = vcmp.eq.s32.totalorder %v1844, 1
        %vm1853 = vcmp.eq.s32.totalorder %v1845, 1
        %vm1854 = vcmp.eq.s32.totalorder %v1846, 1
        %1855 = vrot.lane.b32.xlu0 %v1762, 31
        %v1856 = vpop.permute.xlu0 %1855
        %1857 = vrot.lane.b32.xlu0 %v1763, 31
        %v1858 = vpop.permute.xlu0 %1857
        %1859 = vrot.lane.b32.xlu0 %v1764, 31
        %v1860 = vpop.permute.xlu0 %1859
        %1861 = vrot.lane.b32.xlu0 %v1765, 31
        %v1862 = vpop.permute.xlu0 %1861
        %1863 = vrot.lane.b32.xlu0 %v1766, 31
        %v1864 = vpop.permute.xlu0 %1863
        %1865 = vrot.lane.b32.xlu0 %v1767, 31
        %v1866 = vpop.permute.xlu0 %1865
        %1867 = vrot.lane.b32.xlu0 %v1768, 31
        %v1868 = vpop.permute.xlu0 %1867
        %1869 = vrot.lane.b32.xlu0 %v1769, 31
        %v1870 = vpop.permute.xlu0 %1869
        %1871 = vrot.lane.b32.xlu0 %v1770, 31
        %v1872 = vpop.permute.xlu0 %1871
        %vm1873 = vcmask 252928
        %v1874 = vsel %vm1873, %v1856, %v1858
        %v1875 = vsel %vm1873, %v1858, %v1860
        %v1876 = vsel %vm1873, %v1860, %v1862
        %v1877 = vsel %vm1873, %v1862, %v1864
        %v1878 = vsel %vm1873, %v1864, %v1866
        %v1879 = vsel %vm1873, %v1866, %v1868
        %v1880 = vsel %vm1873, %v1868, %v1870
        %v1881 = vsel %vm1873, %v1870, %v1872
        %v1890 = vsel %vm1847, %v1874, 0.0
        %v1891 = vsel %vm1848, %v1875, 0.0
        %v1892 = vsel %vm1849, %v1876, 0.0
        %v1893 = vsel %vm1850, %v1877, 0.0
        %v1894 = vsel %vm1851, %v1878, 0.0
        %v1895 = vsel %vm1852, %v1879, 0.0
        %v1896 = vsel %vm1853, %v1880, 0.0
        %v1897 = vsel %vm1854, %v1881, 0.0
        %1898 = vrot.lane.b32.xlu0 %v1762, 1
        %v1899 = vpop.permute.xlu0 %1898
        %1900 = vrot.lane.b32.xlu0 %v1763, 1
        %v1901 = vpop.permute.xlu0 %1900
        %1902 = vrot.lane.b32.xlu0 %v1764, 1
        %v1903 = vpop.permute.xlu0 %1902
        %1904 = vrot.lane.b32.xlu0 %v1765, 1
        %v1905 = vpop.permute.xlu0 %1904
        %1906 = vrot.lane.b32.xlu0 %v1766, 1
        %v1907 = vpop.permute.xlu0 %1906
        %1908 = vrot.lane.b32.xlu0 %v1767, 1
        %v1909 = vpop.permute.xlu0 %1908
        %1910 = vrot.lane.b32.xlu0 %v1768, 1
        %v1911 = vpop.permute.xlu0 %1910
        %1912 = vrot.lane.b32.xlu0 %v1769, 1
        %v1913 = vpop.permute.xlu0 %1912
        %1914 = vrot.lane.b32.xlu0 %v1770, 1
        %v1915 = vpop.permute.xlu0 %1914
        %v1916 = vsel %vm460, %v1899, %v1901
        %v1917 = vsel %vm460, %v1901, %v1903
        %v1918 = vsel %vm460, %v1903, %v1905
        %v1919 = vsel %vm460, %v1905, %v1907
        %v1920 = vsel %vm460, %v1907, %v1909
        %v1921 = vsel %vm460, %v1909, %v1911
        %v1922 = vsel %vm460, %v1911, %v1913
        %v1923 = vsel %vm460, %v1913, %v1915
        %v1932 = vsel %vm1779, %v1916, 0.0
        %v1933 = vsel %vm1780, %v1917, 0.0
        %v1934 = vsel %vm1781, %v1918, 0.0
        %v1935 = vsel %vm1782, %v1919, 0.0
        %v1936 = vsel %vm1783, %v1920, 0.0
        %v1937 = vsel %vm1784, %v1921, 0.0
        %v1938 = vsel %vm1785, %v1922, 0.0
        %v1939 = vsel %vm1786, %v1923, 0.0
        %v1940 = vld [vmem:[#allocation3 + $0x8] sm:$0xff]
        %v1941 = vld [vmem:[#allocation3 + $0x10] sm:$0xff]
        %v1942 = vld [vmem:[#allocation3 + $0x18] sm:$0xff]
        %v1943 = vld [vmem:[#allocation3 + $0x20] sm:$0xff]
        %v1944 = vld [vmem:[#allocation3 + $0x28] sm:$0xff]
        %v1945 = vld [vmem:[#allocation3 + $0x30] sm:$0xff]
        %v1946 = vld [vmem:[#allocation3 + $0x38] sm:$0xff]
        %v1947 = vld [vmem:[#allocation3 + $0x40] sm:$0xff]
        %v1948 = vld [vmem:[#allocation3 + $0x48] sm:$0xff]
        %1958 = vrot.lane.b32.xlu0 %v1940, 127
        %v1959 = vpop.permute.xlu0 %1958
        %1960 = vrot.lane.b32.xlu0 %v1941, 127
        %v1961 = vpop.permute.xlu0 %1960
        %1962 = vrot.lane.b32.xlu0 %v1942, 127
        %v1963 = vpop.permute.xlu0 %1962
        %1964 = vrot.lane.b32.xlu0 %v1943, 127
        %v1965 = vpop.permute.xlu0 %1964
        %1966 = vrot.lane.b32.xlu0 %v1944, 127
        %v1967 = vpop.permute.xlu0 %1966
        %1968 = vrot.lane.b32.xlu0 %v1945, 127
        %v1969 = vpop.permute.xlu0 %1968
        %1970 = vrot.lane.b32.xlu0 %v1946, 127
        %v1971 = vpop.permute.xlu0 %1970
        %1972 = vrot.lane.b32.xlu0 %v1947, 127
        %v1973 = vpop.permute.xlu0 %1972
        %1974 = vrot.lane.b32.xlu0 %v1948, 127
        %v1975 = vpop.permute.xlu0 %1974
        %v1976 = vsel %vm479, %v1959, %v1961
        %v1977 = vsel %vm479, %v1961, %v1963
        %v1978 = vsel %vm479, %v1963, %v1965
        %v1979 = vsel %vm479, %v1965, %v1967
        %v1980 = vsel %vm479, %v1967, %v1969
        %v1981 = vsel %vm479, %v1969, %v1971
        %v1982 = vsel %vm479, %v1971, %v1973
        %v1983 = vsel %vm479, %v1973, %v1975
        %v1992 = vsel %vm1847, %v1976, 0.0
        %v1993 = vsel %vm1848, %v1977, 0.0
        %v1994 = vsel %vm1849, %v1978, 0.0
        %v1995 = vsel %vm1850, %v1979, 0.0
        %v1996 = vsel %vm1851, %v1980, 0.0
        %v1997 = vsel %vm1852, %v1981, 0.0
        %v1998 = vsel %vm1853, %v1982, 0.0
        %v1999 = vsel %vm1854, %v1983, 0.0
        %2000 = vrot.lane.b32.xlu0 %v1940, 97
        %v2001 = vpop.permute.xlu0 %2000
        %2002 = vrot.lane.b32.xlu0 %v1941, 97
        %v2003 = vpop.permute.xlu0 %2002
        %2004 = vrot.lane.b32.xlu0 %v1942, 97
        %v2005 = vpop.permute.xlu0 %2004
        %2006 = vrot.lane.b32.xlu0 %v1943, 97
        %v2007 = vpop.permute.xlu0 %2006
        %2008 = vrot.lane.b32.xlu0 %v1944, 97
        %v2009 = vpop.permute.xlu0 %2008
        %2010 = vrot.lane.b32.xlu0 %v1945, 97
        %v2011 = vpop.permute.xlu0 %2010
        %2012 = vrot.lane.b32.xlu0 %v1946, 97
        %v2013 = vpop.permute.xlu0 %2012
        %2014 = vrot.lane.b32.xlu0 %v1947, 97
        %v2015 = vpop.permute.xlu0 %2014
        %2016 = vrot.lane.b32.xlu0 %v1948, 97
        %v2017 = vpop.permute.xlu0 %2016
        %vm2018 = vcmask 793600
        %v2019 = vsel %vm2018, %v2001, %v2003
        %v2020 = vsel %vm2018, %v2003, %v2005
        %v2021 = vsel %vm2018, %v2005, %v2007
        %v2022 = vsel %vm2018, %v2007, %v2009
        %v2023 = vsel %vm2018, %v2009, %v2011
        %v2024 = vsel %vm2018, %v2011, %v2013
        %v2025 = vsel %vm2018, %v2013, %v2015
        %v2026 = vsel %vm2018, %v2015, %v2017
        %v2035 = vsel %vm1779, %v2019, 0.0
        %v2036 = vsel %vm1780, %v2020, 0.0
        %v2037 = vsel %vm1781, %v2021, 0.0
        %v2038 = vsel %vm1782, %v2022, 0.0
        %v2039 = vsel %vm1783, %v2023, 0.0
        %v2040 = vsel %vm1784, %v2024, 0.0
        %v2041 = vsel %vm1785, %v2025, 0.0
        %v2042 = vsel %vm1786, %v2026, 0.0
        %2043 = vrot.lane.b32.xlu0 %v1940, 95
        %v2044 = vpop.permute.xlu0 %2043
        %2045 = vrot.lane.b32.xlu0 %v1941, 95
        %v2046 = vpop.permute.xlu0 %2045
        %2047 = vrot.lane.b32.xlu0 %v1942, 95
        %v2048 = vpop.permute.xlu0 %2047
        %2049 = vrot.lane.b32.xlu0 %v1943, 95
        %v2050 = vpop.permute.xlu0 %2049
        %2051 = vrot.lane.b32.xlu0 %v1944, 95
        %v2052 = vpop.permute.xlu0 %2051
        %2053 = vrot.lane.b32.xlu0 %v1945, 95
        %v2054 = vpop.permute.xlu0 %2053
        %2055 = vrot.lane.b32.xlu0 %v1946, 95
        %v2056 = vpop.permute.xlu0 %2055
        %2057 = vrot.lane.b32.xlu0 %v1947, 95
        %v2058 = vpop.permute.xlu0 %2057
        %2059 = vrot.lane.b32.xlu0 %v1948, 95
        %v2060 = vpop.permute.xlu0 %2059
        %vm2061 = vcmask 777216
        %v2062 = vsel %vm2061, %v2044, %v2046
        %v2063 = vsel %vm2061, %v2046, %v2048
        %v2064 = vsel %vm2061, %v2048, %v2050
        %v2065 = vsel %vm2061, %v2050, %v2052
        %v2066 = vsel %vm2061, %v2052, %v2054
        %v2067 = vsel %vm2061, %v2054, %v2056
        %v2068 = vsel %vm2061, %v2056, %v2058
        %v2069 = vsel %vm2061, %v2058, %v2060
        %v2078 = vsel %vm1847, %v2062, 0.0
        %v2079 = vsel %vm1848, %v2063, 0.0
        %v2080 = vsel %vm1849, %v2064, 0.0
        %v2081 = vsel %vm1850, %v2065, 0.0
        %v2082 = vsel %vm1851, %v2066, 0.0
        %v2083 = vsel %vm1852, %v2067, 0.0
        %v2084 = vsel %vm1853, %v2068, 0.0
        %v2085 = vsel %vm1854, %v2069, 0.0
        %2086 = vrot.lane.b32.xlu0 %v1762, 32
        %v2087 = vpop.permute.xlu0 %2086
        %2088 = vrot.lane.b32.xlu0 %v1763, 32
        %v2089 = vpop.permute.xlu0 %2088
        %2090 = vrot.lane.b32.xlu0 %v1764, 32
        %v2091 = vpop.permute.xlu0 %2090
        %2092 = vrot.lane.b32.xlu0 %v1765, 32
        %v2093 = vpop.permute.xlu0 %2092
        %2094 = vrot.lane.b32.xlu0 %v1766, 32
        %v2095 = vpop.permute.xlu0 %2094
        %2096 = vrot.lane.b32.xlu0 %v1767, 32
        %v2097 = vpop.permute.xlu0 %2096
        %2098 = vrot.lane.b32.xlu0 %v1768, 32
        %v2099 = vpop.permute.xlu0 %2098
        %2100 = vrot.lane.b32.xlu0 %v1769, 32
        %v2101 = vpop.permute.xlu0 %2100
        %2102 = vrot.lane.b32.xlu0 %v1770, 32
        %v2103 = vpop.permute.xlu0 %2102
        %vm2104 = vcmask 261120
        %v2105 = vsel %vm2104, %v2087, %v2089
        %v2106 = vsel %vm2104, %v2089, %v2091
        %v2107 = vsel %vm2104, %v2091, %v2093
        %v2108 = vsel %vm2104, %v2093, %v2095
        %v2109 = vsel %vm2104, %v2095, %v2097
        %v2110 = vsel %vm2104, %v2097, %v2099
        %v2111 = vsel %vm2104, %v2099, %v2101
        %v2112 = vsel %vm2104, %v2101, %v2103
        %2121 = vrot.lane.b32.xlu0 %v1940, 96
        %v2122 = vpop.permute.xlu0 %2121
        %2123 = vrot.lane.b32.xlu0 %v1941, 96
        %v2124 = vpop.permute.xlu0 %2123
        %2125 = vrot.lane.b32.xlu0 %v1942, 96
        %v2126 = vpop.permute.xlu0 %2125
        %2127 = vrot.lane.b32.xlu0 %v1943, 96
        %v2128 = vpop.permute.xlu0 %2127
        %2129 = vrot.lane.b32.xlu0 %v1944, 96
        %v2130 = vpop.permute.xlu0 %2129
        %2131 = vrot.lane.b32.xlu0 %v1945, 96
        %v2132 = vpop.permute.xlu0 %2131
        %2133 = vrot.lane.b32.xlu0 %v1946, 96
        %v2134 = vpop.permute.xlu0 %2133
        %2135 = vrot.lane.b32.xlu0 %v1947, 96
        %v2136 = vpop.permute.xlu0 %2135
        %2137 = vrot.lane.b32.xlu0 %v1948, 96
        %v2138 = vpop.permute.xlu0 %2137
        %vm2139 = vcmask 785408
        %v2140 = vsel %vm2139, %v2122, %v2124
        %v2141 = vsel %vm2139, %v2124, %v2126
        %v2142 = vsel %vm2139, %v2126, %v2128
        %v2143 = vsel %vm2139, %v2128, %v2130
        %v2144 = vsel %vm2139, %v2130, %v2132
        %v2145 = vsel %vm2139, %v2132, %v2134
        %v2146 = vsel %vm2139, %v2134, %v2136
        %v2147 = vsel %vm2139, %v2136, %v2138
        %v2156 = vpack.c.bf16 %v2105, %v1831
        %v2157 = vpack.c.bf16 %v2106, %v1832
        %v2158 = vpack.c.bf16 %v2107, %v1833
        %v2159 = vpack.c.bf16 %v2108, %v1834
        %v2160 = vpack.c.bf16 %v2109, %v1835
        %v2161 = vpack.c.bf16 %v2110, %v1836
        %v2162 = vpack.c.bf16 %v2111, %v1837
        %v2163 = vpack.c.bf16 %v2112, %v1838
        %v2164 = vpack.c.bf16 %v1932, %v1890
        %v2165 = vpack.c.bf16 %v1933, %v1891
        %v2166 = vpack.c.bf16 %v1934, %v1892
        %v2167 = vpack.c.bf16 %v1935, %v1893
        %v2168 = vpack.c.bf16 %v1936, %v1894
        %v2169 = vpack.c.bf16 %v1937, %v1895
        %v2170 = vpack.c.bf16 %v1938, %v1896
        %v2171 = vpack.c.bf16 %v1939, %v1897
        %v2172 = vpack.c.bf16 %v1992, %v1763
        %v2173 = vpack.c.bf16 %v1993, %v1764
        %v2174 = vpack.c.bf16 %v1994, %v1765
        %v2175 = vpack.c.bf16 %v1995, %v1766
        %v2176 = vpack.c.bf16 %v1996, %v1767
        %v2177 = vpack.c.bf16 %v1997, %v1768
        %v2178 = vpack.c.bf16 %v1998, %v1769
        %v2179 = vpack.c.bf16 %v1999, %v1770
        %v2180 = vpack.c.bf16 %v2140, %v2035
        %v2181 = vpack.c.bf16 %v2141, %v2036
        %v2182 = vpack.c.bf16 %v2142, %v2037
        %v2183 = vpack.c.bf16 %v2143, %v2038
        %v2184 = vpack.c.bf16 %v2144, %v2039
        %v2185 = vpack.c.bf16 %v2145, %v2040
        %v2186 = vpack.c.bf16 %v2146, %v2041
        %v2187 = vpack.c.bf16 %v2147, %v2042
        %v2188 = vpack.c.bf16 %v2078, %v2078
        %v2189 = vpack.c.bf16 %v2079, %v2079
        %v2190 = vpack.c.bf16 %v2080, %v2080
        %v2191 = vpack.c.bf16 %v2081, %v2081
        %v2192 = vpack.c.bf16 %v2082, %v2082
        %v2193 = vpack.c.bf16 %v2083, %v2083
        %v2194 = vpack.c.bf16 %v2084, %v2084
        %v2195 = vpack.c.bf16 %v2085, %v2085
        %v2196 = vld [vmem:[%s6] sm:$0xff]
        %2198 = vset.pattern.permute.xlu0 0
        %2199 = vperm.xlu0 %2198, %v2196
        %v2200 = vpop.permute.xlu0 %2199
        %v2203 = vsel %vm550, %v1731, 0
        %v2206 = vsel %vm554, %v2188, 0
        %v2209 = vsel %vm554, %v2189, 0
        %v2212 = vsel %vm554, %v2190, 0
        %v2215 = vsel %vm554, %v2191, 0
        %v2218 = vsel %vm554, %v2192, 0
        %v2221 = vsel %vm554, %v2193, 0
        %v2224 = vsel %vm554, %v2194, 0
        %v2227 = vsel %vm554, %v2195, 0
        %2229 = vmatpush.bf16.msra.mxu0 0
        %2230 = vmatpush.bf16.msra.mxu0 0
        %2231 = vmatpush.bf16.msra.mxu0 0
        %2232 = vmatpush.bf16.msra.mxu0 %v2206
        %2233 = vmatpush.bf16.msra.mxu0 %v2180
        %2234 = vmatpush.bf16.msra.mxu0 %v2172
        %2235 = vmatpush.bf16.msra.mxu0 %v2164
        %2236 = vmatpush.bf16.msra.mxu0 %v2156
        %2237 = vmatmul.bf16.gmra.mxu0 %v2203
        %v2238 = vpop.f32.mrf.mxu0
        %v2239 = vadd.f32 %v2200, %v2238
        %v2240 = vpop.f32.mrf.mxu0
        %2241 = vdwg.mxu0
        %2242 = vmatpush.bf16.msra.mxu0 0
        %2243 = vmatpush.bf16.msra.mxu0 0
        %2244 = vmatpush.bf16.msra.mxu0 0
        %2245 = vmatpush.bf16.msra.mxu0 %v2209
        %2246 = vmatpush.bf16.msra.mxu0 %v2181
        %2247 = vmatpush.bf16.msra.mxu0 %v2173
        %2248 = vmatpush.bf16.msra.mxu0 %v2165
        %2249 = vmatpush.bf16.msra.mxu0 %v2157
        %2250 = vmatmul.bf16.gmra.mxu0 %v2203
        %v2251 = vpop.f32.mrf.mxu0
        %v2252 = vadd.f32 %v2200, %v2251
        %v2253 = vpop.f32.mrf.mxu0
        %2254 = vdwg.mxu0
        %2255 = vmatpush.bf16.msra.mxu0 0
        %2256 = vmatpush.bf16.msra.mxu0 0
        %2257 = vmatpush.bf16.msra.mxu0 0
        %2258 = vmatpush.bf16.msra.mxu0 %v2212
        %2259 = vmatpush.bf16.msra.mxu0 %v2182
        %2260 = vmatpush.bf16.msra.mxu0 %v2174
        %2261 = vmatpush.bf16.msra.mxu0 %v2166
        %2262 = vmatpush.bf16.msra.mxu0 %v2158
        %2263 = vmatmul.bf16.gmra.mxu0 %v2203
        %v2264 = vpop.f32.mrf.mxu0
        %v2265 = vadd.f32 %v2200, %v2264
        %v2266 = vpop.f32.mrf.mxu0
        %2267 = vdwg.mxu0
        %2268 = vmatpush.bf16.msra.mxu0 0
        %2269 = vmatpush.bf16.msra.mxu0 0
        %2270 = vmatpush.bf16.msra.mxu0 0
        %2271 = vmatpush.bf16.msra.mxu0 %v2215
        %2272 = vmatpush.bf16.msra.mxu0 %v2183
        %2273 = vmatpush.bf16.msra.mxu0 %v2175
        %2274 = vmatpush.bf16.msra.mxu0 %v2167
        %2275 = vmatpush.bf16.msra.mxu0 %v2159
        %2276 = vmatmul.bf16.gmra.mxu0 %v2203
        %v2277 = vpop.f32.mrf.mxu0
        %v2278 = vadd.f32 %v2200, %v2277
        %v2279 = vpop.f32.mrf.mxu0
        %2280 = vdwg.mxu0
        %2281 = vmatpush.bf16.msra.mxu0 0
        %2282 = vmatpush.bf16.msra.mxu0 0
        %2283 = vmatpush.bf16.msra.mxu0 0
        %2284 = vmatpush.bf16.msra.mxu0 %v2218
        %2285 = vmatpush.bf16.msra.mxu0 %v2184
        %2286 = vmatpush.bf16.msra.mxu0 %v2176
        %2287 = vmatpush.bf16.msra.mxu0 %v2168
        %2288 = vmatpush.bf16.msra.mxu0 %v2160
        %2289 = vmatmul.bf16.gmra.mxu0 %v2203
        %v2290 = vpop.f32.mrf.mxu0
        %v2291 = vadd.f32 %v2200, %v2290
        %v2292 = vpop.f32.mrf.mxu0
        %2293 = vdwg.mxu0
        %2294 = vmatpush.bf16.msra.mxu0 0
        %2295 = vmatpush.bf16.msra.mxu0 0
        %2296 = vmatpush.bf16.msra.mxu0 0
        %2297 = vmatpush.bf16.msra.mxu0 %v2221
        %2298 = vmatpush.bf16.msra.mxu0 %v2185
        %2299 = vmatpush.bf16.msra.mxu0 %v2177
        %2300 = vmatpush.bf16.msra.mxu0 %v2169
        %2301 = vmatpush.bf16.msra.mxu0 %v2161
        %2302 = vmatmul.bf16.gmra.mxu0 %v2203
        %v2303 = vpop.f32.mrf.mxu0
        %v2304 = vadd.f32 %v2200, %v2303
        %v2305 = vpop.f32.mrf.mxu0
        %2306 = vdwg.mxu0
        %2307 = vmatpush.bf16.msra.mxu0 0
        %2308 = vmatpush.bf16.msra.mxu0 0
        %2309 = vmatpush.bf16.msra.mxu0 0
        %2310 = vmatpush.bf16.msra.mxu0 %v2224
        %2311 = vmatpush.bf16.msra.mxu0 %v2186
        %2312 = vmatpush.bf16.msra.mxu0 %v2178
        %2313 = vmatpush.bf16.msra.mxu0 %v2170
        %2314 = vmatpush.bf16.msra.mxu0 %v2162
        %2315 = vmatmul.bf16.gmra.mxu0 %v2203
        %v2316 = vpop.f32.mrf.mxu0
        %v2317 = vadd.f32 %v2200, %v2316
        %v2318 = vpop.f32.mrf.mxu0
        %2319 = vdwg.mxu0
        %2320 = vmatpush.bf16.msra.mxu0 0
        %2321 = vmatpush.bf16.msra.mxu0 0
        %2322 = vmatpush.bf16.msra.mxu0 0
        %2323 = vmatpush.bf16.msra.mxu0 %v2227
        %2324 = vmatpush.bf16.msra.mxu0 %v2187
        %2325 = vmatpush.bf16.msra.mxu0 %v2179
        %2326 = vmatpush.bf16.msra.mxu0 %v2171
        %2327 = vmatpush.bf16.msra.mxu0 %v2163
        %2328 = vmatmul.bf16.gmra.mxu0 %v2203
        %v2329 = vpop.f32.mrf.mxu0
        %v2330 = vadd.f32 %v2200, %v2329
        %v2331 = vpop.f32.mrf.mxu0
        %2332 = vdwg.mxu0
        %v2333 = vmax.f32 %v2239, 0.0
        %v2334 = vmax.f32 %v2252, 0.0
        %v2335 = vmax.f32 %v2265, 0.0
        %v2336 = vmax.f32 %v2278, 0.0
        %v2337 = vmax.f32 %v2291, 0.0
        %v2338 = vmax.f32 %v2304, 0.0
        %v2339 = vmax.f32 %v2317, 0.0
        %v2340 = vmax.f32 %v2330, 0.0
        %v2341 = vld [vmem:[%s7] sm:$0xf]
        %v2342 = vpack.c.bf16 %v2333, %v2333
        %v2343 = vpack.c.bf16 %v2334, %v2334
        %v2344 = vpack.c.bf16 %v2335, %v2335
        %v2345 = vpack.c.bf16 %v2336, %v2336
        %v2346 = vpack.c.bf16 %v2337, %v2337
        %v2347 = vpack.c.bf16 %v2338, %v2338
        %v2348 = vpack.c.bf16 %v2339, %v2339
        %v2349 = vpack.c.bf16 %v2340, %v2340
        %v2350 = vld [vmem:[%s8] sm:$0xff]
        %2352 = vset.pattern.permute.xlu0 0
        %2353 = vperm.xlu0 %2352, %v2350
        %v2354 = vpop.permute.xlu0 %2353
        %vm2356 = vcmask 64512
        %v2358 = vsel %vm2356, %v2341, 0
        %v2361 = vsel %vm554, %v2342, 0
        %v2364 = vsel %vm554, %v2343, 0
        %v2367 = vsel %vm554, %v2344, 0
        %v2370 = vsel %vm554, %v2345, 0
        %v2373 = vsel %vm554, %v2346, 0
        %v2376 = vsel %vm554, %v2347, 0
        %v2379 = vsel %vm554, %v2348, 0
        %v2382 = vsel %vm554, %v2349, 0
        %2384 = vmatpush.bf16.msra.mxu0 0
        %2385 = vmatpush.bf16.msra.mxu0 0
        %2386 = vmatpush.bf16.msra.mxu0 0
        %2387 = vmatpush.bf16.msra.mxu0 0
        %2388 = vmatpush.bf16.msra.mxu0 0
        %2389 = vmatpush.bf16.msra.mxu0 0
        %2390 = vmatpush.bf16.msra.mxu0 0
        %2391 = vmatpush.bf16.msra.mxu0 %v2361
        %2392 = vmatmul.bf16.gmra.mxu0 %v2358
        %v2393 = vpop.f32.mrf.mxu0
        %v2394 = vadd.f32 %v2354, %v2393
        %v2395 = vpop.f32.mrf.mxu0
        %2396 = vdwg.mxu0
        %2397 = vmatpush.bf16.msra.mxu0 0
        %2398 = vmatpush.bf16.msra.mxu0 0
        %2399 = vmatpush.bf16.msra.mxu0 0
        %2400 = vmatpush.bf16.msra.mxu0 0
        %2401 = vmatpush.bf16.msra.mxu0 0
        %2402 = vmatpush.bf16.msra.mxu0 0
        %2403 = vmatpush.bf16.msra.mxu0 0
        %2404 = vmatpush.bf16.msra.mxu0 %v2364
        %2405 = vmatmul.bf16.gmra.mxu0 %v2358
        %v2406 = vpop.f32.mrf.mxu0
        %v2407 = vadd.f32 %v2354, %v2406
        %v2408 = vpop.f32.mrf.mxu0
        %2409 = vdwg.mxu0
        %2410 = vmatpush.bf16.msra.mxu0 0
        %2411 = vmatpush.bf16.msra.mxu0 0
        %2412 = vmatpush.bf16.msra.mxu0 0
        %2413 = vmatpush.bf16.msra.mxu0 0
        %2414 = vmatpush.bf16.msra.mxu0 0
        %2415 = vmatpush.bf16.msra.mxu0 0
        %2416 = vmatpush.bf16.msra.mxu0 0
        %2417 = vmatpush.bf16.msra.mxu0 %v2367
        %2418 = vmatmul.bf16.gmra.mxu0 %v2358
        %v2419 = vpop.f32.mrf.mxu0
        %v2420 = vadd.f32 %v2354, %v2419
        %v2421 = vpop.f32.mrf.mxu0
        %2422 = vdwg.mxu0
        %2423 = vmatpush.bf16.msra.mxu0 0
        %2424 = vmatpush.bf16.msra.mxu0 0
        %2425 = vmatpush.bf16.msra.mxu0 0
        %2426 = vmatpush.bf16.msra.mxu0 0
        %2427 = vmatpush.bf16.msra.mxu0 0
        %2428 = vmatpush.bf16.msra.mxu0 0
        %2429 = vmatpush.bf16.msra.mxu0 0
        %2430 = vmatpush.bf16.msra.mxu0 %v2370
        %2431 = vmatmul.bf16.gmra.mxu0 %v2358
        %v2432 = vpop.f32.mrf.mxu0
        %v2433 = vadd.f32 %v2354, %v2432
        %v2434 = vpop.f32.mrf.mxu0
        %2435 = vdwg.mxu0
        %2436 = vmatpush.bf16.msra.mxu0 0
        %2437 = vmatpush.bf16.msra.mxu0 0
        %2438 = vmatpush.bf16.msra.mxu0 0
        %2439 = vmatpush.bf16.msra.mxu0 0
        %2440 = vmatpush.bf16.msra.mxu0 0
        %2441 = vmatpush.bf16.msra.mxu0 0
        %2442 = vmatpush.bf16.msra.mxu0 0
        %2443 = vmatpush.bf16.msra.mxu0 %v2373
        %2444 = vmatmul.bf16.gmra.mxu0 %v2358
        %v2445 = vpop.f32.mrf.mxu0
        %v2446 = vadd.f32 %v2354, %v2445
        %v2447 = vpop.f32.mrf.mxu0
        %2448 = vdwg.mxu0
        %2449 = vmatpush.bf16.msra.mxu0 0
        %2450 = vmatpush.bf16.msra.mxu0 0
        %2451 = vmatpush.bf16.msra.mxu0 0
        %2452 = vmatpush.bf16.msra.mxu0 0
        %2453 = vmatpush.bf16.msra.mxu0 0
        %2454 = vmatpush.bf16.msra.mxu0 0
        %2455 = vmatpush.bf16.msra.mxu0 0
        %2456 = vmatpush.bf16.msra.mxu0 %v2376
        %2457 = vmatmul.bf16.gmra.mxu0 %v2358
        %v2458 = vpop.f32.mrf.mxu0
        %v2459 = vadd.f32 %v2354, %v2458
        %v2460 = vpop.f32.mrf.mxu0
        %2461 = vdwg.mxu0
        %2462 = vmatpush.bf16.msra.mxu0 0
        %2463 = vmatpush.bf16.msra.mxu0 0
        %2464 = vmatpush.bf16.msra.mxu0 0
        %2465 = vmatpush.bf16.msra.mxu0 0
        %2466 = vmatpush.bf16.msra.mxu0 0
        %2467 = vmatpush.bf16.msra.mxu0 0
        %2468 = vmatpush.bf16.msra.mxu0 0
        %2469 = vmatpush.bf16.msra.mxu0 %v2379
        %2470 = vmatmul.bf16.gmra.mxu0 %v2358
        %v2471 = vpop.f32.mrf.mxu0
        %v2472 = vadd.f32 %v2354, %v2471
        %v2473 = vpop.f32.mrf.mxu0
        %2474 = vdwg.mxu0
        %2475 = vmatpush.bf16.msra.mxu0 0
        %2476 = vmatpush.bf16.msra.mxu0 0
        %2477 = vmatpush.bf16.msra.mxu0 0
        %2478 = vmatpush.bf16.msra.mxu0 0
        %2479 = vmatpush.bf16.msra.mxu0 0
        %2480 = vmatpush.bf16.msra.mxu0 0
        %2481 = vmatpush.bf16.msra.mxu0 0
        %2482 = vmatpush.bf16.msra.mxu0 %v2382
        %2483 = vmatmul.bf16.gmra.mxu0 %v2358
        %v2484 = vpop.f32.mrf.mxu0
        %v2485 = vadd.f32 %v2354, %v2484
        %v2486 = vpop.f32.mrf.mxu0
        %2487 = vdwg.mxu0
        %v2488 = vld [vmem:[#allocation7] sm:$0xff]
        %v2489 = vld [vmem:[#allocation7 + $0x8] sm:$0xff]
        %v2490 = vld [vmem:[#allocation7 + $0x10] sm:$0xff]
        %v2491 = vld [vmem:[#allocation7 + $0x18] sm:$0xff]
        %v2492 = vld [vmem:[#allocation7 + $0x20] sm:$0xff]
        %v2493 = vld [vmem:[#allocation7 + $0x28] sm:$0xff]
        %v2494 = vld [vmem:[#allocation7 + $0x30] sm:$0xff]
        %v2495 = vld [vmem:[#allocation7 + $0x38] sm:$0xff]
        %v2496 = vld [vmem:[#allocation7 + $0x40] sm:$0xff]
        %v2497 = vld [vmem:[#allocation7 + $0x48] sm:$0xff]
        %v2498 = vld [vmem:[#allocation7 + $0x50] sm:$0xff]
        %v2499 = vld [vmem:[#allocation7 + $0x58] sm:$0xff]
        %v2500 = vld [vmem:[#allocation7 + $0x60] sm:$0xff]
        %v2501 = vld [vmem:[#allocation7 + $0x68] sm:$0xff]
        %v2502 = vld [vmem:[#allocation7 + $0x70] sm:$0xff]
        %v2503 = vld [vmem:[#allocation7 + $0x78] sm:$0xff]
        %v2504 = vld [vmem:[#allocation7 + $0x80] sm:$0xff]
        %v2505 = vld [vmem:[#allocation7 + $0x88] sm:$0xff]
        %v2506 = vld [vmem:[#allocation7 + $0x90] sm:$0xff]
        %v2507 = vld [vmem:[#allocation7 + $0x98] sm:$0xff]
        %v2508 = vld [vmem:[#allocation7 + $0xa0] sm:$0xff]
        %v2509 = vld [vmem:[#allocation7 + $0xa8] sm:$0xff]
        %v2510 = vld [vmem:[#allocation7 + $0xb0] sm:$0xff]
        %v2511 = vld [vmem:[#allocation7 + $0xb8] sm:$0xff]
        %v2512 = vld [vmem:[#allocation7 + $0xc0] sm:$0xff]
        %v2513 = vld [vmem:[#allocation7 + $0xc8] sm:$0xff]
        %v2514 = vld [vmem:[#allocation7 + $0xd0] sm:$0xff]
        %v2515 = vld [vmem:[#allocation7 + $0xd8] sm:$0xff]
        %v2516 = vld [vmem:[#allocation7 + $0xe0] sm:$0xff]
        %v2517 = vld [vmem:[#allocation7 + $0xe8] sm:$0xff]
        %v2518 = vld [vmem:[#allocation7 + $0xf0] sm:$0xff]
        %v2519 = vld [vmem:[#allocation7 + $0xf8] sm:$0xff]
        %v2520 = vld [vmem:[#allocation7 + $0x100] sm:$0xff]
        %v2521 = vld [vmem:[#allocation7 + $0x108] sm:$0xff]
        %v2522 = vld [vmem:[#allocation7 + $0x110] sm:$0xff]
        %v2523 = vld [vmem:[#allocation7 + $0x118] sm:$0xff]
        %v2524 = vld [vmem:[#allocation7 + $0x120] sm:$0xff]
        %v2525 = vld [vmem:[#allocation7 + $0x128] sm:$0xff]
        %v2526 = vld [vmem:[#allocation7 + $0x130] sm:$0xff]
        %v2527 = vld [vmem:[#allocation7 + $0x138] sm:$0xff]
        %v2528 = vld [vmem:[#allocation7 + $0x140] sm:$0xff]
        %v2529 = vld [vmem:[#allocation7 + $0x148] sm:$0xff]
        %v2530 = vld [vmem:[#allocation7 + $0x150] sm:$0xff]
        %v2531 = vld [vmem:[#allocation7 + $0x158] sm:$0xff]
        %v2532 = vld [vmem:[#allocation7 + $0x160] sm:$0xff]
        %v2533 = vld [vmem:[#allocation7 + $0x168] sm:$0xff]
        %v2534 = vld [vmem:[#allocation7 + $0x170] sm:$0xff]
        %v2535 = vld [vmem:[#allocation7 + $0x178] sm:$0xff]
        %v2536 = vld [vmem:[#allocation7 + $0x180] sm:$0xff]
        %v2537 = vld [vmem:[#allocation7 + $0x188] sm:$0xff]
        %v2538 = vld [vmem:[#allocation7 + $0x190] sm:$0xff]
        %v2539 = vld [vmem:[#allocation7 + $0x198] sm:$0xff]
        %v2540 = vld [vmem:[#allocation7 + $0x1a0] sm:$0xff]
        %v2541 = vld [vmem:[#allocation7 + $0x1a8] sm:$0xff]
        %v2542 = vld [vmem:[#allocation7 + $0x1b0] sm:$0xff]
        %v2543 = vld [vmem:[#allocation7 + $0x1b8] sm:$0xff]
        %v2544 = vld [vmem:[#allocation7 + $0x1c0] sm:$0xff]
        %v2545 = vld [vmem:[#allocation7 + $0x1c8] sm:$0xff]
        %v2546 = vld [vmem:[#allocation7 + $0x1d0] sm:$0xff]
        %v2547 = vld [vmem:[#allocation7 + $0x1d8] sm:$0xff]
        %v2548 = vld [vmem:[#allocation7 + $0x1e0] sm:$0xff]
        %v2549 = vld [vmem:[#allocation7 + $0x1e8] sm:$0xff]
        %v2550 = vld [vmem:[#allocation7 + $0x1f0] sm:$0xff]
        %v2551 = vld [vmem:[#allocation7 + $0x1f8] sm:$0xff]
        %v2552 = vld [vmem:[#allocation7 + $0x200] sm:$0xff]
        %v2553 = vld [vmem:[#allocation7 + $0x208] sm:$0xff]
        %v2554 = vld [vmem:[#allocation7 + $0x210] sm:$0xff]
        %v2555 = vld [vmem:[#allocation7 + $0x218] sm:$0xff]
        %v2556 = vld [vmem:[#allocation7 + $0x220] sm:$0xff]
        %v2557 = vld [vmem:[#allocation7 + $0x228] sm:$0xff]
        %v2558 = vld [vmem:[#allocation7 + $0x230] sm:$0xff]
        %v2559 = vld [vmem:[#allocation7 + $0x238] sm:$0xff]
        %v2560 = vld [vmem:[#allocation7 + $0x240] sm:$0xff]
        %v2561 = vld [vmem:[#allocation7 + $0x248] sm:$0xff]
        %v2562 = vld [vmem:[#allocation7 + $0x250] sm:$0xff]
        %v2563 = vld [vmem:[#allocation7 + $0x258] sm:$0xff]
        %v2564 = vld [vmem:[#allocation7 + $0x260] sm:$0xff]
        %v2565 = vld [vmem:[#allocation7 + $0x268] sm:$0xff]
        %v2566 = vld [vmem:[#allocation7 + $0x270] sm:$0xff]
        %v2567 = vld [vmem:[#allocation7 + $0x278] sm:$0xff]
        %v2568 = vld [vmem:[#allocation7 + $0x280] sm:$0xff]
        %v2569 = vld [vmem:[#allocation7 + $0x288] sm:$0xff]
        %v2570 = vld [vmem:[#allocation7 + $0x290] sm:$0xff]
        %v2571 = vld [vmem:[#allocation7 + $0x298] sm:$0xff]
        %v2572 = vld [vmem:[#allocation7 + $0x2a0] sm:$0xff]
        %v2573 = vld [vmem:[#allocation7 + $0x2a8] sm:$0xff]
        %v2574 = vld [vmem:[#allocation7 + $0x2b0] sm:$0xff]
        %v2575 = vld [vmem:[#allocation7 + $0x2b8] sm:$0xff]
        %v2576 = vld [vmem:[#allocation7 + $0x2c0] sm:$0xff]
        %v2577 = vld [vmem:[#allocation7 + $0x2c8] sm:$0xff]
        %v2578 = vld [vmem:[#allocation7 + $0x2d0] sm:$0xff]
        %v2579 = vld [vmem:[#allocation7 + $0x2d8] sm:$0xff]
        %v2580 = vld [vmem:[#allocation7 + $0x2e0] sm:$0xff]
        %v2581 = vld [vmem:[#allocation7 + $0x2e8] sm:$0xff]
        %v2582 = vld [vmem:[#allocation7 + $0x2f0] sm:$0xff]
        %v2583 = vld [vmem:[#allocation7 + $0x2f8] sm:$0xff]
        %v2584 = vld [vmem:[#allocation7 + $0x300] sm:$0xff]
        %v2585 = vld [vmem:[#allocation7 + $0x308] sm:$0xff]
        %v2586 = vld [vmem:[#allocation7 + $0x310] sm:$0xff]
        %v2587 = vld [vmem:[#allocation7 + $0x318] sm:$0xff]
        %v2588 = vld [vmem:[#allocation7 + $0x320] sm:$0xff]
        %v2589 = vld [vmem:[#allocation7 + $0x328] sm:$0xff]
        %v2590 = vld [vmem:[#allocation7 + $0x330] sm:$0xff]
        %v2591 = vld [vmem:[#allocation7 + $0x338] sm:$0xff]
        %v2592 = vld [vmem:[#allocation7 + $0x340] sm:$0xff]
        %v2593 = vld [vmem:[#allocation7 + $0x348] sm:$0xff]
        %v2594 = vld [vmem:[#allocation7 + $0x350] sm:$0xff]
        %v2595 = vld [vmem:[#allocation7 + $0x358] sm:$0xff]
        %v2596 = vld [vmem:[#allocation7 + $0x360] sm:$0xff]
        %v2597 = vld [vmem:[#allocation7 + $0x368] sm:$0xff]
        %v2598 = vld [vmem:[#allocation7 + $0x370] sm:$0xff]
        %v2599 = vld [vmem:[#allocation7 + $0x378] sm:$0xff]
        %v2600 = vld [vmem:[#allocation7 + $0x380] sm:$0xff]
        %v2601 = vld [vmem:[#allocation7 + $0x388] sm:$0xff]
        %v2602 = vld [vmem:[#allocation7 + $0x390] sm:$0xff]
        %v2603 = vld [vmem:[#allocation7 + $0x398] sm:$0xff]
        %v2604 = vld [vmem:[#allocation7 + $0x3a0] sm:$0xff]
        %v2605 = vld [vmem:[#allocation7 + $0x3a8] sm:$0xff]
        %v2606 = vld [vmem:[#allocation7 + $0x3b0] sm:$0xff]
        %v2607 = vld [vmem:[#allocation7 + $0x3b8] sm:$0xff]
        %v2608 = vld [vmem:[#allocation7 + $0x3c0] sm:$0xff]
        %v2609 = vld [vmem:[#allocation7 + $0x3c8] sm:$0xff]
        %v2610 = vld [vmem:[#allocation7 + $0x3d0] sm:$0xff]
        %v2611 = vld [vmem:[#allocation7 + $0x3d8] sm:$0xff]
        %v2612 = vld [vmem:[#allocation7 + $0x3e0] sm:$0xff]
        %v2613 = vld [vmem:[#allocation7 + $0x3e8] sm:$0xff]
        %v2614 = vld [vmem:[#allocation7 + $0x3f0] sm:$0xff]
        %v2615 = vld [vmem:[#allocation7 + $0x3f8] sm:$0xff]
        %v2616 = vpack.c.bf16 %v571, %v571
        %v2617 = vpack.c.bf16 %v584, %v584
        %v2746 = vunpack.c.l.b16 %v2488
        %v2747 = vunpack.c.h.b16 %v2488
        %v2748 = vunpack.c.l.b16 %v2489
        %v2749 = vunpack.c.h.b16 %v2489
        %v2750 = vunpack.c.l.b16 %v2490
        %v2751 = vunpack.c.h.b16 %v2490
        %v2752 = vunpack.c.l.b16 %v2491
        %v2753 = vunpack.c.h.b16 %v2491
        %v2754 = vunpack.c.l.b16 %v2492
        %v2755 = vunpack.c.h.b16 %v2492
        %v2756 = vunpack.c.l.b16 %v2493
        %v2757 = vunpack.c.h.b16 %v2493
        %v2758 = vunpack.c.l.b16 %v2494
        %v2759 = vunpack.c.h.b16 %v2494
        %v2760 = vunpack.c.l.b16 %v2495
        %v2761 = vunpack.c.h.b16 %v2495
        %v2762 = vunpack.c.l.b16 %v2496
        %v2763 = vunpack.c.h.b16 %v2496
        %v2764 = vunpack.c.l.b16 %v2497
        %v2765 = vunpack.c.h.b16 %v2497
        %v2766 = vunpack.c.l.b16 %v2498
        %v2767 = vunpack.c.h.b16 %v2498
        %v2768 = vunpack.c.l.b16 %v2499
        %v2769 = vunpack.c.h.b16 %v2499
        %v2770 = vunpack.c.l.b16 %v2500
        %v2771 = vunpack.c.h.b16 %v2500
        %v2772 = vunpack.c.l.b16 %v2501
        %v2773 = vunpack.c.h.b16 %v2501
        %v2774 = vunpack.c.l.b16 %v2502
        %v2775 = vunpack.c.h.b16 %v2502
        %v2776 = vunpack.c.l.b16 %v2503
        %v2777 = vunpack.c.h.b16 %v2503
        %v2778 = vunpack.c.l.b16 %v2504
        %v2779 = vunpack.c.h.b16 %v2504
        %v2780 = vunpack.c.l.b16 %v2505
        %v2781 = vunpack.c.h.b16 %v2505
        %v2782 = vunpack.c.l.b16 %v2506
        %v2783 = vunpack.c.h.b16 %v2506
        %v2784 = vunpack.c.l.b16 %v2507
        %v2785 = vunpack.c.h.b16 %v2507
        %v2786 = vunpack.c.l.b16 %v2508
        %v2787 = vunpack.c.h.b16 %v2508
        %v2788 = vunpack.c.l.b16 %v2509
        %v2789 = vunpack.c.h.b16 %v2509
        %v2790 = vunpack.c.l.b16 %v2510
        %v2791 = vunpack.c.h.b16 %v2510
        %v2792 = vunpack.c.l.b16 %v2511
        %v2793 = vunpack.c.h.b16 %v2511
        %v2794 = vunpack.c.l.b16 %v2512
        %v2795 = vunpack.c.h.b16 %v2512
        %v2796 = vunpack.c.l.b16 %v2513
        %v2797 = vunpack.c.h.b16 %v2513
        %v2798 = vunpack.c.l.b16 %v2514
        %v2799 = vunpack.c.h.b16 %v2514
        %v2800 = vunpack.c.l.b16 %v2515
        %v2801 = vunpack.c.h.b16 %v2515
        %v2802 = vunpack.c.l.b16 %v2516
        %v2803 = vunpack.c.h.b16 %v2516
        %v2804 = vunpack.c.l.b16 %v2517
        %v2805 = vunpack.c.h.b16 %v2517
        %v2806 = vunpack.c.l.b16 %v2518
        %v2807 = vunpack.c.h.b16 %v2518
        %v2808 = vunpack.c.l.b16 %v2519
        %v2809 = vunpack.c.h.b16 %v2519
        %v2810 = vunpack.c.l.b16 %v2520
        %v2811 = vunpack.c.h.b16 %v2520
        %v2812 = vunpack.c.l.b16 %v2521
        %v2813 = vunpack.c.h.b16 %v2521
        %v2814 = vunpack.c.l.b16 %v2522
        %v2815 = vunpack.c.h.b16 %v2522
        %v2816 = vunpack.c.l.b16 %v2523
        %v2817 = vunpack.c.h.b16 %v2523
        %v2818 = vunpack.c.l.b16 %v2524
        %v2819 = vunpack.c.h.b16 %v2524
        %v2820 = vunpack.c.l.b16 %v2525
        %v2821 = vunpack.c.h.b16 %v2525
        %v2822 = vunpack.c.l.b16 %v2526
        %v2823 = vunpack.c.h.b16 %v2526
        %v2824 = vunpack.c.l.b16 %v2527
        %v2825 = vunpack.c.h.b16 %v2527
        %v2826 = vunpack.c.l.b16 %v2528
        %v2827 = vunpack.c.h.b16 %v2528
        %v2828 = vunpack.c.l.b16 %v2529
        %v2829 = vunpack.c.h.b16 %v2529
        %v2830 = vunpack.c.l.b16 %v2530
        %v2831 = vunpack.c.h.b16 %v2530
        %v2832 = vunpack.c.l.b16 %v2531
        %v2833 = vunpack.c.h.b16 %v2531
        %v2834 = vunpack.c.l.b16 %v2532
        %v2835 = vunpack.c.h.b16 %v2532
        %v2836 = vunpack.c.l.b16 %v2533
        %v2837 = vunpack.c.h.b16 %v2533
        %v2838 = vunpack.c.l.b16 %v2534
        %v2839 = vunpack.c.h.b16 %v2534
        %v2840 = vunpack.c.l.b16 %v2535
        %v2841 = vunpack.c.h.b16 %v2535
        %v2842 = vunpack.c.l.b16 %v2536
        %v2843 = vunpack.c.h.b16 %v2536
        %v2844 = vunpack.c.l.b16 %v2537
        %v2845 = vunpack.c.h.b16 %v2537
        %v2846 = vunpack.c.l.b16 %v2538
        %v2847 = vunpack.c.h.b16 %v2538
        %v2848 = vunpack.c.l.b16 %v2539
        %v2849 = vunpack.c.h.b16 %v2539
        %v2850 = vunpack.c.l.b16 %v2540
        %v2851 = vunpack.c.h.b16 %v2540
        %v2852 = vunpack.c.l.b16 %v2541
        %v2853 = vunpack.c.h.b16 %v2541
        %v2854 = vunpack.c.l.b16 %v2542
        %v2855 = vunpack.c.h.b16 %v2542
        %v2856 = vunpack.c.l.b16 %v2543
        %v2857 = vunpack.c.h.b16 %v2543
        %v2858 = vunpack.c.l.b16 %v2544
        %v2859 = vunpack.c.h.b16 %v2544
        %v2860 = vunpack.c.l.b16 %v2545
        %v2861 = vunpack.c.h.b16 %v2545
        %v2862 = vunpack.c.l.b16 %v2546
        %v2863 = vunpack.c.h.b16 %v2546
        %v2864 = vunpack.c.l.b16 %v2547
        %v2865 = vunpack.c.h.b16 %v2547
        %v2866 = vunpack.c.l.b16 %v2548
        %v2867 = vunpack.c.h.b16 %v2548
        %v2868 = vunpack.c.l.b16 %v2549
        %v2869 = vunpack.c.h.b16 %v2549
        %v2870 = vunpack.c.l.b16 %v2550
        %v2871 = vunpack.c.h.b16 %v2550
        %v2872 = vunpack.c.l.b16 %v2551
        %v2873 = vunpack.c.h.b16 %v2551
        %v2874 = vunpack.c.l.b16 %v2552
        %v2875 = vunpack.c.h.b16 %v2552
        %v2876 = vunpack.c.l.b16 %v2553
        %v2877 = vunpack.c.h.b16 %v2553
        %v2878 = vunpack.c.l.b16 %v2554
        %v2879 = vunpack.c.h.b16 %v2554
        %v2880 = vunpack.c.l.b16 %v2555
        %v2881 = vunpack.c.h.b16 %v2555
        %v2882 = vunpack.c.l.b16 %v2556
        %v2883 = vunpack.c.h.b16 %v2556
        %v2884 = vunpack.c.l.b16 %v2557
        %v2885 = vunpack.c.h.b16 %v2557
        %v2886 = vunpack.c.l.b16 %v2558
        %v2887 = vunpack.c.h.b16 %v2558
        %v2888 = vunpack.c.l.b16 %v2559
        %v2889 = vunpack.c.h.b16 %v2559
        %v2890 = vunpack.c.l.b16 %v2560
        %v2891 = vunpack.c.h.b16 %v2560
        %v2892 = vunpack.c.l.b16 %v2561
        %v2893 = vunpack.c.h.b16 %v2561
        %v2894 = vunpack.c.l.b16 %v2562
        %v2895 = vunpack.c.h.b16 %v2562
        %v2896 = vunpack.c.l.b16 %v2563
        %v2897 = vunpack.c.h.b16 %v2563
        %v2898 = vunpack.c.l.b16 %v2564
        %v2899 = vunpack.c.h.b16 %v2564
        %v2900 = vunpack.c.l.b16 %v2565
        %v2901 = vunpack.c.h.b16 %v2565
        %v2902 = vunpack.c.l.b16 %v2566
        %v2903 = vunpack.c.h.b16 %v2566
        %v2904 = vunpack.c.l.b16 %v2567
        %v2905 = vunpack.c.h.b16 %v2567
        %v2906 = vunpack.c.l.b16 %v2568
        %v2907 = vunpack.c.h.b16 %v2568
        %v2908 = vunpack.c.l.b16 %v2569
        %v2909 = vunpack.c.h.b16 %v2569
        %v2910 = vunpack.c.l.b16 %v2570
        %v2911 = vunpack.c.h.b16 %v2570
        %v2912 = vunpack.c.l.b16 %v2571
        %v2913 = vunpack.c.h.b16 %v2571
        %v2914 = vunpack.c.l.b16 %v2572
        %v2915 = vunpack.c.h.b16 %v2572
        %v2916 = vunpack.c.l.b16 %v2573
        %v2917 = vunpack.c.h.b16 %v2573
        %v2918 = vunpack.c.l.b16 %v2574
        %v2919 = vunpack.c.h.b16 %v2574
        %v2920 = vunpack.c.l.b16 %v2575
        %v2921 = vunpack.c.h.b16 %v2575
        %v2922 = vunpack.c.l.b16 %v2576
        %v2923 = vunpack.c.h.b16 %v2576
        %v2924 = vunpack.c.l.b16 %v2577
        %v2925 = vunpack.c.h.b16 %v2577
        %v2926 = vunpack.c.l.b16 %v2578
        %v2927 = vunpack.c.h.b16 %v2578
        %v2928 = vunpack.c.l.b16 %v2579
        %v2929 = vunpack.c.h.b16 %v2579
        %v2930 = vunpack.c.l.b16 %v2580
        %v2931 = vunpack.c.h.b16 %v2580
        %v2932 = vunpack.c.l.b16 %v2581
        %v2933 = vunpack.c.h.b16 %v2581
        %v2934 = vunpack.c.l.b16 %v2582
        %v2935 = vunpack.c.h.b16 %v2582
        %v2936 = vunpack.c.l.b16 %v2583
        %v2937 = vunpack.c.h.b16 %v2583
        %v2938 = vunpack.c.l.b16 %v2584
        %v2939 = vunpack.c.h.b16 %v2584
        %v2940 = vunpack.c.l.b16 %v2585
        %v2941 = vunpack.c.h.b16 %v2585
        %v2942 = vunpack.c.l.b16 %v2586
        %v2943 = vunpack.c.h.b16 %v2586
        %v2944 = vunpack.c.l.b16 %v2587
        %v2945 = vunpack.c.h.b16 %v2587
        %v2946 = vunpack.c.l.b16 %v2588
        %v2947 = vunpack.c.h.b16 %v2588
        %v2948 = vunpack.c.l.b16 %v2589
        %v2949 = vunpack.c.h.b16 %v2589
        %v2950 = vunpack.c.l.b16 %v2590
        %v2951 = vunpack.c.h.b16 %v2590
        %v2952 = vunpack.c.l.b16 %v2591
        %v2953 = vunpack.c.h.b16 %v2591
        %v2954 = vunpack.c.l.b16 %v2592
        %v2955 = vunpack.c.h.b16 %v2592
        %v2956 = vunpack.c.l.b16 %v2593
        %v2957 = vunpack.c.h.b16 %v2593
        %v2958 = vunpack.c.l.b16 %v2594
        %v2959 = vunpack.c.h.b16 %v2594
        %v2960 = vunpack.c.l.b16 %v2595
        %v2961 = vunpack.c.h.b16 %v2595
        %v2962 = vunpack.c.l.b16 %v2596
        %v2963 = vunpack.c.h.b16 %v2596
        %v2964 = vunpack.c.l.b16 %v2597
        %v2965 = vunpack.c.h.b16 %v2597
        %v2966 = vunpack.c.l.b16 %v2598
        %v2967 = vunpack.c.h.b16 %v2598
        %v2968 = vunpack.c.l.b16 %v2599
        %v2969 = vunpack.c.h.b16 %v2599
        %v2970 = vunpack.c.l.b16 %v2600
        %v2971 = vunpack.c.h.b16 %v2600
        %v2972 = vunpack.c.l.b16 %v2601
        %v2973 = vunpack.c.h.b16 %v2601
        %v2974 = vunpack.c.l.b16 %v2602
        %v2975 = vunpack.c.h.b16 %v2602
        %v2976 = vunpack.c.l.b16 %v2603
        %v2977 = vunpack.c.h.b16 %v2603
        %v2978 = vunpack.c.l.b16 %v2604
        %v2979 = vunpack.c.h.b16 %v2604
        %v2980 = vunpack.c.l.b16 %v2605
        %v2981 = vunpack.c.h.b16 %v2605
        %v2982 = vunpack.c.l.b16 %v2606
        %v2983 = vunpack.c.h.b16 %v2606
        %v2984 = vunpack.c.l.b16 %v2607
        %v2985 = vunpack.c.h.b16 %v2607
        %v2986 = vunpack.c.l.b16 %v2608
        %v2987 = vunpack.c.h.b16 %v2608
        %v2988 = vunpack.c.l.b16 %v2609
        %v2989 = vunpack.c.h.b16 %v2609
        %v2990 = vunpack.c.l.b16 %v2610
        %v2991 = vunpack.c.h.b16 %v2610
        %v2992 = vunpack.c.l.b16 %v2611
        %v2993 = vunpack.c.h.b16 %v2611
        %v2994 = vunpack.c.l.b16 %v2612
        %v2995 = vunpack.c.h.b16 %v2612
        %v2996 = vunpack.c.l.b16 %v2613
        %v2997 = vunpack.c.h.b16 %v2613
        %v2998 = vunpack.c.l.b16 %v2614
        %v2999 = vunpack.c.h.b16 %v2614
        %v3000 = vunpack.c.l.b16 %v2615
        %v3001 = vunpack.c.h.b16 %v2615
        %v3002 = vpack.c.b16 %v2754, %v2746
        %v3003 = vpack.c.b16 %v2755, %v2747
        %v3004 = vpack.c.b16 %v2756, %v2748
        %v3005 = vpack.c.b16 %v2757, %v2749
        %v3006 = vpack.c.b16 %v2758, %v2750
        %v3007 = vpack.c.b16 %v2759, %v2751
        %v3008 = vpack.c.b16 %v2760, %v2752
        %v3009 = vpack.c.b16 %v2761, %v2753
        %v3010 = vpack.c.b16 %v2770, %v2762
        %v3011 = vpack.c.b16 %v2771, %v2763
        %v3012 = vpack.c.b16 %v2772, %v2764
        %v3013 = vpack.c.b16 %v2773, %v2765
        %v3014 = vpack.c.b16 %v2774, %v2766
        %v3015 = vpack.c.b16 %v2775, %v2767
        %v3016 = vpack.c.b16 %v2776, %v2768
        %v3017 = vpack.c.b16 %v2777, %v2769
        %v3018 = vpack.c.b16 %v2786, %v2778
        %v3019 = vpack.c.b16 %v2787, %v2779
        %v3020 = vpack.c.b16 %v2788, %v2780
        %v3021 = vpack.c.b16 %v2789, %v2781
        %v3022 = vpack.c.b16 %v2790, %v2782
        %v3023 = vpack.c.b16 %v2791, %v2783
        %v3024 = vpack.c.b16 %v2792, %v2784
        %v3025 = vpack.c.b16 %v2793, %v2785
        %v3026 = vpack.c.b16 %v2802, %v2794
        %v3027 = vpack.c.b16 %v2803, %v2795
        %v3028 = vpack.c.b16 %v2804, %v2796
        %v3029 = vpack.c.b16 %v2805, %v2797
        %v3030 = vpack.c.b16 %v2806, %v2798
        %v3031 = vpack.c.b16 %v2807, %v2799
        %v3032 = vpack.c.b16 %v2808, %v2800
        %v3033 = vpack.c.b16 %v2809, %v2801
        %v3034 = vpack.c.b16 %v2818, %v2810
        %v3035 = vpack.c.b16 %v2819, %v2811
        %v3036 = vpack.c.b16 %v2820, %v2812
        %v3037 = vpack.c.b16 %v2821, %v2813
        %v3038 = vpack.c.b16 %v2822, %v2814
        %v3039 = vpack.c.b16 %v2823, %v2815
        %v3040 = vpack.c.b16 %v2824, %v2816
        %v3041 = vpack.c.b16 %v2825, %v2817
        %v3042 = vpack.c.b16 %v2834, %v2826
        %v3043 = vpack.c.b16 %v2835, %v2827
        %v3044 = vpack.c.b16 %v2836, %v2828
        %v3045 = vpack.c.b16 %v2837, %v2829
        %v3046 = vpack.c.b16 %v2838, %v2830
        %v3047 = vpack.c.b16 %v2839, %v2831
        %v3048 = vpack.c.b16 %v2840, %v2832
        %v3049 = vpack.c.b16 %v2841, %v2833
        %v3050 = vpack.c.b16 %v2850, %v2842
        %v3051 = vpack.c.b16 %v2851, %v2843
        %v3052 = vpack.c.b16 %v2852, %v2844
        %v3053 = vpack.c.b16 %v2853, %v2845
        %v3054 = vpack.c.b16 %v2854, %v2846
        %v3055 = vpack.c.b16 %v2855, %v2847
        %v3056 = vpack.c.b16 %v2856, %v2848
        %v3057 = vpack.c.b16 %v2857, %v2849
        %v3058 = vpack.c.b16 %v2866, %v2858
        %v3059 = vpack.c.b16 %v2867, %v2859
        %v3060 = vpack.c.b16 %v2868, %v2860
        %v3061 = vpack.c.b16 %v2869, %v2861
        %v3062 = vpack.c.b16 %v2870, %v2862
        %v3063 = vpack.c.b16 %v2871, %v2863
        %v3064 = vpack.c.b16 %v2872, %v2864
        %v3065 = vpack.c.b16 %v2873, %v2865
        %v3066 = vpack.c.b16 %v2882, %v2874
        %v3067 = vpack.c.b16 %v2883, %v2875
        %v3068 = vpack.c.b16 %v2884, %v2876
        %v3069 = vpack.c.b16 %v2885, %v2877
        %v3070 = vpack.c.b16 %v2886, %v2878
        %v3071 = vpack.c.b16 %v2887, %v2879
        %v3072 = vpack.c.b16 %v2888, %v2880
        %v3073 = vpack.c.b16 %v2889, %v2881
        %v3074 = vpack.c.b16 %v2898, %v2890
        %v3075 = vpack.c.b16 %v2899, %v2891
        %v3076 = vpack.c.b16 %v2900, %v2892
        %v3077 = vpack.c.b16 %v2901, %v2893
        %v3078 = vpack.c.b16 %v2902, %v2894
        %v3079 = vpack.c.b16 %v2903, %v2895
        %v3080 = vpack.c.b16 %v2904, %v2896
        %v3081 = vpack.c.b16 %v2905, %v2897
        %v3082 = vpack.c.b16 %v2914, %v2906
        %v3083 = vpack.c.b16 %v2915, %v2907
        %v3084 = vpack.c.b16 %v2916, %v2908
        %v3085 = vpack.c.b16 %v2917, %v2909
        %v3086 = vpack.c.b16 %v2918, %v2910
        %v3087 = vpack.c.b16 %v2919, %v2911
        %v3088 = vpack.c.b16 %v2920, %v2912
        %v3089 = vpack.c.b16 %v2921, %v2913
        %v3090 = vpack.c.b16 %v2930, %v2922
        %v3091 = vpack.c.b16 %v2931, %v2923
        %v3092 = vpack.c.b16 %v2932, %v2924
        %v3093 = vpack.c.b16 %v2933, %v2925
        %v3094 = vpack.c.b16 %v2934, %v2926
        %v3095 = vpack.c.b16 %v2935, %v2927
        %v3096 = vpack.c.b16 %v2936, %v2928
        %v3097 = vpack.c.b16 %v2937, %v2929
        %v3098 = vpack.c.b16 %v2946, %v2938
        %v3099 = vpack.c.b16 %v2947, %v2939
        %v3100 = vpack.c.b16 %v2948, %v2940
        %v3101 = vpack.c.b16 %v2949, %v2941
        %v3102 = vpack.c.b16 %v2950, %v2942
        %v3103 = vpack.c.b16 %v2951, %v2943
        %v3104 = vpack.c.b16 %v2952, %v2944
        %v3105 = vpack.c.b16 %v2953, %v2945
        %v3106 = vpack.c.b16 %v2962, %v2954
        %v3107 = vpack.c.b16 %v2963, %v2955
        %v3108 = vpack.c.b16 %v2964, %v2956
        %v3109 = vpack.c.b16 %v2965, %v2957
        %v3110 = vpack.c.b16 %v2966, %v2958
        %v3111 = vpack.c.b16 %v2967, %v2959
        %v3112 = vpack.c.b16 %v2968, %v2960
        %v3113 = vpack.c.b16 %v2969, %v2961
        %v3114 = vpack.c.b16 %v2978, %v2970
        %v3115 = vpack.c.b16 %v2979, %v2971
        %v3116 = vpack.c.b16 %v2980, %v2972
        %v3117 = vpack.c.b16 %v2981, %v2973
        %v3118 = vpack.c.b16 %v2982, %v2974
        %v3119 = vpack.c.b16 %v2983, %v2975
        %v3120 = vpack.c.b16 %v2984, %v2976
        %v3121 = vpack.c.b16 %v2985, %v2977
        %v3122 = vpack.c.b16 %v2994, %v2986
        %v3123 = vpack.c.b16 %v2995, %v2987
        %v3124 = vpack.c.b16 %v2996, %v2988
        %v3125 = vpack.c.b16 %v2997, %v2989
        %v3126 = vpack.c.b16 %v2998, %v2990
        %v3127 = vpack.c.b16 %v2999, %v2991
        %v3128 = vpack.c.b16 %v3000, %v2992
        %v3129 = vpack.c.b16 %v3001, %v2993
        %3258 = vmatpush.bf16.msra.mxu0 %v3058
        %3259 = vmatpush.bf16.msra.mxu0 %v3050
        %3260 = vmatpush.bf16.msra.mxu0 %v3042
        %3261 = vmatpush.bf16.msra.mxu0 %v3034
        %3262 = vmatpush.bf16.msra.mxu0 %v3026
        %3263 = vmatpush.bf16.msra.mxu0 %v3018
        %3264 = vmatpush.bf16.msra.mxu0 %v3010
        %3265 = vmatpush.bf16.msra.mxu0 %v3002
        %3266 = vmatmul.bf16.gmra.mxu0 %v2616
        %v3267 = vpop.f32.mrf.mxu0
        %v3268 = vadd.f32 %v2394, %v3267
        %v3269 = vpop.f32.mrf.mxu0
        %3270 = vdwg.mxu0
        %3271 = vmatpush.bf16.msra.mxu0 %v3122
        %3272 = vmatpush.bf16.msra.mxu0 %v3114
        %3273 = vmatpush.bf16.msra.mxu0 %v3106
        %3274 = vmatpush.bf16.msra.mxu0 %v3098
        %3275 = vmatpush.bf16.msra.mxu0 %v3090
        %3276 = vmatpush.bf16.msra.mxu0 %v3082
        %3277 = vmatpush.bf16.msra.mxu0 %v3074
        %3278 = vmatpush.bf16.msra.mxu0 %v3066
        %3279 = vmatmul.bf16.gmra.mxu0 %v2617
        %v3280 = vpop.f32.mrf.mxu0
        %v3281 = vadd.f32 %v3268, %v3280
        %v3282 = vpop.f32.mrf.mxu0
        %3283 = vdwg.mxu0
        %3284 = vmatpush.bf16.msra.mxu0 %v3059
        %3285 = vmatpush.bf16.msra.mxu0 %v3051
        %3286 = vmatpush.bf16.msra.mxu0 %v3043
        %3287 = vmatpush.bf16.msra.mxu0 %v3035
        %3288 = vmatpush.bf16.msra.mxu0 %v3027
        %3289 = vmatpush.bf16.msra.mxu0 %v3019
        %3290 = vmatpush.bf16.msra.mxu0 %v3011
        %3291 = vmatpush.bf16.msra.mxu0 %v3003
        %3292 = vmatmul.bf16.gmra.mxu0 %v2616
        %v3293 = vpop.f32.mrf.mxu0
        %v3294 = vadd.f32 %v2407, %v3293
        %v3295 = vpop.f32.mrf.mxu0
        %3296 = vdwg.mxu0
        %3297 = vmatpush.bf16.msra.mxu0 %v3123
        %3298 = vmatpush.bf16.msra.mxu0 %v3115
        %3299 = vmatpush.bf16.msra.mxu0 %v3107
        %3300 = vmatpush.bf16.msra.mxu0 %v3099
        %3301 = vmatpush.bf16.msra.mxu0 %v3091
        %3302 = vmatpush.bf16.msra.mxu0 %v3083
        %3303 = vmatpush.bf16.msra.mxu0 %v3075
        %3304 = vmatpush.bf16.msra.mxu0 %v3067
        %3305 = vmatmul.bf16.gmra.mxu0 %v2617
        %v3306 = vpop.f32.mrf.mxu0
        %v3307 = vadd.f32 %v3294, %v3306
        %v3308 = vpop.f32.mrf.mxu0
        %3309 = vdwg.mxu0
        %3310 = vmatpush.bf16.msra.mxu0 %v3060
        %3311 = vmatpush.bf16.msra.mxu0 %v3052
        %3312 = vmatpush.bf16.msra.mxu0 %v3044
        %3313 = vmatpush.bf16.msra.mxu0 %v3036
        %3314 = vmatpush.bf16.msra.mxu0 %v3028
        %3315 = vmatpush.bf16.msra.mxu0 %v3020
        %3316 = vmatpush.bf16.msra.mxu0 %v3012
        %3317 = vmatpush.bf16.msra.mxu0 %v3004
        %3318 = vmatmul.bf16.gmra.mxu0 %v2616
        %v3319 = vpop.f32.mrf.mxu0
        %v3320 = vadd.f32 %v2420, %v3319
        %v3321 = vpop.f32.mrf.mxu0
        %3322 = vdwg.mxu0
        %3323 = vmatpush.bf16.msra.mxu0 %v3124
        %3324 = vmatpush.bf16.msra.mxu0 %v3116
        %3325 = vmatpush.bf16.msra.mxu0 %v3108
        %3326 = vmatpush.bf16.msra.mxu0 %v3100
        %3327 = vmatpush.bf16.msra.mxu0 %v3092
        %3328 = vmatpush.bf16.msra.mxu0 %v3084
        %3329 = vmatpush.bf16.msra.mxu0 %v3076
        %3330 = vmatpush.bf16.msra.mxu0 %v3068
        %3331 = vmatmul.bf16.gmra.mxu0 %v2617
        %v3332 = vpop.f32.mrf.mxu0
        %v3333 = vadd.f32 %v3320, %v3332
        %v3334 = vpop.f32.mrf.mxu0
        %3335 = vdwg.mxu0
        %3336 = vmatpush.bf16.msra.mxu0 %v3061
        %3337 = vmatpush.bf16.msra.mxu0 %v3053
        %3338 = vmatpush.bf16.msra.mxu0 %v3045
        %3339 = vmatpush.bf16.msra.mxu0 %v3037
        %3340 = vmatpush.bf16.msra.mxu0 %v3029
        %3341 = vmatpush.bf16.msra.mxu0 %v3021
        %3342 = vmatpush.bf16.msra.mxu0 %v3013
        %3343 = vmatpush.bf16.msra.mxu0 %v3005
        %3344 = vmatmul.bf16.gmra.mxu0 %v2616
        %v3345 = vpop.f32.mrf.mxu0
        %v3346 = vadd.f32 %v2433, %v3345
        %v3347 = vpop.f32.mrf.mxu0
        %3348 = vdwg.mxu0
        %3349 = vmatpush.bf16.msra.mxu0 %v3125
        %3350 = vmatpush.bf16.msra.mxu0 %v3117
        %3351 = vmatpush.bf16.msra.mxu0 %v3109
        %3352 = vmatpush.bf16.msra.mxu0 %v3101
        %3353 = vmatpush.bf16.msra.mxu0 %v3093
        %3354 = vmatpush.bf16.msra.mxu0 %v3085
        %3355 = vmatpush.bf16.msra.mxu0 %v3077
        %3356 = vmatpush.bf16.msra.mxu0 %v3069
        %3357 = vmatmul.bf16.gmra.mxu0 %v2617
        %v3358 = vpop.f32.mrf.mxu0
        %v3359 = vadd.f32 %v3346, %v3358
        %v3360 = vpop.f32.mrf.mxu0
        %3361 = vdwg.mxu0
        %3362 = vmatpush.bf16.msra.mxu0 %v3062
        %3363 = vmatpush.bf16.msra.mxu0 %v3054
        %3364 = vmatpush.bf16.msra.mxu0 %v3046
        %3365 = vmatpush.bf16.msra.mxu0 %v3038
        %3366 = vmatpush.bf16.msra.mxu0 %v3030
        %3367 = vmatpush.bf16.msra.mxu0 %v3022
        %3368 = vmatpush.bf16.msra.mxu0 %v3014
        %3369 = vmatpush.bf16.msra.mxu0 %v3006
        %3370 = vmatmul.bf16.gmra.mxu0 %v2616
        %v3371 = vpop.f32.mrf.mxu0
        %v3372 = vadd.f32 %v2446, %v3371
        %v3373 = vpop.f32.mrf.mxu0
        %3374 = vdwg.mxu0
        %3375 = vmatpush.bf16.msra.mxu0 %v3126
        %3376 = vmatpush.bf16.msra.mxu0 %v3118
        %3377 = vmatpush.bf16.msra.mxu0 %v3110
        %3378 = vmatpush.bf16.msra.mxu0 %v3102
        %3379 = vmatpush.bf16.msra.mxu0 %v3094
        %3380 = vmatpush.bf16.msra.mxu0 %v3086
        %3381 = vmatpush.bf16.msra.mxu0 %v3078
        %3382 = vmatpush.bf16.msra.mxu0 %v3070
        %3383 = vmatmul.bf16.gmra.mxu0 %v2617
        %v3384 = vpop.f32.mrf.mxu0
        %v3385 = vadd.f32 %v3372, %v3384
        %v3386 = vpop.f32.mrf.mxu0
        %3387 = vdwg.mxu0
        %3388 = vmatpush.bf16.msra.mxu0 %v3063
        %3389 = vmatpush.bf16.msra.mxu0 %v3055
        %3390 = vmatpush.bf16.msra.mxu0 %v3047
        %3391 = vmatpush.bf16.msra.mxu0 %v3039
        %3392 = vmatpush.bf16.msra.mxu0 %v3031
        %3393 = vmatpush.bf16.msra.mxu0 %v3023
        %3394 = vmatpush.bf16.msra.mxu0 %v3015
        %3395 = vmatpush.bf16.msra.mxu0 %v3007
        %3396 = vmatmul.bf16.gmra.mxu0 %v2616
        %v3397 = vpop.f32.mrf.mxu0
        %v3398 = vadd.f32 %v2459, %v3397
        %v3399 = vpop.f32.mrf.mxu0
        %3400 = vdwg.mxu0
        %3401 = vmatpush.bf16.msra.mxu0 %v3127
        %3402 = vmatpush.bf16.msra.mxu0 %v3119
        %3403 = vmatpush.bf16.msra.mxu0 %v3111
        %3404 = vmatpush.bf16.msra.mxu0 %v3103
        %3405 = vmatpush.bf16.msra.mxu0 %v3095
        %3406 = vmatpush.bf16.msra.mxu0 %v3087
        %3407 = vmatpush.bf16.msra.mxu0 %v3079
        %3408 = vmatpush.bf16.msra.mxu0 %v3071
        %3409 = vmatmul.bf16.gmra.mxu0 %v2617
        %v3410 = vpop.f32.mrf.mxu0
        %v3411 = vadd.f32 %v3398, %v3410
        %v3412 = vpop.f32.mrf.mxu0
        %3413 = vdwg.mxu0
        %3414 = vmatpush.bf16.msra.mxu0 %v3064
        %3415 = vmatpush.bf16.msra.mxu0 %v3056
        %3416 = vmatpush.bf16.msra.mxu0 %v3048
        %3417 = vmatpush.bf16.msra.mxu0 %v3040
        %3418 = vmatpush.bf16.msra.mxu0 %v3032
        %3419 = vmatpush.bf16.msra.mxu0 %v3024
        %3420 = vmatpush.bf16.msra.mxu0 %v3016
        %3421 = vmatpush.bf16.msra.mxu0 %v3008
        %3422 = vmatmul.bf16.gmra.mxu0 %v2616
        %v3423 = vpop.f32.mrf.mxu0
        %v3424 = vadd.f32 %v2472, %v3423
        %v3425 = vpop.f32.mrf.mxu0
        %3426 = vdwg.mxu0
        %3427 = vmatpush.bf16.msra.mxu0 %v3128
        %3428 = vmatpush.bf16.msra.mxu0 %v3120
        %3429 = vmatpush.bf16.msra.mxu0 %v3112
        %3430 = vmatpush.bf16.msra.mxu0 %v3104
        %3431 = vmatpush.bf16.msra.mxu0 %v3096
        %3432 = vmatpush.bf16.msra.mxu0 %v3088
        %3433 = vmatpush.bf16.msra.mxu0 %v3080
        %3434 = vmatpush.bf16.msra.mxu0 %v3072
        %3435 = vmatmul.bf16.gmra.mxu0 %v2617
        %v3436 = vpop.f32.mrf.mxu0
        %v3437 = vadd.f32 %v3424, %v3436
        %v3438 = vpop.f32.mrf.mxu0
        %3439 = vdwg.mxu0
        %3440 = vmatpush.bf16.msra.mxu0 %v3065
        %3441 = vmatpush.bf16.msra.mxu0 %v3057
        %3442 = vmatpush.bf16.msra.mxu0 %v3049
        %3443 = vmatpush.bf16.msra.mxu0 %v3041
        %3444 = vmatpush.bf16.msra.mxu0 %v3033
        %3445 = vmatpush.bf16.msra.mxu0 %v3025
        %3446 = vmatpush.bf16.msra.mxu0 %v3017
        %3447 = vmatpush.bf16.msra.mxu0 %v3009
        %3448 = vmatmul.bf16.gmra.mxu0 %v2616
        %v3449 = vpop.f32.mrf.mxu0
        %v3450 = vadd.f32 %v2485, %v3449
        %v3451 = vpop.f32.mrf.mxu0
        %3452 = vdwg.mxu0
        %3453 = vmatpush.bf16.msra.mxu0 %v3129
        %3454 = vmatpush.bf16.msra.mxu0 %v3121
        %3455 = vmatpush.bf16.msra.mxu0 %v3113
        %3456 = vmatpush.bf16.msra.mxu0 %v3105
        %3457 = vmatpush.bf16.msra.mxu0 %v3097
        %3458 = vmatpush.bf16.msra.mxu0 %v3089
        %3459 = vmatpush.bf16.msra.mxu0 %v3081
        %3460 = vmatpush.bf16.msra.mxu0 %v3073
        %3461 = vmatmul.bf16.gmra.mxu0 %v2617
        %v3462 = vpop.f32.mrf.mxu0
        %v3463 = vadd.f32 %v3450, %v3462
        %v3464 = vpop.f32.mrf.mxu0
        %3465 = vdwg.mxu0
        %v3466 = vmax.f32 %v3281, 0.0
        %v3467 = vmax.f32 %v3307, 0.0
        %v3468 = vmax.f32 %v3333, 0.0
        %v3469 = vmax.f32 %v3359, 0.0
        %v3470 = vmax.f32 %v3385, 0.0
        %v3471 = vmax.f32 %v3411, 0.0
        %v3472 = vmax.f32 %v3437, 0.0
        %v3473 = vmax.f32 %v3463, 0.0
        %3474 = vst [vmem:[%s394] sm:$0xff] %v3466
        %3475 = vst [vmem:[%s394 + $0x8] sm:$0xff] %v3467
        %3476 = vst [vmem:[%s394 + $0x10] sm:$0xff] %v3468
        %3477 = vst [vmem:[%s394 + $0x18] sm:$0xff] %v3469
        %3478 = vst [vmem:[%s394 + $0x20] sm:$0xff] %v3470
        %3479 = vst [vmem:[%s394 + $0x28] sm:$0xff] %v3471
        %3480 = vst [vmem:[%s394 + $0x30] sm:$0xff] %v3472
        %3481 = vst [vmem:[%s394 + $0x38] sm:$0xff] %v3473
        %s3482 = sand.u32 %s251, 1
        %s3483 = scalar_lea.sflag [#allocation6], %s3482
        %s3484 = sand.u32 %s251, 1
        %s3485 = smul.addr %s3484, 64
        %s3486 = scalar_lea.vmem [#allocation9], %s3485
        // Predicated region
        $region69: #{tpu_custom_call.1} parent=59 // pred_check
          %p3487 = pneg %p261
        $region70: #{tpu_custom_call.1} parent=59 // pred_check_branch
          %3489 = sbr.rel (%p3487) target = $region72
        $region71: #{tpu_custom_call.1} parent=59 // pred_region
          %3491 = vsyncadd %s3483, 0
          %s3492 = smul.addr %s28, 8
          %s3493 = smul.addr %s3492, 8
          %s3494 = scalar_lea.hbm %s10, %s3493
          %s3496 = sshll.u32 %s3486, 4
          %s3497 = int_to_ptr.vmem [resolvable:$true] %s3496
          %s3498 = sshll.u32 %s3494, 4
          %s3499 = int_to_ptr.hbm [resolvable:$true] %s3498
          %3501 = dma.vmem_to_hbm [thread:$0]  %s3497, 1024, %s3499, %s3483
        $region72: #{tpu_custom_call.1} parent=59 // pred_fallthru
          _
      $region60: #{tpu_custom_call.1} parent=5 // pred_fallthru
        _
      %p3502 = scmp.le.s32.totalorder 2, %s23
      // Predicated region
      $region73: #{tpu_custom_call.1} parent=5 // pred_check
        %p3503 = pneg %p3502
      $region74: #{tpu_custom_call.1} parent=5 // pred_check_branch
        %3505 = sbr.rel (%p3503) target = $region76
      $region75: #{tpu_custom_call.1} parent=5 // pred_region
        %s3506 = ssub.s32 %s23, 2
        // Predicated region
        $region77: #{tpu_custom_call.1} parent=75 // pred_check
          %p3507 = pneg %p267
        $region78: #{tpu_custom_call.1} parent=75 // pred_check_branch
          %3509 = sbr.rel (%p3507) target = $region80
        $region79: #{tpu_custom_call.1} parent=75 // pred_region
          %s3510 = sand.u32 %s252, 1
          %s3511 = scalar_lea.sflag [#allocation6], %s3510
          %s3512 = sand.u32 %s252, 1
          %s3513 = smul.addr %s3512, 64
          %s3514 = scalar_lea.vmem [#allocation9], %s3513
          %3516 = dma.done %s3511, 1024
        $region80: #{tpu_custom_call.1} parent=75 // pred_fallthru
          _
      $region76: #{tpu_custom_call.1} parent=5 // pred_fallthru
        _
    $region6: #{tpu_custom_call.1} parent=1 // loop_footer
      %s27 = sadd.s32 1, %s23
    $region7: #{tpu_custom_call.1} parent=1 // loop_footer_branch
      %22 = sbr.rel target = $region3
    $region8: #{tpu_custom_call.1} parent=1 // loop_exit
      _
    %3517 = vsyncpa [#allocation5], 1
    %s3518 = scalar_lea.sflag [#allocation5], 1
    %3519 = vsyncpa %s3518, 1
    %3520 = vsyncpa [#allocation8], 1
    %3521 = vsyncpa [#allocation6], 1
    %s3522 = scalar_lea.sflag [#allocation6], 1
    %3523 = vsyncpa %s3522, 1

</llo_original>
